<compile_context>
chip_gen: v6e
topology: v6e:2x2x1
jax: 0.10.0
libtpu: 0.0.40
codegen_flags: <defaults>
</compile_context>

<pallas_src>
import jax
import jax.numpy as jnp
from jax.experimental import pallas as pl
from jax.experimental.pallas import tpu as pltpu


# ----------------------------------------------------------------------------
# helpers
# ----------------------------------------------------------------------------
def _round_up(v, m):
    return ((v + m - 1) // m) * m


_MIB = 1024 * 1024


def _default_vmem_limit():
    # generation-aware: ~112 MiB on v5e/v6e (128 MiB phys), ~48 MiB on v7x (64).
    cap = 64 * _MIB
    try:
        cap = int(pltpu.get_tpu_info().vmem_capacity_bytes)
    except Exception:
        pass
    return int(min(cap - 16 * _MIB, 112 * _MIB))


_VMEM_LIMIT = _default_vmem_limit()


def _pick_tm(n):
    # token-tile size for the fused dense layers (multiple of 8 sublanes).
    for cand in (512, 256, 128):
        if n >= cand:
            return cand
    return _round_up(max(n, 8), 8)


def _pick_tg(n_tokens, top_k, n_experts):
    # row-tile for the grouped expert GEMM, sized to the expected group size.
    avg = max(1, (n_tokens * top_k) // max(n_experts, 1))
    for cand in (512, 256, 128):
        if avg >= cand:
            return cand
    return 128


def _pick_th(hdim, d):
    # expert hidden-dim tile; keep full (kh=1) when the streamed weights fit.
    if 3 * d * hdim * 2 <= _VMEM_LIMIT // 6:
        return hdim
    for cand in (512, 256, 128):
        if hdim % cand == 0:
            return cand
    return hdim


# Feature-probe single-buffering of grid-invariant inputs (perf item #2).
def _probe_single_buffering():
    try:
        def k(x_ref, o_ref):
            o_ref[...] = x_ref[...] + 1.0

        spec = pl.BlockSpec((8, 128), lambda i: (0, 0),
                            pipeline_mode=pl.Buffered(1))
        f = pl.pallas_call(
            k,
            out_shape=jax.ShapeDtypeStruct((8, 128), jnp.float32),
            grid=(1,),
            in_specs=[spec],
            out_specs=pl.BlockSpec((8, 128), lambda i: (0, 0)),
        )
        jax.block_until_ready(f(jnp.zeros((8, 128), jnp.float32)))
        return True
    except Exception:
        return False


_SINGLE_BUF_OK = _probe_single_buffering()


def _const_spec(shape, index_map):
    """BlockSpec for a grid-invariant input; single-buffered when supported."""
    if _SINGLE_BUF_OK:
        return pl.BlockSpec(shape, index_map, pipeline_mode=pl.Buffered(1))
    return pl.BlockSpec(shape, index_map)


# ----------------------------------------------------------------------------
# Pallas kernels
# ----------------------------------------------------------------------------
def _lin_swiglu_math(x_ref, wl_ref, bl_ref, wv_ref, bv_ref, wg_ref, bg_ref):
    # x @ W_lin + b  ->  SwiGLU: value * silu(gate) (two lane-aligned dots).
    x = x_ref[...].astype(jnp.bfloat16)
    y = jnp.dot(x, wl_ref[...], preferred_element_type=jnp.float32) + bl_ref[...]
    yb = y.astype(jnp.bfloat16)
    val = jnp.dot(yb, wv_ref[...], preferred_element_type=jnp.float32) + bv_ref[...]
    gate = jnp.dot(yb, wg_ref[...], preferred_element_type=jnp.float32) + bg_ref[...]
    return val * jax.nn.silu(gate)  # f32 (TM, D)


def _linear_swiglu_kernel(x_ref, wl_ref, bl_ref, wv_ref, bv_ref, wg_ref, bg_ref,
                          o_ref):
    h = _lin_swiglu_math(x_ref, wl_ref, bl_ref, wv_ref, bv_ref, wg_ref, bg_ref)
    o_ref[...] = h.astype(o_ref.dtype)


def _linear_swiglu_gate_shared_kernel(x_ref, wl_ref, bl_ref, wv_ref, bv_ref,
                                      wg_ref, bg_ref, gw_ref, sw1_ref, sw3_ref,
                                      sw2_ref, h_ref, glog_ref, sh_ref):
    # Fused: Linear+SwiGLU, MoE gate logits, and the shared-expert MLP (h is
    # already resident in VMEM, so the shared expert costs no extra HBM hop).
    h = _lin_swiglu_math(x_ref, wl_ref, bl_ref, wv_ref, bv_ref, wg_ref, bg_ref)
    hb = h.astype(jnp.bfloat16)
    h_ref[...] = hb.astype(h_ref.dtype)
    glog_ref[...] = jnp.dot(hb, gw_ref[...], preferred_element_type=jnp.float32)
    hs = jax.nn.silu(
        jnp.dot(hb, sw1_ref[...], preferred_element_type=jnp.float32)
    ) * jnp.dot(hb, sw3_ref[...], preferred_element_type=jnp.float32)
    sh_ref[...] = jnp.dot(hs.astype(jnp.bfloat16), sw2_ref[...],
                          preferred_element_type=jnp.float32).astype(sh_ref.dtype)


def _expert_ffn_kernel(te_ref,                    # scalar-prefetch (n_tiles,) i32
                       x_ref, w_ref, w1_ref, w3_ref, w2_ref, o_ref, acc_ref):
    # Grouped GEMM over expert-sorted token rows.
    # grid = (row_tile t, hidden_tile k); expert weights are selected by the
    # scalar-prefetched per-tile expert id in the index_map (data-dependent),
    # so only routed rows are ever multiplied. Accumulate in f32 scratch,
    # finalize (apply per-row routing weight + bf16 cast) at the last k.
    k = pl.program_id(1)

    @pl.when(k == 0)
    def _():
        acc_ref[...] = jnp.zeros_like(acc_ref)

    x = x_ref[...].astype(jnp.bfloat16)                         # (TG, D)
    h = jax.nn.silu(
        jnp.dot(x, w1_ref[...], preferred_element_type=jnp.float32)
    ) * jnp.dot(x, w3_ref[...], preferred_element_type=jnp.float32)
    acc_ref[...] += jnp.dot(h.astype(jnp.bfloat16), w2_ref[...],
                            preferred_element_type=jnp.float32)

    @pl.when(k == pl.num_programs(1) - 1)
    def _():
        o_ref[...] = (acc_ref[...] * w_ref[...]).astype(o_ref.dtype)


# ----------------------------------------------------------------------------
# pallas_call wrappers
# ----------------------------------------------------------------------------
def linear_swiglu_pallas(x, wl, bl, wv, bv, wg, bg, *, tm,
                         out_dtype=jnp.bfloat16):
    n, din = x.shape
    d = wl.shape[1]
    assert n % tm == 0
    grid = (n // tm,)
    ws = lambda a: _const_spec(a.shape, lambda i: (0, 0))
    in_specs = [pl.BlockSpec((tm, din), lambda i: (i, 0)),
                ws(wl), ws(bl), ws(wv), ws(bv), ws(wg), ws(bg)]
    return pl.pallas_call(
        _linear_swiglu_kernel,
        out_shape=jax.ShapeDtypeStruct((n, d), out_dtype),
        grid=grid, in_specs=in_specs,
        out_specs=pl.BlockSpec((tm, d), lambda i: (i, 0)),
        compiler_params=pltpu.CompilerParams(
            dimension_semantics=("parallel",), vmem_limit_bytes=_VMEM_LIMIT),
    )(x, wl, bl, wv, bv, wg, bg)


def linear_swiglu_gate_shared_pallas(x, wl, bl, wv, bv, wg, bg, gw,
                                     sw1, sw3, sw2, *, tm):
    n, din = x.shape
    d = wl.shape[1]
    n_exp = gw.shape[1]
    assert n % tm == 0
    grid = (n // tm,)
    ws = lambda a: _const_spec(a.shape, lambda i: (0, 0))
    in_specs = [pl.BlockSpec((tm, din), lambda i: (i, 0))] + \
               [ws(a) for a in (wl, bl, wv, bv, wg, bg, gw, sw1, sw3, sw2)]
    out_specs = (pl.BlockSpec((tm, d), lambda i: (i, 0)),
                 pl.BlockSpec((tm, n_exp), lambda i: (i, 0)),
                 pl.BlockSpec((tm, d), lambda i: (i, 0)))
    out_shape = (jax.ShapeDtypeStruct((n, d), jnp.bfloat16),     # h
                 jax.ShapeDtypeStruct((n, n_exp), jnp.float32),  # gate logits
                 jax.ShapeDtypeStruct((n, d), jnp.bfloat16))     # shared expert
    return pl.pallas_call(
        _linear_swiglu_gate_shared_kernel,
        out_shape=out_shape, grid=grid, in_specs=in_specs, out_specs=out_specs,
        compiler_params=pltpu.CompilerParams(
            dimension_semantics=("parallel",), vmem_limit_bytes=_VMEM_LIMIT),
    )(x, wl, bl, wv, bv, wg, bg, gw, sw1, sw3, sw2)


def moe_expert_pallas(tile_expert, x_sorted, w_sorted, ew1, ew3, ew2, *, tg):
    # x_sorted: (P, D) bf16, expert-sorted (groups padded to tg rows)
    # w_sorted: (P, 1) f32 routing weight per row (0 for padding rows)
    # tile_expert: (P // tg,) i32 expert id of each row tile (scalar prefetch)
    p, d = x_sorted.shape
    n_exp, _, hdim = ew1.shape
    assert p % tg == 0
    th = _pick_th(hdim, d)
    assert hdim % th == 0
    kh = hdim // th
    n_tiles = p // tg

    grid_spec = pltpu.PrefetchScalarGridSpec(
        num_scalar_prefetch=1,
        grid=(n_tiles, kh),
        in_specs=[
            pl.BlockSpec((tg, d), lambda t, k, te: (t, 0)),
            pl.BlockSpec((tg, 1), lambda t, k, te: (t, 0)),
            pl.BlockSpec((None, d, th), lambda t, k, te: (te[t], 0, k)),
            pl.BlockSpec((None, d, th), lambda t, k, te: (te[t], 0, k)),
            pl.BlockSpec((None, th, d), lambda t, k, te: (te[t], k, 0)),
        ],
        out_specs=pl.BlockSpec((tg, d), lambda t, k, te: (t, 0)),
        scratch_shapes=[pltpu.VMEM((tg, d), jnp.float32)],
    )
    return pl.pallas_call(
        _expert_ffn_kernel,
        out_shape=jax.ShapeDtypeStruct((p, d), jnp.bfloat16),
        grid_spec=grid_spec,
        compiler_params=pltpu.CompilerParams(
            dimension_semantics=("parallel", "arbitrary"),
            vmem_limit_bytes=_VMEM_LIMIT),
    )(tile_expert, x_sorted, w_sorted, ew1, ew3, ew2)


# ----------------------------------------------------------------------------
# MoE routing (DeepSeek-style group-limited top-k) + expert grouping — JAX glue
# ----------------------------------------------------------------------------
def moe_routing(logits, *, n_group, topk_group, top_k, scaling):
    n, e = logits.shape
    scores = jax.nn.softmax(logits.astype(jnp.float32), axis=-1)     # (N, E)
    group_scores = scores.reshape(n, n_group, e // n_group).max(-1)  # (N, G)
    _, group_idx = jax.lax.top_k(group_scores, topk_group)
    group_mask = jnp.zeros((n, n_group), jnp.float32).at[
        jnp.arange(n)[:, None], group_idx].set(1.0)
    score_mask = jnp.repeat(group_mask, e // n_group, axis=1)        # (N, E)
    masked = jnp.where(score_mask > 0, scores, 0.0)
    topk_w, topk_idx = jax.lax.top_k(masked, top_k)
    return topk_idx.astype(jnp.int32), (topk_w * scaling).astype(jnp.float32)


def group_by_expert(topk_idx, topk_w, n_experts, tg):
    """Sort (token, slot) pairs by expert; pad each group to a tg multiple."""
    n, k = topk_idx.shape
    nk = n * k
    p_max = _round_up(nk, tg) + n_experts * tg          # static upper bound

    flat_e = topk_idx.reshape(-1)                                   # (NK,)
    flat_t = jnp.repeat(jnp.arange(n, dtype=jnp.int32), k)          # (NK,)
    flat_w = topk_w.reshape(-1)                                     # (NK,)

    order = jnp.argsort(flat_e)
    se = flat_e[order].astype(jnp.int32)
    st = flat_t[order]
    sw = flat_w[order]

    counts = jnp.bincount(flat_e, length=n_experts).astype(jnp.int32)
    padded = ((counts + tg - 1) // tg) * tg
    gstart = jnp.concatenate([jnp.zeros((1,), jnp.int32),
                              jnp.cumsum(padded)[:-1].astype(jnp.int32)])
    ustart = jnp.concatenate([jnp.zeros((1,), jnp.int32),
                              jnp.cumsum(counts)[:-1].astype(jnp.int32)])
    rank = jnp.arange(nk, dtype=jnp.int32) - ustart[se]
    pos = gstart[se] + rank                                         # unique

    token_pad = jnp.zeros((p_max,), jnp.int32).at[pos].set(st)
    w_pad = jnp.zeros((p_max,), jnp.float32).at[pos].set(sw)
    expert_row = jnp.zeros((p_max,), jnp.int32).at[pos].set(se)
    # the first row of every real tile is a real (scattered) row, so a strided
    # slice gives the per-tile expert id; empty trailing tiles map to expert 0
    # with all-zero weights (their contribution is exactly 0).
    tile_expert = expert_row[::tg]
    return token_pad, w_pad.reshape(p_max, 1), tile_expert


# ----------------------------------------------------------------------------
# MoEFF forward
# ----------------------------------------------------------------------------
def moeff_forward(x, params, cfg):
    b, t, _ = x.shape
    n = b * t
    h = x.reshape(n, -1)

    tm = _pick_tm(n)
    n_pad = _round_up(n, tm)
    if n_pad != n:
        h = jnp.pad(h, ((0, n_pad - n), (0, 0)))
    h = h.astype(jnp.bfloat16)

    n_experts = params["gate_w"].shape[1]
    top_k = cfg["num_experts_per_tok"]

    # Linear + SwiGLU + MoE gate logits + shared-expert MLP, fused (1 HBM hop).
    h, gate_logits, shared = linear_swiglu_gate_shared_pallas(
        h, params["lin0_w"], params["lin0_b"],
        params["sg0_wv"], params["sg0_bv"], params["sg0_wg"], params["sg0_bg"],
        params["gate_w"], params["sh_w1"], params["sh_w3"], params["sh_w2"],
        tm=tm)

    # Routing (group-limited greedy top-k) in plain JAX.
    topk_idx, topk_w = moe_routing(
        gate_logits, n_group=cfg["n_group"], topk_group=cfg["topk_group"],
        top_k=top_k, scaling=cfg["routed_scaling_factor"])

    # Token-gather grouped GEMM over routed experts.
    tg = _pick_tg(n_pad, top_k, n_experts)
    token_pad, w_pad, tile_expert = group_by_expert(
        topk_idx, topk_w, n_experts, tg)
    x_sorted = jnp.take(h, token_pad, axis=0)              # (P, D) bf16 gather
    y_sorted = moe_expert_pallas(
        tile_expert, x_sorted, w_pad,
        params["exp_w1"], params["exp_w3"], params["exp_w2"], tg=tg)

    # scatter-add routed results onto the shared-expert output (f32 accumulate).
    moe = shared.astype(jnp.float32).at[token_pad].add(
        y_sorted.astype(jnp.float32))
    h = moe.astype(jnp.bfloat16)

    # (num_ff - 1) x [Linear(out, out) + SwiGLU(out)], fused.
    for i in range(cfg["num_ff"] - 1):
        h = linear_swiglu_pallas(
            h, params[f"lin{i+1}_w"], params[f"lin{i+1}_b"],
            params[f"sg{i+1}_wv"], params[f"sg{i+1}_bv"],
            params[f"sg{i+1}_wg"], params[f"sg{i+1}_bg"], tm=tm)

    return h[:n].astype(jnp.float32).reshape(b, t, -1)


# ----------------------------------------------------------------------------
# Parameter construction + driver
# ----------------------------------------------------------------------------
def make_params(key, in_features, out_features, num_ff, num_experts, hidden_dim,
                n_shared_experts):
    ks = iter(jax.random.split(key, 64))

    def w(shape, scale=0.05):
        return (scale * jax.random.normal(next(ks), shape, dtype=jnp.float32)
                ).astype(jnp.bfloat16)

    def bias(shape, scale=0.05):
        return scale * jax.random.normal(next(ks), shape, dtype=jnp.float32)

    d = out_features
    p = {
        "lin0_w": w((in_features, d)), "lin0_b": bias((1, d)),
        "sg0_wv": w((d, d)), "sg0_bv": bias((1, d)),
        "sg0_wg": w((d, d)), "sg0_bg": bias((1, d)),
        # MoE gate (bias-free)
        "gate_w": w((d, num_experts)),
        # routed experts: swiglu MLPs dim -> hidden -> dim (no bias)
        "exp_w1": w((num_experts, d, hidden_dim)),
        "exp_w3": w((num_experts, d, hidden_dim)),
        "exp_w2": w((num_experts, hidden_dim, d)),
        # shared experts: one swiglu MLP with hidden = hidden_dim * n_shared
        "sh_w1": w((d, hidden_dim * n_shared_experts)),
        "sh_w3": w((d, hidden_dim * n_shared_experts)),
        "sh_w2": w((hidden_dim * n_shared_experts, d)),
    }
    for i in range(num_ff - 1):
        p[f"lin{i+1}_w"] = w((d, d)); p[f"lin{i+1}_b"] = bias((1, d))
        p[f"sg{i+1}_wv"] = w((d, d)); p[f"sg{i+1}_bv"] = bias((1, d))
        p[f"sg{i+1}_wg"] = w((d, d)); p[f"sg{i+1}_bg"] = bias((1, d))
    return p


if __name__ == "__main__":
    # MoEFF(in_features, out_features, num_ff, num_experts); feature dims are
    # multiples of 128 so all big output tiles are lane-dense.
    in_features, out_features = 64, 128
    num_ff, num_experts = 2, 8
    cfg = dict(
        num_ff=num_ff,
        n_group=4,
        topk_group=2,
        num_experts_per_tok=4,
        routed_scaling_factor=1.0,
        n_shared_experts=2,
    )
    hidden_dim = out_features  # TODO(synk): MoE(hidden_dim=None) default unknown.

    key = jax.random.PRNGKey(0)
    k_p, k_x = jax.random.split(key)
    params = make_params(
        k_p, in_features, out_features, num_ff, num_experts, hidden_dim,
        cfg["n_shared_experts"],
    )

    batch, seq = 2, 128  # N = 256 tokens -> one 256-token tile
    x = jax.random.normal(k_x, (batch, seq, in_features), dtype=jnp.float32)

    fwd = jax.jit(lambda xx, pp: moeff_forward(xx, pp, cfg))
    out = fwd(x, params)
    jax.block_until_ready(out)
    assert out.shape == (batch, seq, out_features)
    assert bool(jnp.all(jnp.isfinite(out)))
    print("KERNEL_OK")
</pallas_src>

<mosaic_0001>
module attributes {stable_mosaic.version = 11 : i64} {
  func.func @k(%arg0: i32, %arg1: memref<8x128xf32, #tpu.memory_space<vmem>>, %arg2: memref<8x128xf32, #tpu.memory_space<vmem>>) attributes {dimension_semantics = [#tpu.dimension_semantics<arbitrary>], iteration_bounds = array<i64: 1>, scalar_prefetch = 0 : i64, scratch_operands = 0 : i64, tpu.core_type = #tpu.core_type<tc>, window_params = [{pipeline_mode = #tpu.pipeline_mode<synchronous>, transform_indices = @transform_0, window_bounds = array<i64: 8, 128>}, {pipeline_mode = #tpu.pipeline_mode<synchronous>, transform_indices = @transform_1, window_bounds = array<i64: 8, 128>}]} {
    %c0 = arith.constant 0 : index
    %c0_0 = arith.constant 0 : index
    %0 = vector.load %arg1[%c0, %c0_0] : memref<8x128xf32, #tpu.memory_space<vmem>>, vector<8x128xf32>
    %cst = arith.constant 1.000000e+00 : f32
    %1 = vector.broadcast %cst : f32 to vector<8x128xf32>
    %2 = arith.addf %0, %1 : vector<8x128xf32>
    %c0_1 = arith.constant 0 : index
    %c0_2 = arith.constant 0 : index
    %3 = vector.load %arg2[%c0_1, %c0_2] : memref<8x128xf32, #tpu.memory_space<vmem>>, vector<8x128xf32>
    tpu.vector_store %arg2[%c0_1, %c0_2], %2 {strides = array<i32>} : memref<8x128xf32, #tpu.memory_space<vmem>>, vector<8x128xf32>,
    return
  }
  func.func @transform_0(%arg0: i32) -> (i32, i32) {
    %c0_i32 = arith.constant 0 : i32
    %c0_i32_0 = arith.constant 0 : i32
    %c0_i32_1 = arith.constant 0 : i32
    return %c0_i32, %c0_i32_0 : i32, i32
  }
  func.func @transform_1(%arg0: i32) -> (i32, i32) {
    %c0_i32 = arith.constant 0 : i32
    %c0_i32_0 = arith.constant 0 : i32
    %c0_i32_1 = arith.constant 0 : i32
    return %c0_i32, %c0_i32_0 : i32, i32
  }
}

module attributes {stable_mosaic.version = 11 : i64} {
  func.func private @main(%arg0: i32) attributes {dimension_semantics = [#tpu.dimension_semantics<core_parallel>], iteration_bounds = array<i64: 2>, tpu.core_type = #tpu.core_type<sc_scalar_subcore>, window_params = []} {
    return
  }
}

module attributes {stable_mosaic.version = 11 : i64} {
  func.func private @main(%arg0: i32) attributes {dimension_semantics = [#tpu.dimension_semantics<core_parallel>], iteration_bounds = array<i64: 2>, tpu.core_type = #tpu.core_type<sc_scalar_subcore>, window_params = []} {
    return
  }
}

module attributes {stable_mosaic.version = 11 : i64} {
  func.func @_linear_swiglu_gate_shared_kernel(%arg0: i32, %arg1: memref<256x64xbf16, #tpu.memory_space<vmem>>, %arg2: memref<64x128xbf16, #tpu.memory_space<vmem>>, %arg3: memref<1x128xf32, #tpu.memory_space<vmem>>, %arg4: memref<128x128xbf16, #tpu.memory_space<vmem>>, %arg5: memref<1x128xf32, #tpu.memory_space<vmem>>, %arg6: memref<128x128xbf16, #tpu.memory_space<vmem>>, %arg7: memref<1x128xf32, #tpu.memory_space<vmem>>, %arg8: memref<128x8xbf16, #tpu.memory_space<vmem>>, %arg9: memref<128x256xbf16, #tpu.memory_space<vmem>>, %arg10: memref<128x256xbf16, #tpu.memory_space<vmem>>, %arg11: memref<256x128xbf16, #tpu.memory_space<vmem>>, %arg12: memref<256x128xbf16, #tpu.memory_space<vmem>>, %arg13: memref<256x8xf32, #tpu.memory_space<vmem>>, %arg14: memref<256x128xbf16, #tpu.memory_space<vmem>>) attributes {dimension_semantics = [#tpu.dimension_semantics<parallel>], iteration_bounds = array<i64: 1>, scalar_prefetch = 0 : i64, scratch_operands = 0 : i64, tpu.core_type = #tpu.core_type<tc>, window_params = [{transform_indices = @transform_0, window_bounds = array<i64: 256, 64>}, {pipeline_mode = #tpu.pipeline_mode<synchronous>, transform_indices = @transform_1, window_bounds = array<i64: 64, 128>}, {pipeline_mode = #tpu.pipeline_mode<synchronous>, transform_indices = @transform_2, window_bounds = array<i64: 1, 128>}, {pipeline_mode = #tpu.pipeline_mode<synchronous>, transform_indices = @transform_3, window_bounds = array<i64: 128, 128>}, {pipeline_mode = #tpu.pipeline_mode<synchronous>, transform_indices = @transform_4, window_bounds = array<i64: 1, 128>}, {pipeline_mode = #tpu.pipeline_mode<synchronous>, transform_indices = @transform_5, window_bounds = array<i64: 128, 128>}, {pipeline_mode = #tpu.pipeline_mode<synchronous>, transform_indices = @transform_6, window_bounds = array<i64: 1, 128>}, {pipeline_mode = #tpu.pipeline_mode<synchronous>, transform_indices = @transform_7, window_bounds = array<i64: 128, 8>}, {pipeline_mode = #tpu.pipeline_mode<synchronous>, transform_indices = @transform_8, window_bounds = array<i64: 128, 256>}, {pipeline_mode = #tpu.pipeline_mode<synchronous>, transform_indices = @transform_9, window_bounds = array<i64: 128, 256>}, {pipeline_mode = #tpu.pipeline_mode<synchronous>, transform_indices = @transform_10, window_bounds = array<i64: 256, 128>}, {transform_indices = @transform_11, window_bounds = array<i64: 256, 128>}, {transform_indices = @transform_12, window_bounds = array<i64: 256, 8>}, {transform_indices = @transform_13, window_bounds = array<i64: 256, 128>}]} {
    %c0 = arith.constant 0 : index
    %c0_0 = arith.constant 0 : index
    %0 = vector.load %arg1[%c0, %c0_0] : memref<256x64xbf16, #tpu.memory_space<vmem>>, vector<256x64xbf16>
    %c0_1 = arith.constant 0 : index
    %c0_2 = arith.constant 0 : index
    %1 = vector.load %arg2[%c0_1, %c0_2] : memref<64x128xbf16, #tpu.memory_space<vmem>>, vector<64x128xbf16>
    %cst = arith.constant dense<0.000000e+00> : vector<256x128xf32>
    %2 = tpu.matmul %0, %1, %cst {dimension_numbers = #tpu.dot_dimension_numbers<[1], [0], [0], [1], [0, 0, 1, 1], [], []>} : vector<256x64xbf16>, vector<64x128xbf16>, vector<256x128xf32> -> vector<256x128xf32>
    %c0_3 = arith.constant 0 : index
    %c0_4 = arith.constant 0 : index
    %3 = vector.load %arg3[%c0_3, %c0_4] : memref<1x128xf32, #tpu.memory_space<vmem>>, vector<1x128xf32>
    %4 = vector.broadcast %3 : vector<1x128xf32> to vector<256x128xf32>
    %5 = arith.addf %2, %4 : vector<256x128xf32>
    %6 = arith.truncf %5 : vector<256x128xf32> to vector<256x128xbf16>
    %c0_5 = arith.constant 0 : index
    %c0_6 = arith.constant 0 : index
    %7 = vector.load %arg4[%c0_5, %c0_6] : memref<128x128xbf16, #tpu.memory_space<vmem>>, vector<128x128xbf16>
    %cst_7 = arith.constant dense<0.000000e+00> : vector<256x128xf32>
    %8 = tpu.matmul %6, %7, %cst_7 {dimension_numbers = #tpu.dot_dimension_numbers<[1], [0], [0], [1], [0, 0, 1, 1], [], []>} : vector<256x128xbf16>, vector<128x128xbf16>, vector<256x128xf32> -> vector<256x128xf32>
    %c0_8 = arith.constant 0 : index
    %c0_9 = arith.constant 0 : index
    %9 = vector.load %arg5[%c0_8, %c0_9] : memref<1x128xf32, #tpu.memory_space<vmem>>, vector<1x128xf32>
    %10 = vector.broadcast %9 : vector<1x128xf32> to vector<256x128xf32>
    %11 = arith.addf %8, %10 : vector<256x128xf32>
    %c0_10 = arith.constant 0 : index
    %c0_11 = arith.constant 0 : index
    %12 = vector.load %arg6[%c0_10, %c0_11] : memref<128x128xbf16, #tpu.memory_space<vmem>>, vector<128x128xbf16>
    %cst_12 = arith.constant dense<0.000000e+00> : vector<256x128xf32>
    %13 = tpu.matmul %6, %12, %cst_12 {dimension_numbers = #tpu.dot_dimension_numbers<[1], [0], [0], [1], [0, 0, 1, 1], [], []>} : vector<256x128xbf16>, vector<128x128xbf16>, vector<256x128xf32> -> vector<256x128xf32>
    %c0_13 = arith.constant 0 : index
    %c0_14 = arith.constant 0 : index
    %14 = vector.load %arg7[%c0_13, %c0_14] : memref<1x128xf32, #tpu.memory_space<vmem>>, vector<1x128xf32>
    %15 = vector.broadcast %14 : vector<1x128xf32> to vector<256x128xf32>
    %16 = arith.addf %13, %15 : vector<256x128xf32>
    %17 = arith.negf %16 : vector<256x128xf32>
    %18 = math.exp %17 : vector<256x128xf32>
    %cst_15 = arith.constant 1.000000e+00 : f32
    %19 = vector.broadcast %cst_15 : f32 to vector<256x128xf32>
    %20 = arith.addf %19, %18 : vector<256x128xf32>
    %21 = arith.divf %19, %20 : vector<256x128xf32>
    %22 = arith.mulf %16, %21 : vector<256x128xf32>
    %23 = arith.mulf %11, %22 : vector<256x128xf32>
    %24 = arith.truncf %23 : vector<256x128xf32> to vector<256x128xbf16>
    %c0_16 = arith.constant 0 : index
    %c0_17 = arith.constant 0 : index
    %25 = vector.load %arg12[%c0_16, %c0_17] : memref<256x128xbf16, #tpu.memory_space<vmem>>, vector<256x128xbf16>
    tpu.vector_store %arg12[%c0_16, %c0_17], %24 {strides = array<i32>} : memref<256x128xbf16, #tpu.memory_space<vmem>>, vector<256x128xbf16>,
    %c0_18 = arith.constant 0 : index
    %c0_19 = arith.constant 0 : index
    %26 = vector.load %arg8[%c0_18, %c0_19] : memref<128x8xbf16, #tpu.memory_space<vmem>>, vector<128x8xbf16>
    %cst_20 = arith.constant dense<0.000000e+00> : vector<256x8xf32>
    %27 = tpu.matmul %24, %26, %cst_20 {dimension_numbers = #tpu.dot_dimension_numbers<[1], [0], [0], [1], [0, 0, 1, 1], [], []>} : vector<256x128xbf16>, vector<128x8xbf16>, vector<256x8xf32> -> vector<256x8xf32>
    %c0_21 = arith.constant 0 : index
    %c0_22 = arith.constant 0 : index
    %28 = vector.load %arg13[%c0_21, %c0_22] : memref<256x8xf32, #tpu.memory_space<vmem>>, vector<256x8xf32>
    tpu.vector_store %arg13[%c0_21, %c0_22], %27 {strides = array<i32>} : memref<256x8xf32, #tpu.memory_space<vmem>>, vector<256x8xf32>,
    %c0_23 = arith.constant 0 : index
    %c0_24 = arith.constant 0 : index
    %29 = vector.load %arg9[%c0_23, %c0_24] : memref<128x256xbf16, #tpu.memory_space<vmem>>, vector<128x256xbf16>
    %cst_25 = arith.constant dense<0.000000e+00> : vector<256x256xf32>
    %30 = tpu.matmul %24, %29, %cst_25 {dimension_numbers = #tpu.dot_dimension_numbers<[1], [0], [0], [1], [0, 0, 1, 1], [], []>} : vector<256x128xbf16>, vector<128x256xbf16>, vector<256x256xf32> -> vector<256x256xf32>
    %31 = arith.negf %30 : vector<256x256xf32>
    %32 = math.exp %31 : vector<256x256xf32>
    %cst_26 = arith.constant 1.000000e+00 : f32
    %33 = vector.broadcast %cst_26 : f32 to vector<256x256xf32>
    %34 = arith.addf %33, %32 : vector<256x256xf32>
    %35 = arith.divf %33, %34 : vector<256x256xf32>
    %36 = arith.mulf %30, %35 : vector<256x256xf32>
    %c0_27 = arith.constant 0 : index
    %c0_28 = arith.constant 0 : index
    %37 = vector.load %arg10[%c0_27, %c0_28] : memref<128x256xbf16, #tpu.memory_space<vmem>>, vector<128x256xbf16>
    %cst_29 = arith.constant dense<0.000000e+00> : vector<256x256xf32>
    %38 = tpu.matmul %24, %37, %cst_29 {dimension_numbers = #tpu.dot_dimension_numbers<[1], [0], [0], [1], [0, 0, 1, 1], [], []>} : vector<256x128xbf16>, vector<128x256xbf16>, vector<256x256xf32> -> vector<256x256xf32>
    %39 = arith.mulf %36, %38 : vector<256x256xf32>
    %40 = arith.truncf %39 : vector<256x256xf32> to vector<256x256xbf16>
    %c0_30 = arith.constant 0 : index
    %c0_31 = arith.constant 0 : index
    %41 = vector.load %arg11[%c0_30, %c0_31] : memref<256x128xbf16, #tpu.memory_space<vmem>>, vector<256x128xbf16>
    %cst_32 = arith.constant dense<0.000000e+00> : vector<256x128xf32>
    %42 = tpu.matmul %40, %41, %cst_32 {dimension_numbers = #tpu.dot_dimension_numbers<[1], [0], [0], [1], [0, 0, 1, 1], [], []>} : vector<256x256xbf16>, vector<256x128xbf16>, vector<256x128xf32> -> vector<256x128xf32>
    %43 = arith.truncf %42 : vector<256x128xf32> to vector<256x128xbf16>
    %c0_33 = arith.constant 0 : index
    %c0_34 = arith.constant 0 : index
    %44 = vector.load %arg14[%c0_33, %c0_34] : memref<256x128xbf16, #tpu.memory_space<vmem>>, vector<256x128xbf16>
    tpu.vector_store %arg14[%c0_33, %c0_34], %43 {strides = array<i32>} : memref<256x128xbf16, #tpu.memory_space<vmem>>, vector<256x128xbf16>,
    return
  }
  func.func @transform_0(%arg0: i32) -> (i32, i32) {
    %c0_i32 = arith.constant 0 : i32
    %c0_i32_0 = arith.constant 0 : i32
    return %arg0, %c0_i32 : i32, i32
  }
  func.func @transform_1(%arg0: i32) -> (i32, i32) {
    %c0_i32 = arith.constant 0 : i32
    %c0_i32_0 = arith.constant 0 : i32
    %c0_i32_1 = arith.constant 0 : i32
    return %c0_i32, %c0_i32_0 : i32, i32
  }
  func.func @transform_2(%arg0: i32) -> (i32, i32) {
    %c0_i32 = arith.constant 0 : i32
    %c0_i32_0 = arith.constant 0 : i32
    %c0_i32_1 = arith.constant 0 : i32
    return %c0_i32, %c0_i32_0 : i32, i32
  }
  func.func @transform_3(%arg0: i32) -> (i32, i32) {
    %c0_i32 = arith.constant 0 : i32
    %c0_i32_0 = arith.constant 0 : i32
    %c0_i32_1 = arith.constant 0 : i32
    return %c0_i32, %c0_i32_0 : i32, i32
  }
  func.func @transform_4(%arg0: i32) -> (i32, i32) {
    %c0_i32 = arith.constant 0 : i32
    %c0_i32_0 = arith.constant 0 : i32
    %c0_i32_1 = arith.constant 0 : i32
    return %c0_i32, %c0_i32_0 : i32, i32
  }
  func.func @transform_5(%arg0: i32) -> (i32, i32) {
    %c0_i32 = arith.constant 0 : i32
    %c0_i32_0 = arith.constant 0 : i32
    %c0_i32_1 = arith.constant 0 : i32
    return %c0_i32, %c0_i32_0 : i32, i32
  }
  func.func @transform_6(%arg0: i32) -> (i32, i32) {
    %c0_i32 = arith.constant 0 : i32
    %c0_i32_0 = arith.constant 0 : i32
    %c0_i32_1 = arith.constant 0 : i32
    return %c0_i32, %c0_i32_0 : i32, i32
  }
  func.func @transform_7(%arg0: i32) -> (i32, i32) {
    %c0_i32 = arith.constant 0 : i32
    %c0_i32_0 = arith.constant 0 : i32
    %c0_i32_1 = arith.constant 0 : i32
    return %c0_i32, %c0_i32_0 : i32, i32
  }
  func.func @transform_8(%arg0: i32) -> (i32, i32) {
    %c0_i32 = arith.constant 0 : i32
    %c0_i32_0 = arith.constant 0 : i32
    %c0_i32_1 = arith.constant 0 : i32
    return %c0_i32, %c0_i32_0 : i32, i32
  }
  func.func @transform_9(%arg0: i32) -> (i32, i32) {
    %c0_i32 = arith.constant 0 : i32
    %c0_i32_0 = arith.constant 0 : i32
    %c0_i32_1 = arith.constant 0 : i32
    return %c0_i32, %c0_i32_0 : i32, i32
  }
  func.func @transform_10(%arg0: i32) -> (i32, i32) {
    %c0_i32 = arith.constant 0 : i32
    %c0_i32_0 = arith.constant 0 : i32
    %c0_i32_1 = arith.constant 0 : i32
    return %c0_i32, %c0_i32_0 : i32, i32
  }
  func.func @transform_11(%arg0: i32) -> (i32, i32) {
    %c0_i32 = arith.constant 0 : i32
    %c0_i32_0 = arith.constant 0 : i32
    return %arg0, %c0_i32 : i32, i32
  }
  func.func @transform_12(%arg0: i32) -> (i32, i32) {
    %c0_i32 = arith.constant 0 : i32
    %c0_i32_0 = arith.constant 0 : i32
    return %arg0, %c0_i32 : i32, i32
  }
  func.func @transform_13(%arg0: i32) -> (i32, i32) {
    %c0_i32 = arith.constant 0 : i32
    %c0_i32_0 = arith.constant 0 : i32
    return %arg0, %c0_i32 : i32, i32
  }
}

module attributes {stable_mosaic.version = 11 : i64} {
  func.func @_expert_ffn_kernel(%arg0: i32, %arg1: i32, %arg2: memref<16xi32, #tpu.memory_space<smem>>, %arg3: memref<128x128xbf16, #tpu.memory_space<vmem>>, %arg4: memref<128x1xf32, #tpu.memory_space<vmem>>, %arg5: memref<1x128x128xbf16, #tpu.memory_space<vmem>>, %arg6: memref<1x128x128xbf16, #tpu.memory_space<vmem>>, %arg7: memref<1x128x128xbf16, #tpu.memory_space<vmem>>, %arg8: memref<128x128xbf16, #tpu.memory_space<vmem>>, %arg9: memref<128x128xf32, #tpu.memory_space<vmem>>) attributes {dimension_semantics = [#tpu.dimension_semantics<parallel>, #tpu.dimension_semantics<arbitrary>], iteration_bounds = array<i64: 16, 1>, scalar_prefetch = 1 : i64, scratch_operands = 1 : i64, tpu.core_type = #tpu.core_type<tc>, window_params = [{transform_indices = @transform_0, window_bounds = array<i64: 128, 128>}, {transform_indices = @transform_1, window_bounds = array<i64: 128, 1>}, {transform_indices = @transform_2, window_bounds = array<i64: 1, 128, 128>}, {transform_indices = @transform_3, window_bounds = array<i64: 1, 128, 128>}, {transform_indices = @transform_4, window_bounds = array<i64: 1, 128, 128>}, {transform_indices = @transform_5, window_bounds = array<i64: 128, 128>}]} {
    %c0_i32 = arith.constant 0 : i32
    %0 = arith.cmpi eq, %arg1, %c0_i32 : i32
    %1 = arith.extui %0 : i1 to i32
    %c0_i32_0 = arith.constant 0 : i32
    %2 = arith.cmpi ne, %1, %c0_i32_0 : i32
    scf.if %2 {
      %cst_20 = arith.constant 0.000000e+00 : f32
      %27 = vector.broadcast %cst_20 : f32 to vector<128x128xf32>
      %c0_21 = arith.constant 0 : index
      %c0_22 = arith.constant 0 : index
      %28 = vector.load %arg9[%c0_21, %c0_22] : memref<128x128xf32, #tpu.memory_space<vmem>>, vector<128x128xf32>
      tpu.vector_store %arg9[%c0_21, %c0_22], %27 {strides = array<i32>} : memref<128x128xf32, #tpu.memory_space<vmem>>, vector<128x128xf32>,
    } else {
    }
    %c0 = arith.constant 0 : index
    %c0_1 = arith.constant 0 : index
    %3 = vector.load %arg3[%c0, %c0_1] : memref<128x128xbf16, #tpu.memory_space<vmem>>, vector<128x128xbf16>
    %c0_2 = arith.constant 0 : index
    %c0_3 = arith.constant 0 : index
    %c0_4 = arith.constant 0 : index
    %4 = vector.load %arg5[%c0_2, %c0_3, %c0_4] : memref<1x128x128xbf16, #tpu.memory_space<vmem>>, vector<1x128x128xbf16>
    %5 = vector.shape_cast %4 : vector<1x128x128xbf16> to vector<128x128xbf16>
    %cst = arith.constant dense<0.000000e+00> : vector<128x128xf32>
    %6 = tpu.matmul %3, %5, %cst {dimension_numbers = #tpu.dot_dimension_numbers<[1], [0], [0], [1], [0, 0, 1, 1], [], []>} : vector<128x128xbf16>, vector<128x128xbf16>, vector<128x128xf32> -> vector<128x128xf32>
    %7 = arith.negf %6 : vector<128x128xf32>
    %8 = math.exp %7 : vector<128x128xf32>
    %cst_5 = arith.constant 1.000000e+00 : f32
    %9 = vector.broadcast %cst_5 : f32 to vector<128x128xf32>
    %10 = arith.addf %9, %8 : vector<128x128xf32>
    %11 = arith.divf %9, %10 : vector<128x128xf32>
    %12 = arith.mulf %6, %11 : vector<128x128xf32>
    %c0_6 = arith.constant 0 : index
    %c0_7 = arith.constant 0 : index
    %c0_8 = arith.constant 0 : index
    %13 = vector.load %arg6[%c0_6, %c0_7, %c0_8] : memref<1x128x128xbf16, #tpu.memory_space<vmem>>, vector<1x128x128xbf16>
    %14 = vector.shape_cast %13 : vector<1x128x128xbf16> to vector<128x128xbf16>
    %cst_9 = arith.constant dense<0.000000e+00> : vector<128x128xf32>
    %15 = tpu.matmul %3, %14, %cst_9 {dimension_numbers = #tpu.dot_dimension_numbers<[1], [0], [0], [1], [0, 0, 1, 1], [], []>} : vector<128x128xbf16>, vector<128x128xbf16>, vector<128x128xf32> -> vector<128x128xf32>
    %16 = arith.mulf %12, %15 : vector<128x128xf32>
    %c0_10 = arith.constant 0 : index
    %c0_11 = arith.constant 0 : index
    %17 = vector.load %arg9[%c0_10, %c0_11] : memref<128x128xf32, #tpu.memory_space<vmem>>, vector<128x128xf32>
    %18 = arith.truncf %16 : vector<128x128xf32> to vector<128x128xbf16>
    %c0_12 = arith.constant 0 : index
    %c0_13 = arith.constant 0 : index
    %c0_14 = arith.constant 0 : index
    %19 = vector.load %arg7[%c0_12, %c0_13, %c0_14] : memref<1x128x128xbf16, #tpu.memory_space<vmem>>, vector<1x128x128xbf16>
    %20 = vector.shape_cast %19 : vector<1x128x128xbf16> to vector<128x128xbf16>
    %cst_15 = arith.constant dense<0.000000e+00> : vector<128x128xf32>
    %21 = tpu.matmul %18, %20, %cst_15 {dimension_numbers = #tpu.dot_dimension_numbers<[1], [0], [0], [1], [0, 0, 1, 1], [], []>} : vector<128x128xbf16>, vector<128x128xbf16>, vector<128x128xf32> -> vector<128x128xf32>
    %22 = arith.addf %17, %21 : vector<128x128xf32>
    %c0_16 = arith.constant 0 : index
    %c0_17 = arith.constant 0 : index
    %23 = vector.load %arg9[%c0_16, %c0_17] : memref<128x128xf32, #tpu.memory_space<vmem>>, vector<128x128xf32>
    tpu.vector_store %arg9[%c0_16, %c0_17], %22 {strides = array<i32>} : memref<128x128xf32, #tpu.memory_space<vmem>>, vector<128x128xf32>,
    %c0_i32_18 = arith.constant 0 : i32
    %24 = arith.cmpi eq, %arg1, %c0_i32_18 : i32
    %25 = arith.extui %24 : i1 to i32
    %c0_i32_19 = arith.constant 0 : i32
    %26 = arith.cmpi ne, %25, %c0_i32_19 : i32
    scf.if %26 {
      %c0_20 = arith.constant 0 : index
      %c0_21 = arith.constant 0 : index
      %27 = vector.load %arg9[%c0_20, %c0_21] : memref<128x128xf32, #tpu.memory_space<vmem>>, vector<128x128xf32>
      %c0_22 = arith.constant 0 : index
      %c0_23 = arith.constant 0 : index
      %28 = vector.load %arg4[%c0_22, %c0_23] : memref<128x1xf32, #tpu.memory_space<vmem>>, vector<128x1xf32>
      %29 = vector.broadcast %28 : vector<128x1xf32> to vector<128x128xf32>
      %30 = arith.mulf %27, %29 : vector<128x128xf32>
      %31 = arith.truncf %30 : vector<128x128xf32> to vector<128x128xbf16>
      %c0_24 = arith.constant 0 : index
      %c0_25 = arith.constant 0 : index
      %32 = vector.load %arg8[%c0_24, %c0_25] : memref<128x128xbf16, #tpu.memory_space<vmem>>, vector<128x128xbf16>
      tpu.vector_store %arg8[%c0_24, %c0_25], %31 {strides = array<i32>} : memref<128x128xbf16, #tpu.memory_space<vmem>>, vector<128x128xbf16>,
    } else {
    }
    return
  }
  func.func @transform_0(%arg0: i32, %arg1: i32, %arg2: memref<16xi32, #tpu.memory_space<smem>>) -> (i32, i32) {
    %c0_i32 = arith.constant 0 : i32
    %c0_i32_0 = arith.constant 0 : i32
    return %arg0, %c0_i32 : i32, i32
  }
  func.func @transform_1(%arg0: i32, %arg1: i32, %arg2: memref<16xi32, #tpu.memory_space<smem>>) -> (i32, i32) {
    %c0_i32 = arith.constant 0 : i32
    %c0_i32_0 = arith.constant 0 : i32
    return %arg0, %c0_i32 : i32, i32
  }
  func.func @transform_2(%arg0: i32, %arg1: i32, %arg2: memref<16xi32, #tpu.memory_space<smem>>) -> (i32, i32, i32) {
    %0 = arith.index_cast %arg0 : i32 to index
    %1 = memref.load %arg2[%0] : memref<16xi32, #tpu.memory_space<smem>>
    %c0_i32 = arith.constant 0 : i32
    %c0_i32_0 = arith.constant 0 : i32
    return %1, %c0_i32, %arg1 : i32, i32, i32
  }
  func.func @transform_3(%arg0: i32, %arg1: i32, %arg2: memref<16xi32, #tpu.memory_space<smem>>) -> (i32, i32, i32) {
    %0 = arith.index_cast %arg0 : i32 to index
    %1 = memref.load %arg2[%0] : memref<16xi32, #tpu.memory_space<smem>>
    %c0_i32 = arith.constant 0 : i32
    %c0_i32_0 = arith.constant 0 : i32
    return %1, %c0_i32, %arg1 : i32, i32, i32
  }
  func.func @transform_4(%arg0: i32, %arg1: i32, %arg2: memref<16xi32, #tpu.memory_space<smem>>) -> (i32, i32, i32) {
    %0 = arith.index_cast %arg0 : i32 to index
    %1 = memref.load %arg2[%0] : memref<16xi32, #tpu.memory_space<smem>>
    %c0_i32 = arith.constant 0 : i32
    %c0_i32_0 = arith.constant 0 : i32
    return %1, %arg1, %c0_i32 : i32, i32, i32
  }
  func.func @transform_5(%arg0: i32, %arg1: i32, %arg2: memref<16xi32, #tpu.memory_space<smem>>) -> (i32, i32) {
    %c0_i32 = arith.constant 0 : i32
    %c0_i32_0 = arith.constant 0 : i32
    return %arg0, %c0_i32 : i32, i32
  }
}

module attributes {stable_mosaic.version = 11 : i64} {
  func.func @_linear_swiglu_kernel(%arg0: i32, %arg1: memref<256x128xbf16, #tpu.memory_space<vmem>>, %arg2: memref<128x128xbf16, #tpu.memory_space<vmem>>, %arg3: memref<1x128xf32, #tpu.memory_space<vmem>>, %arg4: memref<128x128xbf16, #tpu.memory_space<vmem>>, %arg5: memref<1x128xf32, #tpu.memory_space<vmem>>, %arg6: memref<128x128xbf16, #tpu.memory_space<vmem>>, %arg7: memref<1x128xf32, #tpu.memory_space<vmem>>, %arg8: memref<256x128xbf16, #tpu.memory_space<vmem>>) attributes {dimension_semantics = [#tpu.dimension_semantics<parallel>], iteration_bounds = array<i64: 1>, scalar_prefetch = 0 : i64, scratch_operands = 0 : i64, tpu.core_type = #tpu.core_type<tc>, window_params = [{transform_indices = @transform_0, window_bounds = array<i64: 256, 128>}, {pipeline_mode = #tpu.pipeline_mode<synchronous>, transform_indices = @transform_1, window_bounds = array<i64: 128, 128>}, {pipeline_mode = #tpu.pipeline_mode<synchronous>, transform_indices = @transform_2, window_bounds = array<i64: 1, 128>}, {pipeline_mode = #tpu.pipeline_mode<synchronous>, transform_indices = @transform_3, window_bounds = array<i64: 128, 128>}, {pipeline_mode = #tpu.pipeline_mode<synchronous>, transform_indices = @transform_4, window_bounds = array<i64: 1, 128>}, {pipeline_mode = #tpu.pipeline_mode<synchronous>, transform_indices = @transform_5, window_bounds = array<i64: 128, 128>}, {pipeline_mode = #tpu.pipeline_mode<synchronous>, transform_indices = @transform_6, window_bounds = array<i64: 1, 128>}, {transform_indices = @transform_7, window_bounds = array<i64: 256, 128>}]} {
    %c0 = arith.constant 0 : index
    %c0_0 = arith.constant 0 : index
    %0 = vector.load %arg1[%c0, %c0_0] : memref<256x128xbf16, #tpu.memory_space<vmem>>, vector<256x128xbf16>
    %c0_1 = arith.constant 0 : index
    %c0_2 = arith.constant 0 : index
    %1 = vector.load %arg2[%c0_1, %c0_2] : memref<128x128xbf16, #tpu.memory_space<vmem>>, vector<128x128xbf16>
    %cst = arith.constant dense<0.000000e+00> : vector<256x128xf32>
    %2 = tpu.matmul %0, %1, %cst {dimension_numbers = #tpu.dot_dimension_numbers<[1], [0], [0], [1], [0, 0, 1, 1], [], []>} : vector<256x128xbf16>, vector<128x128xbf16>, vector<256x128xf32> -> vector<256x128xf32>
    %c0_3 = arith.constant 0 : index
    %c0_4 = arith.constant 0 : index
    %3 = vector.load %arg3[%c0_3, %c0_4] : memref<1x128xf32, #tpu.memory_space<vmem>>, vector<1x128xf32>
    %4 = vector.broadcast %3 : vector<1x128xf32> to vector<256x128xf32>
    %5 = arith.addf %2, %4 : vector<256x128xf32>
    %6 = arith.truncf %5 : vector<256x128xf32> to vector<256x128xbf16>
    %c0_5 = arith.constant 0 : index
    %c0_6 = arith.constant 0 : index
    %7 = vector.load %arg4[%c0_5, %c0_6] : memref<128x128xbf16, #tpu.memory_space<vmem>>, vector<128x128xbf16>
    %cst_7 = arith.constant dense<0.000000e+00> : vector<256x128xf32>
    %8 = tpu.matmul %6, %7, %cst_7 {dimension_numbers = #tpu.dot_dimension_numbers<[1], [0], [0], [1], [0, 0, 1, 1], [], []>} : vector<256x128xbf16>, vector<128x128xbf16>, vector<256x128xf32> -> vector<256x128xf32>
    %c0_8 = arith.constant 0 : index
    %c0_9 = arith.constant 0 : index
    %9 = vector.load %arg5[%c0_8, %c0_9] : memref<1x128xf32, #tpu.memory_space<vmem>>, vector<1x128xf32>
    %10 = vector.broadcast %9 : vector<1x128xf32> to vector<256x128xf32>
    %11 = arith.addf %8, %10 : vector<256x128xf32>
    %c0_10 = arith.constant 0 : index
    %c0_11 = arith.constant 0 : index
    %12 = vector.load %arg6[%c0_10, %c0_11] : memref<128x128xbf16, #tpu.memory_space<vmem>>, vector<128x128xbf16>
    %cst_12 = arith.constant dense<0.000000e+00> : vector<256x128xf32>
    %13 = tpu.matmul %6, %12, %cst_12 {dimension_numbers = #tpu.dot_dimension_numbers<[1], [0], [0], [1], [0, 0, 1, 1], [], []>} : vector<256x128xbf16>, vector<128x128xbf16>, vector<256x128xf32> -> vector<256x128xf32>
    %c0_13 = arith.constant 0 : index
    %c0_14 = arith.constant 0 : index
    %14 = vector.load %arg7[%c0_13, %c0_14] : memref<1x128xf32, #tpu.memory_space<vmem>>, vector<1x128xf32>
    %15 = vector.broadcast %14 : vector<1x128xf32> to vector<256x128xf32>
    %16 = arith.addf %13, %15 : vector<256x128xf32>
    %17 = arith.negf %16 : vector<256x128xf32>
    %18 = math.exp %17 : vector<256x128xf32>
    %cst_15 = arith.constant 1.000000e+00 : f32
    %19 = vector.broadcast %cst_15 : f32 to vector<256x128xf32>
    %20 = arith.addf %19, %18 : vector<256x128xf32>
    %21 = arith.divf %19, %20 : vector<256x128xf32>
    %22 = arith.mulf %16, %21 : vector<256x128xf32>
    %23 = arith.mulf %11, %22 : vector<256x128xf32>
    %24 = arith.truncf %23 : vector<256x128xf32> to vector<256x128xbf16>
    %c0_16 = arith.constant 0 : index
    %c0_17 = arith.constant 0 : index
    %25 = vector.load %arg8[%c0_16, %c0_17] : memref<256x128xbf16, #tpu.memory_space<vmem>>, vector<256x128xbf16>
    tpu.vector_store %arg8[%c0_16, %c0_17], %24 {strides = array<i32>} : memref<256x128xbf16, #tpu.memory_space<vmem>>, vector<256x128xbf16>,
    return
  }
  func.func @transform_0(%arg0: i32) -> (i32, i32) {
    %c0_i32 = arith.constant 0 : i32
    %c0_i32_0 = arith.constant 0 : i32
    return %arg0, %c0_i32 : i32, i32
  }
  func.func @transform_1(%arg0: i32) -> (i32, i32) {
    %c0_i32 = arith.constant 0 : i32
    %c0_i32_0 = arith.constant 0 : i32
    %c0_i32_1 = arith.constant 0 : i32
    return %c0_i32, %c0_i32_0 : i32, i32
  }
  func.func @transform_2(%arg0: i32) -> (i32, i32) {
    %c0_i32 = arith.constant 0 : i32
    %c0_i32_0 = arith.constant 0 : i32
    %c0_i32_1 = arith.constant 0 : i32
    return %c0_i32, %c0_i32_0 : i32, i32
  }
  func.func @transform_3(%arg0: i32) -> (i32, i32) {
    %c0_i32 = arith.constant 0 : i32
    %c0_i32_0 = arith.constant 0 : i32
    %c0_i32_1 = arith.constant 0 : i32
    return %c0_i32, %c0_i32_0 : i32, i32
  }
  func.func @transform_4(%arg0: i32) -> (i32, i32) {
    %c0_i32 = arith.constant 0 : i32
    %c0_i32_0 = arith.constant 0 : i32
    %c0_i32_1 = arith.constant 0 : i32
    return %c0_i32, %c0_i32_0 : i32, i32
  }
  func.func @transform_5(%arg0: i32) -> (i32, i32) {
    %c0_i32 = arith.constant 0 : i32
    %c0_i32_0 = arith.constant 0 : i32
    %c0_i32_1 = arith.constant 0 : i32
    return %c0_i32, %c0_i32_0 : i32, i32
  }
  func.func @transform_6(%arg0: i32) -> (i32, i32) {
    %c0_i32 = arith.constant 0 : i32
    %c0_i32_0 = arith.constant 0 : i32
    %c0_i32_1 = arith.constant 0 : i32
    return %c0_i32, %c0_i32_0 : i32, i32
  }
  func.func @transform_7(%arg0: i32) -> (i32, i32) {
    %c0_i32 = arith.constant 0 : i32
    %c0_i32_0 = arith.constant 0 : i32
    return %arg0, %c0_i32 : i32, i32
  }
}

</mosaic_0001>

<llo_original>
// kernel: tpu_custom_call.1
$region0: #{tpu_custom_call.1}
  #allocation0 [shape = 'u32[]', space=smem, size = 0x4, offset = 0x4, fixed_abs, tag = 'smem constant byte address 0x4 - core index']
  #allocation1 [shape = 'u32[144,128]{1,0:T(1,128)}', space=vmem, size = 0x12000, scoped, tag = 'internal scratch']
  %s0 = inlined_call_operand.hbm [shape: f32[8,128], index: 0, kind: input, shape index: {}]
  %s1 = inlined_call_operand.hbm [shape: f32[8,128], index: 1, kind: output, shape index: {}]
  %s2 = sld [smem:[#allocation0]]
  $region18: #{tpu_custom_call.1} parent=0
    _
  %s4 = ssub.s32 1, %s2
  %s5 = scalar_select 0, %s4, %s2
  $region1: #{tpu_custom_call.1} parent=0
    #allocation2 [shape = 'u8[4096]{0}', space=vmem, size = 0x1000, scoped, tag = 'input window, operand 0, single buffered']
    #allocation3 [shape = 's32[1]{0}', space=sflag, size = 0x4, scoped, tag = 'scoped memory for tpu_custom_call.1']
    #allocation4 [shape = 's32[1]{0}', space=sflag, size = 0x4, scoped, tag = 'scoped memory for tpu_custom_call.1']
    #allocation5 [shape = 'u8[4096]{0}', space=vmem, size = 0x1000, scoped, tag = 'output window, operand 0, single buffered']
    %6 = vsyncpa [#allocation3], 0
    %7 = vsyncpa [#allocation4], 0
    // Predicated region
    $region2: #{tpu_custom_call.1} parent=1 // pred_check
      _
    $region3: #{tpu_custom_call.1} parent=1 // pred_check_branch
      %9 = sbr.rel (0) target = $region5
    $region4: #{tpu_custom_call.1} parent=1 // pred_region
      %s11 = ssub.s32 128, 128
      %12 = vsyncadd [#allocation3], %s11
      %s14 = sshll.u32 [#allocation2], 4
      %s15 = int_to_ptr.vmem [resolvable:$true] %s14
      %17 = dma.hbm_to_vmem [thread:$0]  %s0, 128, %s15, [#allocation3]
    $region5: #{tpu_custom_call.1} parent=1 // pred_fallthru
      _
    // Predicated region
    $region6: #{tpu_custom_call.1} parent=1 // pred_check
      _
    $region7: #{tpu_custom_call.1} parent=1 // pred_check_branch
      %19 = sbr.rel (0) target = $region9
    $region8: #{tpu_custom_call.1} parent=1 // pred_region
      %20 = dma.done [#allocation3], 128
    $region9: #{tpu_custom_call.1} parent=1 // pred_fallthru
      _
    %v21 = vld [vmem:[#allocation2] sm:$0xff]
    %v22 = vadd.f32 %v21, 1.0
    %23 = vst [vmem:[#allocation5] sm:$0xff] %v22
    // Predicated region
    $region10: #{tpu_custom_call.1} parent=1 // pred_check
      _
    $region11: #{tpu_custom_call.1} parent=1 // pred_check_branch
      %25 = sbr.rel (0) target = $region13
    $region12: #{tpu_custom_call.1} parent=1 // pred_region
      %s27 = ssub.s32 128, 128
      %28 = vsyncadd [#allocation4], %s27
      %s30 = sshll.u32 [#allocation5], 4
      %s31 = int_to_ptr.vmem [resolvable:$true] %s30
      %33 = dma.vmem_to_hbm [thread:$0]  %s31, 128, %s1, [#allocation4]
    $region13: #{tpu_custom_call.1} parent=1 // pred_fallthru
      _
    // Predicated region
    $region14: #{tpu_custom_call.1} parent=1 // pred_check
      _
    $region15: #{tpu_custom_call.1} parent=1 // pred_check_branch
      %35 = sbr.rel (0) target = $region17
    $region16: #{tpu_custom_call.1} parent=1 // pred_region
      %36 = dma.done [#allocation4], 128
    $region17: #{tpu_custom_call.1} parent=1 // pred_fallthru
      _
    %37 = vsyncpa [#allocation3], 1
    %38 = vsyncpa [#allocation4], 1

// kernel: _lambda_.3
$region0: #{_lambda_.3}
  #allocation0 [shape = 'u32[]', space=smem, size = 0x4, offset = 0x4, fixed_abs, tag = 'smem constant byte address 0x4 - core index']
  #allocation1 [shape = 'u32[144,128]{1,0:T(1,128)}', space=vmem, size = 0x12000, scoped, tag = 'internal scratch']
  %s0 = inlined_call_operand.vmem [shape: bf16[256,64], index: 0, kind: input, shape index: {}]
  %s1 = inlined_call_operand.hbm [shape: bf16[64,128], index: 1, kind: input, shape index: {}]
  %s2 = inlined_call_operand.vmem [shape: f32[1,128], index: 2, kind: input, shape index: {}]
  %s3 = inlined_call_operand.vmem [shape: bf16[128,128], index: 3, kind: input, shape index: {}]
  %s4 = inlined_call_operand.vmem [shape: f32[1,128], index: 4, kind: input, shape index: {}]
  %s5 = inlined_call_operand.hbm [shape: bf16[128,128], index: 5, kind: input, shape index: {}]
  %s6 = inlined_call_operand.vmem [shape: f32[1,128], index: 6, kind: input, shape index: {}]
  %s7 = inlined_call_operand.vmem [shape: bf16[128,8], index: 7, kind: input, shape index: {}]
  %s8 = inlined_call_operand.vmem [shape: bf16[128,256], index: 8, kind: input, shape index: {}]
  %s9 = inlined_call_operand.vmem [shape: bf16[128,256], index: 9, kind: input, shape index: {}]
  %s10 = inlined_call_operand.vmem [shape: bf16[256,128], index: 10, kind: input, shape index: {}]
  %s11 = inlined_call_operand.vmem [shape: bf16[256,128], index: 11, kind: output, shape index: {0}]
  %s12 = inlined_call_operand.vmem [shape: f32[256,8], index: 12, kind: output, shape index: {1}]
  %s13 = inlined_call_operand.vmem [shape: bf16[256,128], index: 13, kind: output, shape index: {2}]
  %14 = xla_tuple %s11, %s12, %s13
  %s15 = sld [smem:[#allocation0]]
  $region78: #{_lambda_.3} parent=0
    _
  %s17 = ssub.s32 1, %s15
  %s18 = scalar_select 0, %s17, %s15
  $region1: #{_lambda_.3} parent=0
    #allocation2 [shape = 'u8[16384]{0}', space=vmem, size = 0x4000, scoped, tag = 'input window, operand 1, single buffered']
    #allocation3 [shape = 's32[1]{0}', space=sflag, size = 0x4, scoped, tag = 'scoped memory for _lambda_.3']
    #allocation4 [shape = 'u8[32768]{0}', space=vmem, size = 0x8000, scoped, tag = 'input window, operand 5, single buffered']
    #allocation5 [shape = 's32[1]{0}', space=sflag, size = 0x4, scoped, tag = 'scoped memory for _lambda_.3']
    %19 = vsyncpa [#allocation3], 0
    %20 = vsyncpa [#allocation5], 0
    // Predicated region
    $region2: #{_lambda_.3} parent=1 // pred_check
      _
    $region3: #{_lambda_.3} parent=1 // pred_check_branch
      %22 = sbr.rel (0) target = $region5
    $region4: #{_lambda_.3} parent=1 // pred_region
      _
    $region5: #{_lambda_.3} parent=1 // pred_fallthru
      _
    // Predicated region
    $region6: #{_lambda_.3} parent=1 // pred_check
      _
    $region7: #{_lambda_.3} parent=1 // pred_check_branch
      %24 = sbr.rel (0) target = $region9
    $region8: #{_lambda_.3} parent=1 // pred_region
      %s26 = ssub.s32 512, 512
      %27 = vsyncadd [#allocation3], %s26
      %s28 = sshll.u32 [#allocation2], 4
      %s29 = int_to_ptr.vmem [resolvable:$true] %s28
      %34 = dma.hbm_to_vmem [thread:$0]  %s1, 512, %s29, [#allocation3], 64, 64, 4
    $region9: #{_lambda_.3} parent=1 // pred_fallthru
      _
    // Predicated region
    $region10: #{_lambda_.3} parent=1 // pred_check
      _
    $region11: #{_lambda_.3} parent=1 // pred_check_branch
      %36 = sbr.rel (0) target = $region13
    $region12: #{_lambda_.3} parent=1 // pred_region
      _
    $region13: #{_lambda_.3} parent=1 // pred_fallthru
      _
    // Predicated region
    $region14: #{_lambda_.3} parent=1 // pred_check
      _
    $region15: #{_lambda_.3} parent=1 // pred_check_branch
      %38 = sbr.rel (0) target = $region17
    $region16: #{_lambda_.3} parent=1 // pred_region
      _
    $region17: #{_lambda_.3} parent=1 // pred_fallthru
      _
    // Predicated region
    $region18: #{_lambda_.3} parent=1 // pred_check
      _
    $region19: #{_lambda_.3} parent=1 // pred_check_branch
      %40 = sbr.rel (0) target = $region21
    $region20: #{_lambda_.3} parent=1 // pred_region
      _
    $region21: #{_lambda_.3} parent=1 // pred_fallthru
      _
    // Predicated region
    $region22: #{_lambda_.3} parent=1 // pred_check
      _
    $region23: #{_lambda_.3} parent=1 // pred_check_branch
      %42 = sbr.rel (0) target = $region25
    $region24: #{_lambda_.3} parent=1 // pred_region
      %s44 = ssub.s32 1024, 1024
      %45 = vsyncadd [#allocation5], %s44
      %s46 = sshll.u32 [#allocation4], 4
      %s47 = int_to_ptr.vmem [resolvable:$true] %s46
      %52 = dma.hbm_to_vmem [thread:$0]  %s5, 1024, %s47, [#allocation5], 64, 64, 4
    $region25: #{_lambda_.3} parent=1 // pred_fallthru
      _
    // Predicated region
    $region26: #{_lambda_.3} parent=1 // pred_check
      _
    $region27: #{_lambda_.3} parent=1 // pred_check_branch
      %54 = sbr.rel (0) target = $region29
    $region28: #{_lambda_.3} parent=1 // pred_region
      _
    $region29: #{_lambda_.3} parent=1 // pred_fallthru
      _
    // Predicated region
    $region30: #{_lambda_.3} parent=1 // pred_check
      _
    $region31: #{_lambda_.3} parent=1 // pred_check_branch
      %56 = sbr.rel (0) target = $region33
    $region32: #{_lambda_.3} parent=1 // pred_region
      _
    $region33: #{_lambda_.3} parent=1 // pred_fallthru
      _
    // Predicated region
    $region34: #{_lambda_.3} parent=1 // pred_check
      _
    $region35: #{_lambda_.3} parent=1 // pred_check_branch
      %58 = sbr.rel (0) target = $region37
    $region36: #{_lambda_.3} parent=1 // pred_region
      _
    $region37: #{_lambda_.3} parent=1 // pred_fallthru
      _
    // Predicated region
    $region38: #{_lambda_.3} parent=1 // pred_check
      _
    $region39: #{_lambda_.3} parent=1 // pred_check_branch
      %60 = sbr.rel (0) target = $region41
    $region40: #{_lambda_.3} parent=1 // pred_region
      _
    $region41: #{_lambda_.3} parent=1 // pred_fallthru
      _
    // Predicated region
    $region42: #{_lambda_.3} parent=1 // pred_check
      _
    $region43: #{_lambda_.3} parent=1 // pred_check_branch
      %62 = sbr.rel (0) target = $region45
    $region44: #{_lambda_.3} parent=1 // pred_region
      _
    $region45: #{_lambda_.3} parent=1 // pred_fallthru
      _
    // Predicated region
    $region46: #{_lambda_.3} parent=1 // pred_check
      _
    $region47: #{_lambda_.3} parent=1 // pred_check_branch
      %64 = sbr.rel (0) target = $region49
    $region48: #{_lambda_.3} parent=1 // pred_region
      %65 = dma.done [#allocation3], 512
    $region49: #{_lambda_.3} parent=1 // pred_fallthru
      _
    // Predicated region
    $region50: #{_lambda_.3} parent=1 // pred_check
      _
    $region51: #{_lambda_.3} parent=1 // pred_check_branch
      %67 = sbr.rel (0) target = $region53
    $region52: #{_lambda_.3} parent=1 // pred_region
      %68 = dma.done [#allocation5], 1024
    $region53: #{_lambda_.3} parent=1 // pred_fallthru
      _
    %v70 = vld [vmem:[%s0] sm:$0xf]
    %v71 = vld [vmem:[%s0 + $0x4] sm:$0xf]
    %v72 = vld [vmem:[%s0 + $0x8] sm:$0xf]
    %v73 = vld [vmem:[%s0 + $0xc] sm:$0xf]
    %v74 = vld [vmem:[%s0 + $0x10] sm:$0xf]
    %v75 = vld [vmem:[%s0 + $0x14] sm:$0xf]
    %v76 = vld [vmem:[%s0 + $0x18] sm:$0xf]
    %v77 = vld [vmem:[%s0 + $0x1c] sm:$0xf]
    %v78 = vld [vmem:[%s0 + $0x20] sm:$0xf]
    %v79 = vld [vmem:[%s0 + $0x24] sm:$0xf]
    %v80 = vld [vmem:[%s0 + $0x28] sm:$0xf]
    %v81 = vld [vmem:[%s0 + $0x2c] sm:$0xf]
    %v82 = vld [vmem:[%s0 + $0x30] sm:$0xf]
    %v83 = vld [vmem:[%s0 + $0x34] sm:$0xf]
    %v84 = vld [vmem:[%s0 + $0x38] sm:$0xf]
    %v85 = vld [vmem:[%s0 + $0x3c] sm:$0xf]
    %v86 = vld [vmem:[%s0 + $0x40] sm:$0xf]
    %v87 = vld [vmem:[%s0 + $0x44] sm:$0xf]
    %v88 = vld [vmem:[%s0 + $0x48] sm:$0xf]
    %v89 = vld [vmem:[%s0 + $0x4c] sm:$0xf]
    %v90 = vld [vmem:[%s0 + $0x50] sm:$0xf]
    %v91 = vld [vmem:[%s0 + $0x54] sm:$0xf]
    %v92 = vld [vmem:[%s0 + $0x58] sm:$0xf]
    %v93 = vld [vmem:[%s0 + $0x5c] sm:$0xf]
    %v94 = vld [vmem:[%s0 + $0x60] sm:$0xf]
    %v95 = vld [vmem:[%s0 + $0x64] sm:$0xf]
    %v96 = vld [vmem:[%s0 + $0x68] sm:$0xf]
    %v97 = vld [vmem:[%s0 + $0x6c] sm:$0xf]
    %v98 = vld [vmem:[%s0 + $0x70] sm:$0xf]
    %v99 = vld [vmem:[%s0 + $0x74] sm:$0xf]
    %v100 = vld [vmem:[%s0 + $0x78] sm:$0xf]
    %v101 = vld [vmem:[%s0 + $0x7c] sm:$0xf]
    %v102 = vld [vmem:[#allocation2] sm:$0xf]
    %v103 = vld [vmem:[#allocation2 + $0x4] sm:$0xf]
    %v104 = vld [vmem:[#allocation2 + $0x8] sm:$0xf]
    %v105 = vld [vmem:[#allocation2 + $0xc] sm:$0xf]
    %v106 = vld [vmem:[#allocation2 + $0x10] sm:$0xf]
    %v107 = vld [vmem:[#allocation2 + $0x14] sm:$0xf]
    %v108 = vld [vmem:[#allocation2 + $0x18] sm:$0xf]
    %v109 = vld [vmem:[#allocation2 + $0x1c] sm:$0xf]
    %v110 = vld [vmem:[%s2] sm:$0x1]
    %v112 = vlaneseq
    %v113 = vshrl.u32 %v112, 7
    %v114 = vsub.s32 0, %v113
    %v115 = vrot.slane %v110, %v114
    %v149 = vunpack.c.l.b16 %v70
    %v150 = vunpack.c.l.b16 %v71
    %v151 = vunpack.c.l.b16 %v72
    %v152 = vunpack.c.l.b16 %v73
    %v153 = vunpack.c.l.b16 %v74
    %v154 = vunpack.c.l.b16 %v75
    %v155 = vunpack.c.l.b16 %v76
    %v156 = vunpack.c.l.b16 %v77
    %v157 = vunpack.c.l.b16 %v78
    %v158 = vunpack.c.l.b16 %v79
    %v159 = vunpack.c.l.b16 %v80
    %v160 = vunpack.c.l.b16 %v81
    %v161 = vunpack.c.l.b16 %v82
    %v162 = vunpack.c.l.b16 %v83
    %v163 = vunpack.c.l.b16 %v84
    %v164 = vunpack.c.l.b16 %v85
    %v165 = vunpack.c.l.b16 %v86
    %v166 = vunpack.c.l.b16 %v87
    %v167 = vunpack.c.l.b16 %v88
    %v168 = vunpack.c.l.b16 %v89
    %v169 = vunpack.c.l.b16 %v90
    %v170 = vunpack.c.l.b16 %v91
    %v171 = vunpack.c.l.b16 %v92
    %v172 = vunpack.c.l.b16 %v93
    %v173 = vunpack.c.l.b16 %v94
    %v174 = vunpack.c.l.b16 %v95
    %v175 = vunpack.c.l.b16 %v96
    %v176 = vunpack.c.l.b16 %v97
    %v177 = vunpack.c.l.b16 %v98
    %v178 = vunpack.c.l.b16 %v99
    %v179 = vunpack.c.l.b16 %v100
    %v180 = vunpack.c.l.b16 %v101
    %v181 = vpack.c.b16 %v150, %v149
    %v182 = vpack.c.b16 %v152, %v151
    %v183 = vpack.c.b16 %v154, %v153
    %v184 = vpack.c.b16 %v156, %v155
    %v185 = vpack.c.b16 %v158, %v157
    %v186 = vpack.c.b16 %v160, %v159
    %v187 = vpack.c.b16 %v162, %v161
    %v188 = vpack.c.b16 %v164, %v163
    %v189 = vpack.c.b16 %v166, %v165
    %v190 = vpack.c.b16 %v168, %v167
    %v191 = vpack.c.b16 %v170, %v169
    %v192 = vpack.c.b16 %v172, %v171
    %v193 = vpack.c.b16 %v174, %v173
    %v194 = vpack.c.b16 %v176, %v175
    %v195 = vpack.c.b16 %v178, %v177
    %v196 = vpack.c.b16 %v180, %v179
    %v205 = vunpack.c.l.b16 %v102
    %v206 = vunpack.c.l.b16 %v103
    %v207 = vunpack.c.l.b16 %v104
    %v208 = vunpack.c.l.b16 %v105
    %v209 = vunpack.c.l.b16 %v106
    %v210 = vunpack.c.l.b16 %v107
    %v211 = vunpack.c.l.b16 %v108
    %v212 = vunpack.c.l.b16 %v109
    %v213 = vpack.c.b16 %v206, %v205
    %v214 = vpack.c.b16 %v208, %v207
    %v215 = vpack.c.b16 %v210, %v209
    %v216 = vpack.c.b16 %v212, %v211
    %vm221 = vcmask 523264
    %v223 = vsel %vm221, %v181, 0
    %v226 = vsel %vm221, %v182, 0
    %v229 = vsel %vm221, %v183, 0
    %v232 = vsel %vm221, %v184, 0
    %v235 = vsel %vm221, %v185, 0
    %v238 = vsel %vm221, %v186, 0
    %v241 = vsel %vm221, %v187, 0
    %v244 = vsel %vm221, %v188, 0
    %v247 = vsel %vm221, %v189, 0
    %v250 = vsel %vm221, %v190, 0
    %v253 = vsel %vm221, %v191, 0
    %v256 = vsel %vm221, %v192, 0
    %v259 = vsel %vm221, %v193, 0
    %v262 = vsel %vm221, %v194, 0
    %v265 = vsel %vm221, %v195, 0
    %v268 = vsel %vm221, %v196, 0
    %270 = vmatprep.subr.bf16.mxu0 0
    %271 = vmatpush1.bf16.msra.mxu0 0
    %272 = vmatprep.subr.bf16.mxu0 0
    %273 = vmatpush1.bf16.msra.mxu0 0
    %274 = vmatprep.subr.bf16.mxu0 0
    %275 = vmatpush1.bf16.msra.mxu0 0
    %276 = vmatprep.subr.bf16.mxu0 0
    %277 = vmatpush1.bf16.msra.mxu0 0
    %278 = vmatprep.subr.bf16.mxu0 0
    %279 = vmatpush1.bf16.msra.mxu0 %v216
    %280 = vmatprep.subr.bf16.mxu0 0
    %281 = vmatpush1.bf16.msra.mxu0 %v215
    %282 = vmatprep.subr.bf16.mxu0 0
    %283 = vmatpush1.bf16.msra.mxu0 %v214
    %284 = vmatprep.subr.bf16.mxu0 0
    %285 = vmatpush1.bf16.msra.mxu0 %v213
    %286 = vmatprep.subr.bf16.mxu0 0
    %287 = vmatpush2.bf16.msra.mxu0 0
    %288 = vmatprep.subr.bf16.mxu0 0
    %289 = vmatpush2.bf16.msra.mxu0 0
    %290 = vmatprep.subr.bf16.mxu0 0
    %291 = vmatpush2.bf16.msra.mxu0 0
    %292 = vmatprep.subr.bf16.mxu0 0
    %293 = vmatpush2.bf16.msra.mxu0 0
    %294 = vmatprep.subr.bf16.mxu0 0
    %295 = vmatpush2.bf16.msra.mxu0 0
    %296 = vmatprep.subr.bf16.mxu0 0
    %297 = vmatpush2.bf16.msra.mxu0 0
    %298 = vmatprep.subr.bf16.mxu0 0
    %299 = vmatpush2.bf16.msra.mxu0 0
    %300 = vmatprep.subr.bf16.mxu0 0
    %301 = vmatpush2.bf16.msra.mxu0 0
    %302 = vmatprep.mubr.bf16.mxu0 0
    %303 = vmatmul.mubr.bf16.gmra.mxu0 %v223
    %v304 = vpop.f32.mrf.mxu0
    %v305 = vadd.f32 %v115, %v304
    %v306 = vpop.f32.mrf.mxu0
    %v307 = vpop.f32.mrf.mxu0
    %v308 = vadd.f32 %v115, %v307
    %v309 = vpop.f32.mrf.mxu0
    %310 = vmatprep.mubr.bf16.mxu0 0
    %311 = vmatmul.mubr.bf16.gmra.mxu0 %v226
    %v312 = vpop.f32.mrf.mxu0
    %v313 = vadd.f32 %v115, %v312
    %v314 = vpop.f32.mrf.mxu0
    %v315 = vpop.f32.mrf.mxu0
    %v316 = vadd.f32 %v115, %v315
    %v317 = vpop.f32.mrf.mxu0
    %318 = vmatprep.mubr.bf16.mxu0 0
    %319 = vmatmul.mubr.bf16.gmra.mxu0 %v229
    %v320 = vpop.f32.mrf.mxu0
    %v321 = vadd.f32 %v115, %v320
    %v322 = vpop.f32.mrf.mxu0
    %v323 = vpop.f32.mrf.mxu0
    %v324 = vadd.f32 %v115, %v323
    %v325 = vpop.f32.mrf.mxu0
    %326 = vmatprep.mubr.bf16.mxu0 0
    %327 = vmatmul.mubr.bf16.gmra.mxu0 %v232
    %v328 = vpop.f32.mrf.mxu0
    %v329 = vadd.f32 %v115, %v328
    %v330 = vpop.f32.mrf.mxu0
    %v331 = vpop.f32.mrf.mxu0
    %v332 = vadd.f32 %v115, %v331
    %v333 = vpop.f32.mrf.mxu0
    %334 = vmatprep.mubr.bf16.mxu0 0
    %335 = vmatmul.mubr.bf16.gmra.mxu0 %v235
    %v336 = vpop.f32.mrf.mxu0
    %v337 = vadd.f32 %v115, %v336
    %v338 = vpop.f32.mrf.mxu0
    %v339 = vpop.f32.mrf.mxu0
    %v340 = vadd.f32 %v115, %v339
    %v341 = vpop.f32.mrf.mxu0
    %342 = vmatprep.mubr.bf16.mxu0 0
    %343 = vmatmul.mubr.bf16.gmra.mxu0 %v238
    %v344 = vpop.f32.mrf.mxu0
    %v345 = vadd.f32 %v115, %v344
    %v346 = vpop.f32.mrf.mxu0
    %v347 = vpop.f32.mrf.mxu0
    %v348 = vadd.f32 %v115, %v347
    %v349 = vpop.f32.mrf.mxu0
    %350 = vmatprep.mubr.bf16.mxu0 0
    %351 = vmatmul.mubr.bf16.gmra.mxu0 %v241
    %v352 = vpop.f32.mrf.mxu0
    %v353 = vadd.f32 %v115, %v352
    %v354 = vpop.f32.mrf.mxu0
    %v355 = vpop.f32.mrf.mxu0
    %v356 = vadd.f32 %v115, %v355
    %v357 = vpop.f32.mrf.mxu0
    %358 = vmatprep.mubr.bf16.mxu0 0
    %359 = vmatmul.mubr.bf16.gmra.mxu0 %v244
    %v360 = vpop.f32.mrf.mxu0
    %v361 = vadd.f32 %v115, %v360
    %v362 = vpop.f32.mrf.mxu0
    %v363 = vpop.f32.mrf.mxu0
    %v364 = vadd.f32 %v115, %v363
    %v365 = vpop.f32.mrf.mxu0
    %366 = vmatprep.mubr.bf16.mxu0 0
    %367 = vmatmul.mubr.bf16.gmra.mxu0 %v247
    %v368 = vpop.f32.mrf.mxu0
    %v369 = vadd.f32 %v115, %v368
    %v370 = vpop.f32.mrf.mxu0
    %v371 = vpop.f32.mrf.mxu0
    %v372 = vadd.f32 %v115, %v371
    %v373 = vpop.f32.mrf.mxu0
    %374 = vmatprep.mubr.bf16.mxu0 0
    %375 = vmatmul.mubr.bf16.gmra.mxu0 %v250
    %v376 = vpop.f32.mrf.mxu0
    %v377 = vadd.f32 %v115, %v376
    %v378 = vpop.f32.mrf.mxu0
    %v379 = vpop.f32.mrf.mxu0
    %v380 = vadd.f32 %v115, %v379
    %v381 = vpop.f32.mrf.mxu0
    %382 = vmatprep.mubr.bf16.mxu0 0
    %383 = vmatmul.mubr.bf16.gmra.mxu0 %v253
    %v384 = vpop.f32.mrf.mxu0
    %v385 = vadd.f32 %v115, %v384
    %v386 = vpop.f32.mrf.mxu0
    %v387 = vpop.f32.mrf.mxu0
    %v388 = vadd.f32 %v115, %v387
    %v389 = vpop.f32.mrf.mxu0
    %390 = vmatprep.mubr.bf16.mxu0 0
    %391 = vmatmul.mubr.bf16.gmra.mxu0 %v256
    %v392 = vpop.f32.mrf.mxu0
    %v393 = vadd.f32 %v115, %v392
    %v394 = vpop.f32.mrf.mxu0
    %v395 = vpop.f32.mrf.mxu0
    %v396 = vadd.f32 %v115, %v395
    %v397 = vpop.f32.mrf.mxu0
    %398 = vmatprep.mubr.bf16.mxu0 0
    %399 = vmatmul.mubr.bf16.gmra.mxu0 %v259
    %v400 = vpop.f32.mrf.mxu0
    %v401 = vadd.f32 %v115, %v400
    %v402 = vpop.f32.mrf.mxu0
    %v403 = vpop.f32.mrf.mxu0
    %v404 = vadd.f32 %v115, %v403
    %v405 = vpop.f32.mrf.mxu0
    %406 = vmatprep.mubr.bf16.mxu0 0
    %407 = vmatmul.mubr.bf16.gmra.mxu0 %v262
    %v408 = vpop.f32.mrf.mxu0
    %v409 = vadd.f32 %v115, %v408
    %v410 = vpop.f32.mrf.mxu0
    %v411 = vpop.f32.mrf.mxu0
    %v412 = vadd.f32 %v115, %v411
    %v413 = vpop.f32.mrf.mxu0
    %414 = vmatprep.mubr.bf16.mxu0 0
    %415 = vmatmul.mubr.bf16.gmra.mxu0 %v265
    %v416 = vpop.f32.mrf.mxu0
    %v417 = vadd.f32 %v115, %v416
    %v418 = vpop.f32.mrf.mxu0
    %v419 = vpop.f32.mrf.mxu0
    %v420 = vadd.f32 %v115, %v419
    %v421 = vpop.f32.mrf.mxu0
    %422 = vmatprep.mubr.bf16.mxu0 0
    %423 = vmatmul.mubr.bf16.gmra.mxu0 %v268
    %v424 = vpop.f32.mrf.mxu0
    %v425 = vadd.f32 %v115, %v424
    %v426 = vpop.f32.mrf.mxu0
    %v427 = vpop.f32.mrf.mxu0
    %v428 = vadd.f32 %v115, %v427
    %v429 = vpop.f32.mrf.mxu0
    %430 = vdwg.mxu0
    %v431 = vpack.c.bf16 %v308, %v305
    %v432 = vpack.c.bf16 %v316, %v313
    %v433 = vpack.c.bf16 %v324, %v321
    %v434 = vpack.c.bf16 %v332, %v329
    %v435 = vpack.c.bf16 %v340, %v337
    %v436 = vpack.c.bf16 %v348, %v345
    %v437 = vpack.c.bf16 %v356, %v353
    %v438 = vpack.c.bf16 %v364, %v361
    %v439 = vpack.c.bf16 %v372, %v369
    %v440 = vpack.c.bf16 %v380, %v377
    %v441 = vpack.c.bf16 %v388, %v385
    %v442 = vpack.c.bf16 %v396, %v393
    %v443 = vpack.c.bf16 %v404, %v401
    %v444 = vpack.c.bf16 %v412, %v409
    %v445 = vpack.c.bf16 %v420, %v417
    %v446 = vpack.c.bf16 %v428, %v425
    %v447 = vld [vmem:[%s3] sm:$0xf]
    %v448 = vld [vmem:[%s3 + $0x4] sm:$0xf]
    %v449 = vld [vmem:[%s3 + $0x8] sm:$0xf]
    %v450 = vld [vmem:[%s3 + $0xc] sm:$0xf]
    %v451 = vld [vmem:[%s3 + $0x10] sm:$0xf]
    %v452 = vld [vmem:[%s3 + $0x14] sm:$0xf]
    %v453 = vld [vmem:[%s3 + $0x18] sm:$0xf]
    %v454 = vld [vmem:[%s3 + $0x1c] sm:$0xf]
    %v455 = vld [vmem:[%s3 + $0x20] sm:$0xf]
    %v456 = vld [vmem:[%s3 + $0x24] sm:$0xf]
    %v457 = vld [vmem:[%s3 + $0x28] sm:$0xf]
    %v458 = vld [vmem:[%s3 + $0x2c] sm:$0xf]
    %v459 = vld [vmem:[%s3 + $0x30] sm:$0xf]
    %v460 = vld [vmem:[%s3 + $0x34] sm:$0xf]
    %v461 = vld [vmem:[%s3 + $0x38] sm:$0xf]
    %v462 = vld [vmem:[%s3 + $0x3c] sm:$0xf]
    %v463 = vld [vmem:[%s4] sm:$0x1]
    %v465 = vlaneseq
    %v466 = vshrl.u32 %v465, 7
    %v467 = vsub.s32 0, %v466
    %v468 = vrot.slane %v463, %v467
    %v486 = vunpack.c.l.b16 %v447
    %v487 = vunpack.c.l.b16 %v448
    %v488 = vunpack.c.l.b16 %v449
    %v489 = vunpack.c.l.b16 %v450
    %v490 = vunpack.c.l.b16 %v451
    %v491 = vunpack.c.l.b16 %v452
    %v492 = vunpack.c.l.b16 %v453
    %v493 = vunpack.c.l.b16 %v454
    %v494 = vunpack.c.l.b16 %v455
    %v495 = vunpack.c.l.b16 %v456
    %v496 = vunpack.c.l.b16 %v457
    %v497 = vunpack.c.l.b16 %v458
    %v498 = vunpack.c.l.b16 %v459
    %v499 = vunpack.c.l.b16 %v460
    %v500 = vunpack.c.l.b16 %v461
    %v501 = vunpack.c.l.b16 %v462
    %v502 = vpack.c.b16 %v487, %v486
    %v503 = vpack.c.b16 %v489, %v488
    %v504 = vpack.c.b16 %v491, %v490
    %v505 = vpack.c.b16 %v493, %v492
    %v506 = vpack.c.b16 %v495, %v494
    %v507 = vpack.c.b16 %v497, %v496
    %v508 = vpack.c.b16 %v499, %v498
    %v509 = vpack.c.b16 %v501, %v500
    %518 = vmatprep.subr.bf16.mxu0 0
    %519 = vmatpush1.bf16.msra.mxu0 %v509
    %520 = vmatprep.subr.bf16.mxu0 0
    %521 = vmatpush1.bf16.msra.mxu0 %v508
    %522 = vmatprep.subr.bf16.mxu0 0
    %523 = vmatpush1.bf16.msra.mxu0 %v507
    %524 = vmatprep.subr.bf16.mxu0 0
    %525 = vmatpush1.bf16.msra.mxu0 %v506
    %526 = vmatprep.subr.bf16.mxu0 0
    %527 = vmatpush1.bf16.msra.mxu0 %v505
    %528 = vmatprep.subr.bf16.mxu0 0
    %529 = vmatpush1.bf16.msra.mxu0 %v504
    %530 = vmatprep.subr.bf16.mxu0 0
    %531 = vmatpush1.bf16.msra.mxu0 %v503
    %532 = vmatprep.subr.bf16.mxu0 0
    %533 = vmatpush1.bf16.msra.mxu0 %v502
    %534 = vmatprep.subr.bf16.mxu0 0
    %535 = vmatpush2.bf16.msra.mxu0 0
    %536 = vmatprep.subr.bf16.mxu0 0
    %537 = vmatpush2.bf16.msra.mxu0 0
    %538 = vmatprep.subr.bf16.mxu0 0
    %539 = vmatpush2.bf16.msra.mxu0 0
    %540 = vmatprep.subr.bf16.mxu0 0
    %541 = vmatpush2.bf16.msra.mxu0 0
    %542 = vmatprep.subr.bf16.mxu0 0
    %543 = vmatpush2.bf16.msra.mxu0 0
    %544 = vmatprep.subr.bf16.mxu0 0
    %545 = vmatpush2.bf16.msra.mxu0 0
    %546 = vmatprep.subr.bf16.mxu0 0
    %547 = vmatpush2.bf16.msra.mxu0 0
    %548 = vmatprep.subr.bf16.mxu0 0
    %549 = vmatpush2.bf16.msra.mxu0 0
    %550 = vmatprep.mubr.bf16.mxu0 0
    %551 = vmatmul.mubr.bf16.gmra.mxu0 %v431
    %v552 = vpop.f32.mrf.mxu0
    %v553 = vadd.f32 %v468, %v552
    %v554 = vpop.f32.mrf.mxu0
    %v555 = vpop.f32.mrf.mxu0
    %v556 = vadd.f32 %v468, %v555
    %v557 = vpop.f32.mrf.mxu0
    %558 = vmatprep.mubr.bf16.mxu0 0
    %559 = vmatmul.mubr.bf16.gmra.mxu0 %v432
    %v560 = vpop.f32.mrf.mxu0
    %v561 = vadd.f32 %v468, %v560
    %v562 = vpop.f32.mrf.mxu0
    %v563 = vpop.f32.mrf.mxu0
    %v564 = vadd.f32 %v468, %v563
    %v565 = vpop.f32.mrf.mxu0
    %566 = vmatprep.mubr.bf16.mxu0 0
    %567 = vmatmul.mubr.bf16.gmra.mxu0 %v433
    %v568 = vpop.f32.mrf.mxu0
    %v569 = vadd.f32 %v468, %v568
    %v570 = vpop.f32.mrf.mxu0
    %v571 = vpop.f32.mrf.mxu0
    %v572 = vadd.f32 %v468, %v571
    %v573 = vpop.f32.mrf.mxu0
    %574 = vmatprep.mubr.bf16.mxu0 0
    %575 = vmatmul.mubr.bf16.gmra.mxu0 %v434
    %v576 = vpop.f32.mrf.mxu0
    %v577 = vadd.f32 %v468, %v576
    %v578 = vpop.f32.mrf.mxu0
    %v579 = vpop.f32.mrf.mxu0
    %v580 = vadd.f32 %v468, %v579
    %v581 = vpop.f32.mrf.mxu0
    %582 = vmatprep.mubr.bf16.mxu0 0
    %583 = vmatmul.mubr.bf16.gmra.mxu0 %v435
    %v584 = vpop.f32.mrf.mxu0
    %v585 = vadd.f32 %v468, %v584
    %v586 = vpop.f32.mrf.mxu0
    %v587 = vpop.f32.mrf.mxu0
    %v588 = vadd.f32 %v468, %v587
    %v589 = vpop.f32.mrf.mxu0
    %590 = vmatprep.mubr.bf16.mxu0 0
    %591 = vmatmul.mubr.bf16.gmra.mxu0 %v436
    %v592 = vpop.f32.mrf.mxu0
    %v593 = vadd.f32 %v468, %v592
    %v594 = vpop.f32.mrf.mxu0
    %v595 = vpop.f32.mrf.mxu0
    %v596 = vadd.f32 %v468, %v595
    %v597 = vpop.f32.mrf.mxu0
    %598 = vmatprep.mubr.bf16.mxu0 0
    %599 = vmatmul.mubr.bf16.gmra.mxu0 %v437
    %v600 = vpop.f32.mrf.mxu0
    %v601 = vadd.f32 %v468, %v600
    %v602 = vpop.f32.mrf.mxu0
    %v603 = vpop.f32.mrf.mxu0
    %v604 = vadd.f32 %v468, %v603
    %v605 = vpop.f32.mrf.mxu0
    %606 = vmatprep.mubr.bf16.mxu0 0
    %607 = vmatmul.mubr.bf16.gmra.mxu0 %v438
    %v608 = vpop.f32.mrf.mxu0
    %v609 = vadd.f32 %v468, %v608
    %v610 = vpop.f32.mrf.mxu0
    %v611 = vpop.f32.mrf.mxu0
    %v612 = vadd.f32 %v468, %v611
    %v613 = vpop.f32.mrf.mxu0
    %614 = vmatprep.mubr.bf16.mxu0 0
    %615 = vmatmul.mubr.bf16.gmra.mxu0 %v439
    %v616 = vpop.f32.mrf.mxu0
    %v617 = vadd.f32 %v468, %v616
    %v618 = vpop.f32.mrf.mxu0
    %v619 = vpop.f32.mrf.mxu0
    %v620 = vadd.f32 %v468, %v619
    %v621 = vpop.f32.mrf.mxu0
    %622 = vmatprep.mubr.bf16.mxu0 0
    %623 = vmatmul.mubr.bf16.gmra.mxu0 %v440
    %v624 = vpop.f32.mrf.mxu0
    %v625 = vadd.f32 %v468, %v624
    %v626 = vpop.f32.mrf.mxu0
    %v627 = vpop.f32.mrf.mxu0
    %v628 = vadd.f32 %v468, %v627
    %v629 = vpop.f32.mrf.mxu0
    %630 = vmatprep.mubr.bf16.mxu0 0
    %631 = vmatmul.mubr.bf16.gmra.mxu0 %v441
    %v632 = vpop.f32.mrf.mxu0
    %v633 = vadd.f32 %v468, %v632
    %v634 = vpop.f32.mrf.mxu0
    %v635 = vpop.f32.mrf.mxu0
    %v636 = vadd.f32 %v468, %v635
    %v637 = vpop.f32.mrf.mxu0
    %638 = vmatprep.mubr.bf16.mxu0 0
    %639 = vmatmul.mubr.bf16.gmra.mxu0 %v442
    %v640 = vpop.f32.mrf.mxu0
    %v641 = vadd.f32 %v468, %v640
    %v642 = vpop.f32.mrf.mxu0
    %v643 = vpop.f32.mrf.mxu0
    %v644 = vadd.f32 %v468, %v643
    %v645 = vpop.f32.mrf.mxu0
    %646 = vmatprep.mubr.bf16.mxu0 0
    %647 = vmatmul.mubr.bf16.gmra.mxu0 %v443
    %v648 = vpop.f32.mrf.mxu0
    %v649 = vadd.f32 %v468, %v648
    %v650 = vpop.f32.mrf.mxu0
    %v651 = vpop.f32.mrf.mxu0
    %v652 = vadd.f32 %v468, %v651
    %v653 = vpop.f32.mrf.mxu0
    %654 = vmatprep.mubr.bf16.mxu0 0
    %655 = vmatmul.mubr.bf16.gmra.mxu0 %v444
    %v656 = vpop.f32.mrf.mxu0
    %v657 = vadd.f32 %v468, %v656
    %v658 = vpop.f32.mrf.mxu0
    %v659 = vpop.f32.mrf.mxu0
    %v660 = vadd.f32 %v468, %v659
    %v661 = vpop.f32.mrf.mxu0
    %662 = vmatprep.mubr.bf16.mxu0 0
    %663 = vmatmul.mubr.bf16.gmra.mxu0 %v445
    %v664 = vpop.f32.mrf.mxu0
    %v665 = vadd.f32 %v468, %v664
    %v666 = vpop.f32.mrf.mxu0
    %v667 = vpop.f32.mrf.mxu0
    %v668 = vadd.f32 %v468, %v667
    %v669 = vpop.f32.mrf.mxu0
    %670 = vmatprep.mubr.bf16.mxu0 0
    %671 = vmatmul.mubr.bf16.gmra.mxu0 %v446
    %v672 = vpop.f32.mrf.mxu0
    %v673 = vadd.f32 %v468, %v672
    %v674 = vpop.f32.mrf.mxu0
    %v675 = vpop.f32.mrf.mxu0
    %v676 = vadd.f32 %v468, %v675
    %v677 = vpop.f32.mrf.mxu0
    %678 = vdwg.mxu0
    %v679 = vld [vmem:[#allocation4] sm:$0xf]
    %v680 = vld [vmem:[#allocation4 + $0x4] sm:$0xf]
    %v681 = vld [vmem:[#allocation4 + $0x8] sm:$0xf]
    %v682 = vld [vmem:[#allocation4 + $0xc] sm:$0xf]
    %v683 = vld [vmem:[#allocation4 + $0x10] sm:$0xf]
    %v684 = vld [vmem:[#allocation4 + $0x14] sm:$0xf]
    %v685 = vld [vmem:[#allocation4 + $0x18] sm:$0xf]
    %v686 = vld [vmem:[#allocation4 + $0x1c] sm:$0xf]
    %v687 = vld [vmem:[#allocation4 + $0x20] sm:$0xf]
    %v688 = vld [vmem:[#allocation4 + $0x24] sm:$0xf]
    %v689 = vld [vmem:[#allocation4 + $0x28] sm:$0xf]
    %v690 = vld [vmem:[#allocation4 + $0x2c] sm:$0xf]
    %v691 = vld [vmem:[#allocation4 + $0x30] sm:$0xf]
    %v692 = vld [vmem:[#allocation4 + $0x34] sm:$0xf]
    %v693 = vld [vmem:[#allocation4 + $0x38] sm:$0xf]
    %v694 = vld [vmem:[#allocation4 + $0x3c] sm:$0xf]
    %v695 = vld [vmem:[%s6] sm:$0x1]
    %v697 = vlaneseq
    %v698 = vshrl.u32 %v697, 7
    %v699 = vsub.s32 0, %v698
    %v700 = vrot.slane %v695, %v699
    %v718 = vunpack.c.l.b16 %v679
    %v719 = vunpack.c.l.b16 %v680
    %v720 = vunpack.c.l.b16 %v681
    %v721 = vunpack.c.l.b16 %v682
    %v722 = vunpack.c.l.b16 %v683
    %v723 = vunpack.c.l.b16 %v684
    %v724 = vunpack.c.l.b16 %v685
    %v725 = vunpack.c.l.b16 %v686
    %v726 = vunpack.c.l.b16 %v687
    %v727 = vunpack.c.l.b16 %v688
    %v728 = vunpack.c.l.b16 %v689
    %v729 = vunpack.c.l.b16 %v690
    %v730 = vunpack.c.l.b16 %v691
    %v731 = vunpack.c.l.b16 %v692
    %v732 = vunpack.c.l.b16 %v693
    %v733 = vunpack.c.l.b16 %v694
    %v734 = vpack.c.b16 %v719, %v718
    %v735 = vpack.c.b16 %v721, %v720
    %v736 = vpack.c.b16 %v723, %v722
    %v737 = vpack.c.b16 %v725, %v724
    %v738 = vpack.c.b16 %v727, %v726
    %v739 = vpack.c.b16 %v729, %v728
    %v740 = vpack.c.b16 %v731, %v730
    %v741 = vpack.c.b16 %v733, %v732
    %750 = vmatprep.subr.bf16.mxu0 0
    %751 = vmatpush1.bf16.msra.mxu0 %v741
    %752 = vmatprep.subr.bf16.mxu0 0
    %753 = vmatpush1.bf16.msra.mxu0 %v740
    %754 = vmatprep.subr.bf16.mxu0 0
    %755 = vmatpush1.bf16.msra.mxu0 %v739
    %756 = vmatprep.subr.bf16.mxu0 0
    %757 = vmatpush1.bf16.msra.mxu0 %v738
    %758 = vmatprep.subr.bf16.mxu0 0
    %759 = vmatpush1.bf16.msra.mxu0 %v737
    %760 = vmatprep.subr.bf16.mxu0 0
    %761 = vmatpush1.bf16.msra.mxu0 %v736
    %762 = vmatprep.subr.bf16.mxu0 0
    %763 = vmatpush1.bf16.msra.mxu0 %v735
    %764 = vmatprep.subr.bf16.mxu0 0
    %765 = vmatpush1.bf16.msra.mxu0 %v734
    %766 = vmatprep.subr.bf16.mxu0 0
    %767 = vmatpush2.bf16.msra.mxu0 0
    %768 = vmatprep.subr.bf16.mxu0 0
    %769 = vmatpush2.bf16.msra.mxu0 0
    %770 = vmatprep.subr.bf16.mxu0 0
    %771 = vmatpush2.bf16.msra.mxu0 0
    %772 = vmatprep.subr.bf16.mxu0 0
    %773 = vmatpush2.bf16.msra.mxu0 0
    %774 = vmatprep.subr.bf16.mxu0 0
    %775 = vmatpush2.bf16.msra.mxu0 0
    %776 = vmatprep.subr.bf16.mxu0 0
    %777 = vmatpush2.bf16.msra.mxu0 0
    %778 = vmatprep.subr.bf16.mxu0 0
    %779 = vmatpush2.bf16.msra.mxu0 0
    %780 = vmatprep.subr.bf16.mxu0 0
    %781 = vmatpush2.bf16.msra.mxu0 0
    %782 = vmatprep.mubr.bf16.mxu0 0
    %783 = vmatmul.mubr.bf16.gmra.mxu0 %v431
    %v784 = vpop.f32.mrf.mxu0
    %v785 = vadd.f32 %v700, %v784
    %v786 = vpop.f32.mrf.mxu0
    %v787 = vpop.f32.mrf.mxu0
    %v788 = vadd.f32 %v700, %v787
    %v789 = vpop.f32.mrf.mxu0
    %790 = vmatprep.mubr.bf16.mxu0 0
    %791 = vmatmul.mubr.bf16.gmra.mxu0 %v432
    %v792 = vpop.f32.mrf.mxu0
    %v793 = vadd.f32 %v700, %v792
    %v794 = vpop.f32.mrf.mxu0
    %v795 = vpop.f32.mrf.mxu0
    %v796 = vadd.f32 %v700, %v795
    %v797 = vpop.f32.mrf.mxu0
    %798 = vmatprep.mubr.bf16.mxu0 0
    %799 = vmatmul.mubr.bf16.gmra.mxu0 %v433
    %v800 = vpop.f32.mrf.mxu0
    %v801 = vadd.f32 %v700, %v800
    %v802 = vpop.f32.mrf.mxu0
    %v803 = vpop.f32.mrf.mxu0
    %v804 = vadd.f32 %v700, %v803
    %v805 = vpop.f32.mrf.mxu0
    %806 = vmatprep.mubr.bf16.mxu0 0
    %807 = vmatmul.mubr.bf16.gmra.mxu0 %v434
    %v808 = vpop.f32.mrf.mxu0
    %v809 = vadd.f32 %v700, %v808
    %v810 = vpop.f32.mrf.mxu0
    %v811 = vpop.f32.mrf.mxu0
    %v812 = vadd.f32 %v700, %v811
    %v813 = vpop.f32.mrf.mxu0
    %814 = vmatprep.mubr.bf16.mxu0 0
    %815 = vmatmul.mubr.bf16.gmra.mxu0 %v435
    %v816 = vpop.f32.mrf.mxu0
    %v817 = vadd.f32 %v700, %v816
    %v818 = vpop.f32.mrf.mxu0
    %v819 = vpop.f32.mrf.mxu0
    %v820 = vadd.f32 %v700, %v819
    %v821 = vpop.f32.mrf.mxu0
    %822 = vmatprep.mubr.bf16.mxu0 0
    %823 = vmatmul.mubr.bf16.gmra.mxu0 %v436
    %v824 = vpop.f32.mrf.mxu0
    %v825 = vadd.f32 %v700, %v824
    %v826 = vpop.f32.mrf.mxu0
    %v827 = vpop.f32.mrf.mxu0
    %v828 = vadd.f32 %v700, %v827
    %v829 = vpop.f32.mrf.mxu0
    %830 = vmatprep.mubr.bf16.mxu0 0
    %831 = vmatmul.mubr.bf16.gmra.mxu0 %v437
    %v832 = vpop.f32.mrf.mxu0
    %v833 = vadd.f32 %v700, %v832
    %v834 = vpop.f32.mrf.mxu0
    %v835 = vpop.f32.mrf.mxu0
    %v836 = vadd.f32 %v700, %v835
    %v837 = vpop.f32.mrf.mxu0
    %838 = vmatprep.mubr.bf16.mxu0 0
    %839 = vmatmul.mubr.bf16.gmra.mxu0 %v438
    %v840 = vpop.f32.mrf.mxu0
    %v841 = vadd.f32 %v700, %v840
    %v842 = vpop.f32.mrf.mxu0
    %v843 = vpop.f32.mrf.mxu0
    %v844 = vadd.f32 %v700, %v843
    %v845 = vpop.f32.mrf.mxu0
    %846 = vmatprep.mubr.bf16.mxu0 0
    %847 = vmatmul.mubr.bf16.gmra.mxu0 %v439
    %v848 = vpop.f32.mrf.mxu0
    %v849 = vadd.f32 %v700, %v848
    %v850 = vpop.f32.mrf.mxu0
    %v851 = vpop.f32.mrf.mxu0
    %v852 = vadd.f32 %v700, %v851
    %v853 = vpop.f32.mrf.mxu0
    %854 = vmatprep.mubr.bf16.mxu0 0
    %855 = vmatmul.mubr.bf16.gmra.mxu0 %v440
    %v856 = vpop.f32.mrf.mxu0
    %v857 = vadd.f32 %v700, %v856
    %v858 = vpop.f32.mrf.mxu0
    %v859 = vpop.f32.mrf.mxu0
    %v860 = vadd.f32 %v700, %v859
    %v861 = vpop.f32.mrf.mxu0
    %862 = vmatprep.mubr.bf16.mxu0 0
    %863 = vmatmul.mubr.bf16.gmra.mxu0 %v441
    %v864 = vpop.f32.mrf.mxu0
    %v865 = vadd.f32 %v700, %v864
    %v866 = vpop.f32.mrf.mxu0
    %v867 = vpop.f32.mrf.mxu0
    %v868 = vadd.f32 %v700, %v867
    %v869 = vpop.f32.mrf.mxu0
    %870 = vmatprep.mubr.bf16.mxu0 0
    %871 = vmatmul.mubr.bf16.gmra.mxu0 %v442
    %v872 = vpop.f32.mrf.mxu0
    %v873 = vadd.f32 %v700, %v872
    %v874 = vpop.f32.mrf.mxu0
    %v875 = vpop.f32.mrf.mxu0
    %v876 = vadd.f32 %v700, %v875
    %v877 = vpop.f32.mrf.mxu0
    %878 = vmatprep.mubr.bf16.mxu0 0
    %879 = vmatmul.mubr.bf16.gmra.mxu0 %v443
    %v880 = vpop.f32.mrf.mxu0
    %v881 = vadd.f32 %v700, %v880
    %v882 = vpop.f32.mrf.mxu0
    %v883 = vpop.f32.mrf.mxu0
    %v884 = vadd.f32 %v700, %v883
    %v885 = vpop.f32.mrf.mxu0
    %886 = vmatprep.mubr.bf16.mxu0 0
    %887 = vmatmul.mubr.bf16.gmra.mxu0 %v444
    %v888 = vpop.f32.mrf.mxu0
    %v889 = vadd.f32 %v700, %v888
    %v890 = vpop.f32.mrf.mxu0
    %v891 = vpop.f32.mrf.mxu0
    %v892 = vadd.f32 %v700, %v891
    %v893 = vpop.f32.mrf.mxu0
    %894 = vmatprep.mubr.bf16.mxu0 0
    %895 = vmatmul.mubr.bf16.gmra.mxu0 %v445
    %v896 = vpop.f32.mrf.mxu0
    %v897 = vadd.f32 %v700, %v896
    %v898 = vpop.f32.mrf.mxu0
    %v899 = vpop.f32.mrf.mxu0
    %v900 = vadd.f32 %v700, %v899
    %v901 = vpop.f32.mrf.mxu0
    %902 = vmatprep.mubr.bf16.mxu0 0
    %903 = vmatmul.mubr.bf16.gmra.mxu0 %v446
    %v904 = vpop.f32.mrf.mxu0
    %v905 = vadd.f32 %v700, %v904
    %v906 = vpop.f32.mrf.mxu0
    %v907 = vpop.f32.mrf.mxu0
    %v908 = vadd.f32 %v700, %v907
    %v909 = vpop.f32.mrf.mxu0
    %910 = vdwg.mxu0
    %v911 = vxor.u32 %v785, 2147483648
    %v912 = vxor.u32 %v788, 2147483648
    %v913 = vxor.u32 %v793, 2147483648
    %v914 = vxor.u32 %v796, 2147483648
    %v915 = vxor.u32 %v801, 2147483648
    %v916 = vxor.u32 %v804, 2147483648
    %v917 = vxor.u32 %v809, 2147483648
    %v918 = vxor.u32 %v812, 2147483648
    %v919 = vxor.u32 %v817, 2147483648
    %v920 = vxor.u32 %v820, 2147483648
    %v921 = vxor.u32 %v825, 2147483648
    %v922 = vxor.u32 %v828, 2147483648
    %v923 = vxor.u32 %v833, 2147483648
    %v924 = vxor.u32 %v836, 2147483648
    %v925 = vxor.u32 %v841, 2147483648
    %v926 = vxor.u32 %v844, 2147483648
    %v927 = vxor.u32 %v849, 2147483648
    %v928 = vxor.u32 %v852, 2147483648
    %v929 = vxor.u32 %v857, 2147483648
    %v930 = vxor.u32 %v860, 2147483648
    %v931 = vxor.u32 %v865, 2147483648
    %v932 = vxor.u32 %v868, 2147483648
    %v933 = vxor.u32 %v873, 2147483648
    %v934 = vxor.u32 %v876, 2147483648
    %v935 = vxor.u32 %v881, 2147483648
    %v936 = vxor.u32 %v884, 2147483648
    %v937 = vxor.u32 %v889, 2147483648
    %v938 = vxor.u32 %v892, 2147483648
    %v939 = vxor.u32 %v897, 2147483648
    %v940 = vxor.u32 %v900, 2147483648
    %v941 = vxor.u32 %v905, 2147483648
    %v942 = vxor.u32 %v908, 2147483648
    %v943 = vmul.f32 %v911, 1.442695
    %v944 = vpow.pop %v943
    %v945 = vmul.f32 %v912, 1.442695
    %v946 = vpow.pop %v945
    %v947 = vmul.f32 %v913, 1.442695
    %v948 = vpow.pop %v947
    %v949 = vmul.f32 %v914, 1.442695
    %v950 = vpow.pop %v949
    %v951 = vmul.f32 %v915, 1.442695
    %v952 = vpow.pop %v951
    %v953 = vmul.f32 %v916, 1.442695
    %v954 = vpow.pop %v953
    %v955 = vmul.f32 %v917, 1.442695
    %v956 = vpow.pop %v955
    %v957 = vmul.f32 %v918, 1.442695
    %v958 = vpow.pop %v957
    %v959 = vmul.f32 %v919, 1.442695
    %v960 = vpow.pop %v959
    %v961 = vmul.f32 %v920, 1.442695
    %v962 = vpow.pop %v961
    %v963 = vmul.f32 %v921, 1.442695
    %v964 = vpow.pop %v963
    %v965 = vmul.f32 %v922, 1.442695
    %v966 = vpow.pop %v965
    %v967 = vmul.f32 %v923, 1.442695
    %v968 = vpow.pop %v967
    %v969 = vmul.f32 %v924, 1.442695
    %v970 = vpow.pop %v969
    %v971 = vmul.f32 %v925, 1.442695
    %v972 = vpow.pop %v971
    %v973 = vmul.f32 %v926, 1.442695
    %v974 = vpow.pop %v973
    %v975 = vmul.f32 %v927, 1.442695
    %v976 = vpow.pop %v975
    %v977 = vmul.f32 %v928, 1.442695
    %v978 = vpow.pop %v977
    %v979 = vmul.f32 %v929, 1.442695
    %v980 = vpow.pop %v979
    %v981 = vmul.f32 %v930, 1.442695
    %v982 = vpow.pop %v981
    %v983 = vmul.f32 %v931, 1.442695
    %v984 = vpow.pop %v983
    %v985 = vmul.f32 %v932, 1.442695
    %v986 = vpow.pop %v985
    %v987 = vmul.f32 %v933, 1.442695
    %v988 = vpow.pop %v987
    %v989 = vmul.f32 %v934, 1.442695
    %v990 = vpow.pop %v989
    %v991 = vmul.f32 %v935, 1.442695
    %v992 = vpow.pop %v991
    %v993 = vmul.f32 %v936, 1.442695
    %v994 = vpow.pop %v993
    %v995 = vmul.f32 %v937, 1.442695
    %v996 = vpow.pop %v995
    %v997 = vmul.f32 %v938, 1.442695
    %v998 = vpow.pop %v997
    %v999 = vmul.f32 %v939, 1.442695
    %v1000 = vpow.pop %v999
    %v1001 = vmul.f32 %v940, 1.442695
    %v1002 = vpow.pop %v1001
    %v1003 = vmul.f32 %v941, 1.442695
    %v1004 = vpow.pop %v1003
    %v1005 = vmul.f32 %v942, 1.442695
    %v1006 = vpow.pop %v1005
    %v1007 = vadd.f32 %v944, 1.0
    %v1008 = vadd.f32 %v946, 1.0
    %v1009 = vadd.f32 %v948, 1.0
    %v1010 = vadd.f32 %v950, 1.0
    %v1011 = vadd.f32 %v952, 1.0
    %v1012 = vadd.f32 %v954, 1.0
    %v1013 = vadd.f32 %v956, 1.0
    %v1014 = vadd.f32 %v958, 1.0
    %v1015 = vadd.f32 %v960, 1.0
    %v1016 = vadd.f32 %v962, 1.0
    %v1017 = vadd.f32 %v964, 1.0
    %v1018 = vadd.f32 %v966, 1.0
    %v1019 = vadd.f32 %v968, 1.0
    %v1020 = vadd.f32 %v970, 1.0
    %v1021 = vadd.f32 %v972, 1.0
    %v1022 = vadd.f32 %v974, 1.0
    %v1023 = vadd.f32 %v976, 1.0
    %v1024 = vadd.f32 %v978, 1.0
    %v1025 = vadd.f32 %v980, 1.0
    %v1026 = vadd.f32 %v982, 1.0
    %v1027 = vadd.f32 %v984, 1.0
    %v1028 = vadd.f32 %v986, 1.0
    %v1029 = vadd.f32 %v988, 1.0
    %v1030 = vadd.f32 %v990, 1.0
    %v1031 = vadd.f32 %v992, 1.0
    %v1032 = vadd.f32 %v994, 1.0
    %v1033 = vadd.f32 %v996, 1.0
    %v1034 = vadd.f32 %v998, 1.0
    %v1035 = vadd.f32 %v1000, 1.0
    %v1036 = vadd.f32 %v1002, 1.0
    %v1037 = vadd.f32 %v1004, 1.0
    %v1038 = vadd.f32 %v1006, 1.0
    %v1039 = vrcp.pop %v1007
    %v1040 = vmul.f32 1.0, %v1039
    %v1041 = vrcp.pop %v1008
    %v1042 = vmul.f32 1.0, %v1041
    %v1043 = vrcp.pop %v1009
    %v1044 = vmul.f32 1.0, %v1043
    %v1045 = vrcp.pop %v1010
    %v1046 = vmul.f32 1.0, %v1045
    %v1047 = vrcp.pop %v1011
    %v1048 = vmul.f32 1.0, %v1047
    %v1049 = vrcp.pop %v1012
    %v1050 = vmul.f32 1.0, %v1049
    %v1051 = vrcp.pop %v1013
    %v1052 = vmul.f32 1.0, %v1051
    %v1053 = vrcp.pop %v1014
    %v1054 = vmul.f32 1.0, %v1053
    %v1055 = vrcp.pop %v1015
    %v1056 = vmul.f32 1.0, %v1055
    %v1057 = vrcp.pop %v1016
    %v1058 = vmul.f32 1.0, %v1057
    %v1059 = vrcp.pop %v1017
    %v1060 = vmul.f32 1.0, %v1059
    %v1061 = vrcp.pop %v1018
    %v1062 = vmul.f32 1.0, %v1061
    %v1063 = vrcp.pop %v1019
    %v1064 = vmul.f32 1.0, %v1063
    %v1065 = vrcp.pop %v1020
    %v1066 = vmul.f32 1.0, %v1065
    %v1067 = vrcp.pop %v1021
    %v1068 = vmul.f32 1.0, %v1067
    %v1069 = vrcp.pop %v1022
    %v1070 = vmul.f32 1.0, %v1069
    %v1071 = vrcp.pop %v1023
    %v1072 = vmul.f32 1.0, %v1071
    %v1073 = vrcp.pop %v1024
    %v1074 = vmul.f32 1.0, %v1073
    %v1075 = vrcp.pop %v1025
    %v1076 = vmul.f32 1.0, %v1075
    %v1077 = vrcp.pop %v1026
    %v1078 = vmul.f32 1.0, %v1077
    %v1079 = vrcp.pop %v1027
    %v1080 = vmul.f32 1.0, %v1079
    %v1081 = vrcp.pop %v1028
    %v1082 = vmul.f32 1.0, %v1081
    %v1083 = vrcp.pop %v1029
    %v1084 = vmul.f32 1.0, %v1083
    %v1085 = vrcp.pop %v1030
    %v1086 = vmul.f32 1.0, %v1085
    %v1087 = vrcp.pop %v1031
    %v1088 = vmul.f32 1.0, %v1087
    %v1089 = vrcp.pop %v1032
    %v1090 = vmul.f32 1.0, %v1089
    %v1091 = vrcp.pop %v1033
    %v1092 = vmul.f32 1.0, %v1091
    %v1093 = vrcp.pop %v1034
    %v1094 = vmul.f32 1.0, %v1093
    %v1095 = vrcp.pop %v1035
    %v1096 = vmul.f32 1.0, %v1095
    %v1097 = vrcp.pop %v1036
    %v1098 = vmul.f32 1.0, %v1097
    %v1099 = vrcp.pop %v1037
    %v1100 = vmul.f32 1.0, %v1099
    %v1101 = vrcp.pop %v1038
    %v1102 = vmul.f32 1.0, %v1101
    %v1103 = vmul.f32 %v785, %v1040
    %v1104 = vmul.f32 %v788, %v1042
    %v1105 = vmul.f32 %v793, %v1044
    %v1106 = vmul.f32 %v796, %v1046
    %v1107 = vmul.f32 %v801, %v1048
    %v1108 = vmul.f32 %v804, %v1050
    %v1109 = vmul.f32 %v809, %v1052
    %v1110 = vmul.f32 %v812, %v1054
    %v1111 = vmul.f32 %v817, %v1056
    %v1112 = vmul.f32 %v820, %v1058
    %v1113 = vmul.f32 %v825, %v1060
    %v1114 = vmul.f32 %v828, %v1062
    %v1115 = vmul.f32 %v833, %v1064
    %v1116 = vmul.f32 %v836, %v1066
    %v1117 = vmul.f32 %v841, %v1068
    %v1118 = vmul.f32 %v844, %v1070
    %v1119 = vmul.f32 %v849, %v1072
    %v1120 = vmul.f32 %v852, %v1074
    %v1121 = vmul.f32 %v857, %v1076
    %v1122 = vmul.f32 %v860, %v1078
    %v1123 = vmul.f32 %v865, %v1080
    %v1124 = vmul.f32 %v868, %v1082
    %v1125 = vmul.f32 %v873, %v1084
    %v1126 = vmul.f32 %v876, %v1086
    %v1127 = vmul.f32 %v881, %v1088
    %v1128 = vmul.f32 %v884, %v1090
    %v1129 = vmul.f32 %v889, %v1092
    %v1130 = vmul.f32 %v892, %v1094
    %v1131 = vmul.f32 %v897, %v1096
    %v1132 = vmul.f32 %v900, %v1098
    %v1133 = vmul.f32 %v905, %v1100
    %v1134 = vmul.f32 %v908, %v1102
    %v1135 = vmul.f32 %v553, %v1103
    %v1136 = vmul.f32 %v556, %v1104
    %v1137 = vmul.f32 %v561, %v1105
    %v1138 = vmul.f32 %v564, %v1106
    %v1139 = vmul.f32 %v569, %v1107
    %v1140 = vmul.f32 %v572, %v1108
    %v1141 = vmul.f32 %v577, %v1109
    %v1142 = vmul.f32 %v580, %v1110
    %v1143 = vmul.f32 %v585, %v1111
    %v1144 = vmul.f32 %v588, %v1112
    %v1145 = vmul.f32 %v593, %v1113
    %v1146 = vmul.f32 %v596, %v1114
    %v1147 = vmul.f32 %v601, %v1115
    %v1148 = vmul.f32 %v604, %v1116
    %v1149 = vmul.f32 %v609, %v1117
    %v1150 = vmul.f32 %v612, %v1118
    %v1151 = vmul.f32 %v617, %v1119
    %v1152 = vmul.f32 %v620, %v1120
    %v1153 = vmul.f32 %v625, %v1121
    %v1154 = vmul.f32 %v628, %v1122
    %v1155 = vmul.f32 %v633, %v1123
    %v1156 = vmul.f32 %v636, %v1124
    %v1157 = vmul.f32 %v641, %v1125
    %v1158 = vmul.f32 %v644, %v1126
    %v1159 = vmul.f32 %v649, %v1127
    %v1160 = vmul.f32 %v652, %v1128
    %v1161 = vmul.f32 %v657, %v1129
    %v1162 = vmul.f32 %v660, %v1130
    %v1163 = vmul.f32 %v665, %v1131
    %v1164 = vmul.f32 %v668, %v1132
    %v1165 = vmul.f32 %v673, %v1133
    %v1166 = vmul.f32 %v676, %v1134
    %v1167 = vpack.c.bf16 %v1136, %v1135
    %v1168 = vpack.c.bf16 %v1138, %v1137
    %v1169 = vpack.c.bf16 %v1140, %v1139
    %v1170 = vpack.c.bf16 %v1142, %v1141
    %v1171 = vpack.c.bf16 %v1144, %v1143
    %v1172 = vpack.c.bf16 %v1146, %v1145
    %v1173 = vpack.c.bf16 %v1148, %v1147
    %v1174 = vpack.c.bf16 %v1150, %v1149
    %v1175 = vpack.c.bf16 %v1152, %v1151
    %v1176 = vpack.c.bf16 %v1154, %v1153
    %v1177 = vpack.c.bf16 %v1156, %v1155
    %v1178 = vpack.c.bf16 %v1158, %v1157
    %v1179 = vpack.c.bf16 %v1160, %v1159
    %v1180 = vpack.c.bf16 %v1162, %v1161
    %v1181 = vpack.c.bf16 %v1164, %v1163
    %v1182 = vpack.c.bf16 %v1166, %v1165
    %v1199 = vunpack.c.l.b16 %v1167
    %v1200 = vunpack.c.h.b16 %v1167
    %v1201 = vunpack.c.l.b16 %v1168
    %v1202 = vunpack.c.h.b16 %v1168
    %v1203 = vunpack.c.l.b16 %v1169
    %v1204 = vunpack.c.h.b16 %v1169
    %v1205 = vunpack.c.l.b16 %v1170
    %v1206 = vunpack.c.h.b16 %v1170
    %v1207 = vunpack.c.l.b16 %v1171
    %v1208 = vunpack.c.h.b16 %v1171
    %v1209 = vunpack.c.l.b16 %v1172
    %v1210 = vunpack.c.h.b16 %v1172
    %v1211 = vunpack.c.l.b16 %v1173
    %v1212 = vunpack.c.h.b16 %v1173
    %v1213 = vunpack.c.l.b16 %v1174
    %v1214 = vunpack.c.h.b16 %v1174
    %v1215 = vunpack.c.l.b16 %v1175
    %v1216 = vunpack.c.h.b16 %v1175
    %v1217 = vunpack.c.l.b16 %v1176
    %v1218 = vunpack.c.h.b16 %v1176
    %v1219 = vunpack.c.l.b16 %v1177
    %v1220 = vunpack.c.h.b16 %v1177
    %v1221 = vunpack.c.l.b16 %v1178
    %v1222 = vunpack.c.h.b16 %v1178
    %v1223 = vunpack.c.l.b16 %v1179
    %v1224 = vunpack.c.h.b16 %v1179
    %v1225 = vunpack.c.l.b16 %v1180
    %v1226 = vunpack.c.h.b16 %v1180
    %v1227 = vunpack.c.l.b16 %v1181
    %v1228 = vunpack.c.h.b16 %v1181
    %v1229 = vunpack.c.l.b16 %v1182
    %v1230 = vunpack.c.h.b16 %v1182
    %v1231 = vpack.c.b16 %v1199, %v1199
    %v1232 = vpack.c.b16 %v1200, %v1200
    %v1233 = vpack.c.b16 %v1201, %v1201
    %v1234 = vpack.c.b16 %v1202, %v1202
    %v1235 = vpack.c.b16 %v1203, %v1203
    %v1236 = vpack.c.b16 %v1204, %v1204
    %v1237 = vpack.c.b16 %v1205, %v1205
    %v1238 = vpack.c.b16 %v1206, %v1206
    %v1239 = vpack.c.b16 %v1207, %v1207
    %v1240 = vpack.c.b16 %v1208, %v1208
    %v1241 = vpack.c.b16 %v1209, %v1209
    %v1242 = vpack.c.b16 %v1210, %v1210
    %v1243 = vpack.c.b16 %v1211, %v1211
    %v1244 = vpack.c.b16 %v1212, %v1212
    %v1245 = vpack.c.b16 %v1213, %v1213
    %v1246 = vpack.c.b16 %v1214, %v1214
    %v1247 = vpack.c.b16 %v1215, %v1215
    %v1248 = vpack.c.b16 %v1216, %v1216
    %v1249 = vpack.c.b16 %v1217, %v1217
    %v1250 = vpack.c.b16 %v1218, %v1218
    %v1251 = vpack.c.b16 %v1219, %v1219
    %v1252 = vpack.c.b16 %v1220, %v1220
    %v1253 = vpack.c.b16 %v1221, %v1221
    %v1254 = vpack.c.b16 %v1222, %v1222
    %v1255 = vpack.c.b16 %v1223, %v1223
    %v1256 = vpack.c.b16 %v1224, %v1224
    %v1257 = vpack.c.b16 %v1225, %v1225
    %v1258 = vpack.c.b16 %v1226, %v1226
    %v1259 = vpack.c.b16 %v1227, %v1227
    %v1260 = vpack.c.b16 %v1228, %v1228
    %v1261 = vpack.c.b16 %v1229, %v1229
    %v1262 = vpack.c.b16 %v1230, %v1230
    %1295 = vst [vmem:[%s11] sm:$0xf] %v1231
    %1296 = vst [vmem:[%s11 + $0x4] sm:$0xf] %v1232
    %1297 = vst [vmem:[%s11 + $0x8] sm:$0xf] %v1233
    %1298 = vst [vmem:[%s11 + $0xc] sm:$0xf] %v1234
    %1299 = vst [vmem:[%s11 + $0x10] sm:$0xf] %v1235
    %1300 = vst [vmem:[%s11 + $0x14] sm:$0xf] %v1236
    %1301 = vst [vmem:[%s11 + $0x18] sm:$0xf] %v1237
    %1302 = vst [vmem:[%s11 + $0x1c] sm:$0xf] %v1238
    %1303 = vst [vmem:[%s11 + $0x20] sm:$0xf] %v1239
    %1304 = vst [vmem:[%s11 + $0x24] sm:$0xf] %v1240
    %1305 = vst [vmem:[%s11 + $0x28] sm:$0xf] %v1241
    %1306 = vst [vmem:[%s11 + $0x2c] sm:$0xf] %v1242
    %1307 = vst [vmem:[%s11 + $0x30] sm:$0xf] %v1243
    %1308 = vst [vmem:[%s11 + $0x34] sm:$0xf] %v1244
    %1309 = vst [vmem:[%s11 + $0x38] sm:$0xf] %v1245
    %1310 = vst [vmem:[%s11 + $0x3c] sm:$0xf] %v1246
    %1311 = vst [vmem:[%s11 + $0x40] sm:$0xf] %v1247
    %1312 = vst [vmem:[%s11 + $0x44] sm:$0xf] %v1248
    %1313 = vst [vmem:[%s11 + $0x48] sm:$0xf] %v1249
    %1314 = vst [vmem:[%s11 + $0x4c] sm:$0xf] %v1250
    %1315 = vst [vmem:[%s11 + $0x50] sm:$0xf] %v1251
    %1316 = vst [vmem:[%s11 + $0x54] sm:$0xf] %v1252
    %1317 = vst [vmem:[%s11 + $0x58] sm:$0xf] %v1253
    %1318 = vst [vmem:[%s11 + $0x5c] sm:$0xf] %v1254
    %1319 = vst [vmem:[%s11 + $0x60] sm:$0xf] %v1255
    %1320 = vst [vmem:[%s11 + $0x64] sm:$0xf] %v1256
    %1321 = vst [vmem:[%s11 + $0x68] sm:$0xf] %v1257
    %1322 = vst [vmem:[%s11 + $0x6c] sm:$0xf] %v1258
    %1323 = vst [vmem:[%s11 + $0x70] sm:$0xf] %v1259
    %1324 = vst [vmem:[%s11 + $0x74] sm:$0xf] %v1260
    %1325 = vst [vmem:[%s11 + $0x78] sm:$0xf] %v1261
    %1326 = vst [vmem:[%s11 + $0x7c] sm:$0xf] %v1262
    %v1327 = vld [vmem:[%s7] sm:$0xf]
    %v1328 = vld [vmem:[%s7 + $0x4] sm:$0xf]
    %v1329 = vld [vmem:[%s7 + $0x8] sm:$0xf]
    %v1330 = vld [vmem:[%s7 + $0xc] sm:$0xf]
    %v1331 = vld [vmem:[%s7 + $0x10] sm:$0xf]
    %v1332 = vld [vmem:[%s7 + $0x14] sm:$0xf]
    %v1333 = vld [vmem:[%s7 + $0x18] sm:$0xf]
    %v1334 = vld [vmem:[%s7 + $0x1c] sm:$0xf]
    %v1335 = vld [vmem:[%s7 + $0x20] sm:$0xf]
    %v1336 = vld [vmem:[%s7 + $0x24] sm:$0xf]
    %v1337 = vld [vmem:[%s7 + $0x28] sm:$0xf]
    %v1338 = vld [vmem:[%s7 + $0x2c] sm:$0xf]
    %v1339 = vld [vmem:[%s7 + $0x30] sm:$0xf]
    %v1340 = vld [vmem:[%s7 + $0x34] sm:$0xf]
    %v1341 = vld [vmem:[%s7 + $0x38] sm:$0xf]
    %v1342 = vld [vmem:[%s7 + $0x3c] sm:$0xf]
    %v1359 = vunpack.c.l.b16 %v1327
    %v1360 = vunpack.c.l.b16 %v1328
    %v1361 = vunpack.c.l.b16 %v1329
    %v1362 = vunpack.c.l.b16 %v1330
    %v1363 = vunpack.c.l.b16 %v1331
    %v1364 = vunpack.c.l.b16 %v1332
    %v1365 = vunpack.c.l.b16 %v1333
    %v1366 = vunpack.c.l.b16 %v1334
    %v1367 = vunpack.c.l.b16 %v1335
    %v1368 = vunpack.c.l.b16 %v1336
    %v1369 = vunpack.c.l.b16 %v1337
    %v1370 = vunpack.c.l.b16 %v1338
    %v1371 = vunpack.c.l.b16 %v1339
    %v1372 = vunpack.c.l.b16 %v1340
    %v1373 = vunpack.c.l.b16 %v1341
    %v1374 = vunpack.c.l.b16 %v1342
    %v1375 = vpack.c.b16 %v1360, %v1359
    %v1376 = vpack.c.b16 %v1362, %v1361
    %v1377 = vpack.c.b16 %v1364, %v1363
    %v1378 = vpack.c.b16 %v1366, %v1365
    %v1379 = vpack.c.b16 %v1368, %v1367
    %v1380 = vpack.c.b16 %v1370, %v1369
    %v1381 = vpack.c.b16 %v1372, %v1371
    %v1382 = vpack.c.b16 %v1374, %v1373
    %1391 = vmatprep.subr.bf16.mxu0 0
    %1392 = vmatpush1.bf16.msra.mxu0 %v1382
    %1393 = vmatprep.subr.bf16.mxu0 0
    %1394 = vmatpush1.bf16.msra.mxu0 %v1381
    %1395 = vmatprep.subr.bf16.mxu0 0
    %1396 = vmatpush1.bf16.msra.mxu0 %v1380
    %1397 = vmatprep.subr.bf16.mxu0 0
    %1398 = vmatpush1.bf16.msra.mxu0 %v1379
    %1399 = vmatprep.subr.bf16.mxu0 0
    %1400 = vmatpush1.bf16.msra.mxu0 %v1378
    %1401 = vmatprep.subr.bf16.mxu0 0
    %1402 = vmatpush1.bf16.msra.mxu0 %v1377
    %1403 = vmatprep.subr.bf16.mxu0 0
    %1404 = vmatpush1.bf16.msra.mxu0 %v1376
    %1405 = vmatprep.subr.bf16.mxu0 0
    %1406 = vmatpush1.bf16.msra.mxu0 %v1375
    %1407 = vmatprep.subr.bf16.mxu0 0
    %1408 = vmatpush2.bf16.msra.mxu0 0
    %1409 = vmatprep.subr.bf16.mxu0 0
    %1410 = vmatpush2.bf16.msra.mxu0 0
    %1411 = vmatprep.subr.bf16.mxu0 0
    %1412 = vmatpush2.bf16.msra.mxu0 0
    %1413 = vmatprep.subr.bf16.mxu0 0
    %1414 = vmatpush2.bf16.msra.mxu0 0
    %1415 = vmatprep.subr.bf16.mxu0 0
    %1416 = vmatpush2.bf16.msra.mxu0 0
    %1417 = vmatprep.subr.bf16.mxu0 0
    %1418 = vmatpush2.bf16.msra.mxu0 0
    %1419 = vmatprep.subr.bf16.mxu0 0
    %1420 = vmatpush2.bf16.msra.mxu0 0
    %1421 = vmatprep.subr.bf16.mxu0 0
    %1422 = vmatpush2.bf16.msra.mxu0 0
    %1423 = vmatprep.mubr.bf16.mxu0 0
    %1424 = vmatmul.mubr.bf16.gmra.mxu0 %v1167
    %v1425 = vpop.f32.mrf.mxu0
    %v1426 = vadd.f32 0.0, %v1425
    %v1427 = vpop.f32.mrf.mxu0
    %v1428 = vpop.f32.mrf.mxu0
    %v1429 = vadd.f32 0.0, %v1428
    %v1430 = vpop.f32.mrf.mxu0
    %1431 = vmatprep.mubr.bf16.mxu0 0
    %1432 = vmatmul.mubr.bf16.gmra.mxu0 %v1168
    %v1433 = vpop.f32.mrf.mxu0
    %v1434 = vadd.f32 0.0, %v1433
    %v1435 = vpop.f32.mrf.mxu0
    %v1436 = vpop.f32.mrf.mxu0
    %v1437 = vadd.f32 0.0, %v1436
    %v1438 = vpop.f32.mrf.mxu0
    %1439 = vmatprep.mubr.bf16.mxu0 0
    %1440 = vmatmul.mubr.bf16.gmra.mxu0 %v1169
    %v1441 = vpop.f32.mrf.mxu0
    %v1442 = vadd.f32 0.0, %v1441
    %v1443 = vpop.f32.mrf.mxu0
    %v1444 = vpop.f32.mrf.mxu0
    %v1445 = vadd.f32 0.0, %v1444
    %v1446 = vpop.f32.mrf.mxu0
    %1447 = vmatprep.mubr.bf16.mxu0 0
    %1448 = vmatmul.mubr.bf16.gmra.mxu0 %v1170
    %v1449 = vpop.f32.mrf.mxu0
    %v1450 = vadd.f32 0.0, %v1449
    %v1451 = vpop.f32.mrf.mxu0
    %v1452 = vpop.f32.mrf.mxu0
    %v1453 = vadd.f32 0.0, %v1452
    %v1454 = vpop.f32.mrf.mxu0
    %1455 = vmatprep.mubr.bf16.mxu0 0
    %1456 = vmatmul.mubr.bf16.gmra.mxu0 %v1171
    %v1457 = vpop.f32.mrf.mxu0
    %v1458 = vadd.f32 0.0, %v1457
    %v1459 = vpop.f32.mrf.mxu0
    %v1460 = vpop.f32.mrf.mxu0
    %v1461 = vadd.f32 0.0, %v1460
    %v1462 = vpop.f32.mrf.mxu0
    %1463 = vmatprep.mubr.bf16.mxu0 0
    %1464 = vmatmul.mubr.bf16.gmra.mxu0 %v1172
    %v1465 = vpop.f32.mrf.mxu0
    %v1466 = vadd.f32 0.0, %v1465
    %v1467 = vpop.f32.mrf.mxu0
    %v1468 = vpop.f32.mrf.mxu0
    %v1469 = vadd.f32 0.0, %v1468
    %v1470 = vpop.f32.mrf.mxu0
    %1471 = vmatprep.mubr.bf16.mxu0 0
    %1472 = vmatmul.mubr.bf16.gmra.mxu0 %v1173
    %v1473 = vpop.f32.mrf.mxu0
    %v1474 = vadd.f32 0.0, %v1473
    %v1475 = vpop.f32.mrf.mxu0
    %v1476 = vpop.f32.mrf.mxu0
    %v1477 = vadd.f32 0.0, %v1476
    %v1478 = vpop.f32.mrf.mxu0
    %1479 = vmatprep.mubr.bf16.mxu0 0
    %1480 = vmatmul.mubr.bf16.gmra.mxu0 %v1174
    %v1481 = vpop.f32.mrf.mxu0
    %v1482 = vadd.f32 0.0, %v1481
    %v1483 = vpop.f32.mrf.mxu0
    %v1484 = vpop.f32.mrf.mxu0
    %v1485 = vadd.f32 0.0, %v1484
    %v1486 = vpop.f32.mrf.mxu0
    %1487 = vmatprep.mubr.bf16.mxu0 0
    %1488 = vmatmul.mubr.bf16.gmra.mxu0 %v1175
    %v1489 = vpop.f32.mrf.mxu0
    %v1490 = vadd.f32 0.0, %v1489
    %v1491 = vpop.f32.mrf.mxu0
    %v1492 = vpop.f32.mrf.mxu0
    %v1493 = vadd.f32 0.0, %v1492
    %v1494 = vpop.f32.mrf.mxu0
    %1495 = vmatprep.mubr.bf16.mxu0 0
    %1496 = vmatmul.mubr.bf16.gmra.mxu0 %v1176
    %v1497 = vpop.f32.mrf.mxu0
    %v1498 = vadd.f32 0.0, %v1497
    %v1499 = vpop.f32.mrf.mxu0
    %v1500 = vpop.f32.mrf.mxu0
    %v1501 = vadd.f32 0.0, %v1500
    %v1502 = vpop.f32.mrf.mxu0
    %1503 = vmatprep.mubr.bf16.mxu0 0
    %1504 = vmatmul.mubr.bf16.gmra.mxu0 %v1177
    %v1505 = vpop.f32.mrf.mxu0
    %v1506 = vadd.f32 0.0, %v1505
    %v1507 = vpop.f32.mrf.mxu0
    %v1508 = vpop.f32.mrf.mxu0
    %v1509 = vadd.f32 0.0, %v1508
    %v1510 = vpop.f32.mrf.mxu0
    %1511 = vmatprep.mubr.bf16.mxu0 0
    %1512 = vmatmul.mubr.bf16.gmra.mxu0 %v1178
    %v1513 = vpop.f32.mrf.mxu0
    %v1514 = vadd.f32 0.0, %v1513
    %v1515 = vpop.f32.mrf.mxu0
    %v1516 = vpop.f32.mrf.mxu0
    %v1517 = vadd.f32 0.0, %v1516
    %v1518 = vpop.f32.mrf.mxu0
    %1519 = vmatprep.mubr.bf16.mxu0 0
    %1520 = vmatmul.mubr.bf16.gmra.mxu0 %v1179
    %v1521 = vpop.f32.mrf.mxu0
    %v1522 = vadd.f32 0.0, %v1521
    %v1523 = vpop.f32.mrf.mxu0
    %v1524 = vpop.f32.mrf.mxu0
    %v1525 = vadd.f32 0.0, %v1524
    %v1526 = vpop.f32.mrf.mxu0
    %1527 = vmatprep.mubr.bf16.mxu0 0
    %1528 = vmatmul.mubr.bf16.gmra.mxu0 %v1180
    %v1529 = vpop.f32.mrf.mxu0
    %v1530 = vadd.f32 0.0, %v1529
    %v1531 = vpop.f32.mrf.mxu0
    %v1532 = vpop.f32.mrf.mxu0
    %v1533 = vadd.f32 0.0, %v1532
    %v1534 = vpop.f32.mrf.mxu0
    %1535 = vmatprep.mubr.bf16.mxu0 0
    %1536 = vmatmul.mubr.bf16.gmra.mxu0 %v1181
    %v1537 = vpop.f32.mrf.mxu0
    %v1538 = vadd.f32 0.0, %v1537
    %v1539 = vpop.f32.mrf.mxu0
    %v1540 = vpop.f32.mrf.mxu0
    %v1541 = vadd.f32 0.0, %v1540
    %v1542 = vpop.f32.mrf.mxu0
    %1543 = vmatprep.mubr.bf16.mxu0 0
    %1544 = vmatmul.mubr.bf16.gmra.mxu0 %v1182
    %v1545 = vpop.f32.mrf.mxu0
    %v1546 = vadd.f32 0.0, %v1545
    %v1547 = vpop.f32.mrf.mxu0
    %v1548 = vpop.f32.mrf.mxu0
    %v1549 = vadd.f32 0.0, %v1548
    %v1550 = vpop.f32.mrf.mxu0
    %1551 = vdwg.mxu0
    %vm1552 = vcmask 64512
    %1553 = vst.msk [vmem:[%s12] sm:$0xff] %vm1552, %v1426
    %1554 = vst.msk [vmem:[%s12 + $0x8] sm:$0xff] %vm1552, %v1429
    %1555 = vst.msk [vmem:[%s12 + $0x10] sm:$0xff] %vm1552, %v1434
    %1556 = vst.msk [vmem:[%s12 + $0x18] sm:$0xff] %vm1552, %v1437
    %1557 = vst.msk [vmem:[%s12 + $0x20] sm:$0xff] %vm1552, %v1442
    %1558 = vst.msk [vmem:[%s12 + $0x28] sm:$0xff] %vm1552, %v1445
    %1559 = vst.msk [vmem:[%s12 + $0x30] sm:$0xff] %vm1552, %v1450
    %1560 = vst.msk [vmem:[%s12 + $0x38] sm:$0xff] %vm1552, %v1453
    %1561 = vst.msk [vmem:[%s12 + $0x40] sm:$0xff] %vm1552, %v1458
    %1562 = vst.msk [vmem:[%s12 + $0x48] sm:$0xff] %vm1552, %v1461
    %1563 = vst.msk [vmem:[%s12 + $0x50] sm:$0xff] %vm1552, %v1466
    %1564 = vst.msk [vmem:[%s12 + $0x58] sm:$0xff] %vm1552, %v1469
    %1565 = vst.msk [vmem:[%s12 + $0x60] sm:$0xff] %vm1552, %v1474
    %1566 = vst.msk [vmem:[%s12 + $0x68] sm:$0xff] %vm1552, %v1477
    %1567 = vst.msk [vmem:[%s12 + $0x70] sm:$0xff] %vm1552, %v1482
    %1568 = vst.msk [vmem:[%s12 + $0x78] sm:$0xff] %vm1552, %v1485
    %1569 = vst.msk [vmem:[%s12 + $0x80] sm:$0xff] %vm1552, %v1490
    %1570 = vst.msk [vmem:[%s12 + $0x88] sm:$0xff] %vm1552, %v1493
    %1571 = vst.msk [vmem:[%s12 + $0x90] sm:$0xff] %vm1552, %v1498
    %1572 = vst.msk [vmem:[%s12 + $0x98] sm:$0xff] %vm1552, %v1501
    %1573 = vst.msk [vmem:[%s12 + $0xa0] sm:$0xff] %vm1552, %v1506
    %1574 = vst.msk [vmem:[%s12 + $0xa8] sm:$0xff] %vm1552, %v1509
    %1575 = vst.msk [vmem:[%s12 + $0xb0] sm:$0xff] %vm1552, %v1514
    %1576 = vst.msk [vmem:[%s12 + $0xb8] sm:$0xff] %vm1552, %v1517
    %1577 = vst.msk [vmem:[%s12 + $0xc0] sm:$0xff] %vm1552, %v1522
    %1578 = vst.msk [vmem:[%s12 + $0xc8] sm:$0xff] %vm1552, %v1525
    %1579 = vst.msk [vmem:[%s12 + $0xd0] sm:$0xff] %vm1552, %v1530
    %1580 = vst.msk [vmem:[%s12 + $0xd8] sm:$0xff] %vm1552, %v1533
    %1581 = vst.msk [vmem:[%s12 + $0xe0] sm:$0xff] %vm1552, %v1538
    %1582 = vst.msk [vmem:[%s12 + $0xe8] sm:$0xff] %vm1552, %v1541
    %1583 = vst.msk [vmem:[%s12 + $0xf0] sm:$0xff] %vm1552, %v1546
    %1584 = vst.msk [vmem:[%s12 + $0xf8] sm:$0xff] %vm1552, %v1549
    %v1585 = vld [vmem:[%s8] sm:$0xff]
    %v1586 = vld [vmem:[%s8 + $0x8] sm:$0xff]
    %v1587 = vld [vmem:[%s8 + $0x10] sm:$0xff]
    %v1588 = vld [vmem:[%s8 + $0x18] sm:$0xff]
    %v1589 = vld [vmem:[%s8 + $0x20] sm:$0xff]
    %v1590 = vld [vmem:[%s8 + $0x28] sm:$0xff]
    %v1591 = vld [vmem:[%s8 + $0x30] sm:$0xff]
    %v1592 = vld [vmem:[%s8 + $0x38] sm:$0xff]
    %v1593 = vld [vmem:[%s8 + $0x40] sm:$0xff]
    %v1594 = vld [vmem:[%s8 + $0x48] sm:$0xff]
    %v1595 = vld [vmem:[%s8 + $0x50] sm:$0xff]
    %v1596 = vld [vmem:[%s8 + $0x58] sm:$0xff]
    %v1597 = vld [vmem:[%s8 + $0x60] sm:$0xff]
    %v1598 = vld [vmem:[%s8 + $0x68] sm:$0xff]
    %v1599 = vld [vmem:[%s8 + $0x70] sm:$0xff]
    %v1600 = vld [vmem:[%s8 + $0x78] sm:$0xff]
    %v1617 = vunpack.c.l.b16 %v1585
    %v1618 = vunpack.c.h.b16 %v1585
    %v1619 = vunpack.c.l.b16 %v1586
    %v1620 = vunpack.c.h.b16 %v1586
    %v1621 = vunpack.c.l.b16 %v1587
    %v1622 = vunpack.c.h.b16 %v1587
    %v1623 = vunpack.c.l.b16 %v1588
    %v1624 = vunpack.c.h.b16 %v1588
    %v1625 = vunpack.c.l.b16 %v1589
    %v1626 = vunpack.c.h.b16 %v1589
    %v1627 = vunpack.c.l.b16 %v1590
    %v1628 = vunpack.c.h.b16 %v1590
    %v1629 = vunpack.c.l.b16 %v1591
    %v1630 = vunpack.c.h.b16 %v1591
    %v1631 = vunpack.c.l.b16 %v1592
    %v1632 = vunpack.c.h.b16 %v1592
    %v1633 = vunpack.c.l.b16 %v1593
    %v1634 = vunpack.c.h.b16 %v1593
    %v1635 = vunpack.c.l.b16 %v1594
    %v1636 = vunpack.c.h.b16 %v1594
    %v1637 = vunpack.c.l.b16 %v1595
    %v1638 = vunpack.c.h.b16 %v1595
    %v1639 = vunpack.c.l.b16 %v1596
    %v1640 = vunpack.c.h.b16 %v1596
    %v1641 = vunpack.c.l.b16 %v1597
    %v1642 = vunpack.c.h.b16 %v1597
    %v1643 = vunpack.c.l.b16 %v1598
    %v1644 = vunpack.c.h.b16 %v1598
    %v1645 = vunpack.c.l.b16 %v1599
    %v1646 = vunpack.c.h.b16 %v1599
    %v1647 = vunpack.c.l.b16 %v1600
    %v1648 = vunpack.c.h.b16 %v1600
    %v1649 = vpack.c.b16 %v1619, %v1617
    %v1650 = vpack.c.b16 %v1620, %v1618
    %v1651 = vpack.c.b16 %v1623, %v1621
    %v1652 = vpack.c.b16 %v1624, %v1622
    %v1653 = vpack.c.b16 %v1627, %v1625
    %v1654 = vpack.c.b16 %v1628, %v1626
    %v1655 = vpack.c.b16 %v1631, %v1629
    %v1656 = vpack.c.b16 %v1632, %v1630
    %v1657 = vpack.c.b16 %v1635, %v1633
    %v1658 = vpack.c.b16 %v1636, %v1634
    %v1659 = vpack.c.b16 %v1639, %v1637
    %v1660 = vpack.c.b16 %v1640, %v1638
    %v1661 = vpack.c.b16 %v1643, %v1641
    %v1662 = vpack.c.b16 %v1644, %v1642
    %v1663 = vpack.c.b16 %v1647, %v1645
    %v1664 = vpack.c.b16 %v1648, %v1646
    %1681 = vmatprep.subr.bf16.mxu0 %v1664
    %1682 = vmatpush1.bf16.msra.mxu0 %v1663
    %1683 = vmatprep.subr.bf16.mxu0 %v1662
    %1684 = vmatpush1.bf16.msra.mxu0 %v1661
    %1685 = vmatprep.subr.bf16.mxu0 %v1660
    %1686 = vmatpush1.bf16.msra.mxu0 %v1659
    %1687 = vmatprep.subr.bf16.mxu0 %v1658
    %1688 = vmatpush1.bf16.msra.mxu0 %v1657
    %1689 = vmatprep.subr.bf16.mxu0 %v1656
    %1690 = vmatpush1.bf16.msra.mxu0 %v1655
    %1691 = vmatprep.subr.bf16.mxu0 %v1654
    %1692 = vmatpush1.bf16.msra.mxu0 %v1653
    %1693 = vmatprep.subr.bf16.mxu0 %v1652
    %1694 = vmatpush1.bf16.msra.mxu0 %v1651
    %1695 = vmatprep.subr.bf16.mxu0 %v1650
    %1696 = vmatpush1.bf16.msra.mxu0 %v1649
    %1697 = vmatprep.subr.bf16.mxu0 0
    %1698 = vmatpush2.bf16.msra.mxu0 0
    %1699 = vmatprep.subr.bf16.mxu0 0
    %1700 = vmatpush2.bf16.msra.mxu0 0
    %1701 = vmatprep.subr.bf16.mxu0 0
    %1702 = vmatpush2.bf16.msra.mxu0 0
    %1703 = vmatprep.subr.bf16.mxu0 0
    %1704 = vmatpush2.bf16.msra.mxu0 0
    %1705 = vmatprep.subr.bf16.mxu0 0
    %1706 = vmatpush2.bf16.msra.mxu0 0
    %1707 = vmatprep.subr.bf16.mxu0 0
    %1708 = vmatpush2.bf16.msra.mxu0 0
    %1709 = vmatprep.subr.bf16.mxu0 0
    %1710 = vmatpush2.bf16.msra.mxu0 0
    %1711 = vmatprep.subr.bf16.mxu0 0
    %1712 = vmatpush2.bf16.msra.mxu0 0
    %1713 = vmatprep.mubr.bf16.mxu0 0
    %1714 = vmatmul.mubr.bf16.gmra.mxu0 %v1167
    %v1715 = vpop.f32.mrf.mxu0
    %v1716 = vadd.f32 0.0, %v1715
    %v1717 = vpop.f32.mrf.mxu0
    %v1718 = vadd.f32 0.0, %v1717
    %v1719 = vpop.f32.mrf.mxu0
    %v1720 = vadd.f32 0.0, %v1719
    %v1721 = vpop.f32.mrf.mxu0
    %v1722 = vadd.f32 0.0, %v1721
    %1723 = vmatprep.mubr.bf16.mxu0 0
    %1724 = vmatmul.mubr.bf16.gmra.mxu0 %v1168
    %v1725 = vpop.f32.mrf.mxu0
    %v1726 = vadd.f32 0.0, %v1725
    %v1727 = vpop.f32.mrf.mxu0
    %v1728 = vadd.f32 0.0, %v1727
    %v1729 = vpop.f32.mrf.mxu0
    %v1730 = vadd.f32 0.0, %v1729
    %v1731 = vpop.f32.mrf.mxu0
    %v1732 = vadd.f32 0.0, %v1731
    %1733 = vmatprep.mubr.bf16.mxu0 0
    %1734 = vmatmul.mubr.bf16.gmra.mxu0 %v1169
    %v1735 = vpop.f32.mrf.mxu0
    %v1736 = vadd.f32 0.0, %v1735
    %v1737 = vpop.f32.mrf.mxu0
    %v1738 = vadd.f32 0.0, %v1737
    %v1739 = vpop.f32.mrf.mxu0
    %v1740 = vadd.f32 0.0, %v1739
    %v1741 = vpop.f32.mrf.mxu0
    %v1742 = vadd.f32 0.0, %v1741
    %1743 = vmatprep.mubr.bf16.mxu0 0
    %1744 = vmatmul.mubr.bf16.gmra.mxu0 %v1170
    %v1745 = vpop.f32.mrf.mxu0
    %v1746 = vadd.f32 0.0, %v1745
    %v1747 = vpop.f32.mrf.mxu0
    %v1748 = vadd.f32 0.0, %v1747
    %v1749 = vpop.f32.mrf.mxu0
    %v1750 = vadd.f32 0.0, %v1749
    %v1751 = vpop.f32.mrf.mxu0
    %v1752 = vadd.f32 0.0, %v1751
    %1753 = vmatprep.mubr.bf16.mxu0 0
    %1754 = vmatmul.mubr.bf16.gmra.mxu0 %v1171
    %v1755 = vpop.f32.mrf.mxu0
    %v1756 = vadd.f32 0.0, %v1755
    %v1757 = vpop.f32.mrf.mxu0
    %v1758 = vadd.f32 0.0, %v1757
    %v1759 = vpop.f32.mrf.mxu0
    %v1760 = vadd.f32 0.0, %v1759
    %v1761 = vpop.f32.mrf.mxu0
    %v1762 = vadd.f32 0.0, %v1761
    %1763 = vmatprep.mubr.bf16.mxu0 0
    %1764 = vmatmul.mubr.bf16.gmra.mxu0 %v1172
    %v1765 = vpop.f32.mrf.mxu0
    %v1766 = vadd.f32 0.0, %v1765
    %v1767 = vpop.f32.mrf.mxu0
    %v1768 = vadd.f32 0.0, %v1767
    %v1769 = vpop.f32.mrf.mxu0
    %v1770 = vadd.f32 0.0, %v1769
    %v1771 = vpop.f32.mrf.mxu0
    %v1772 = vadd.f32 0.0, %v1771
    %1773 = vmatprep.mubr.bf16.mxu0 0
    %1774 = vmatmul.mubr.bf16.gmra.mxu0 %v1173
    %v1775 = vpop.f32.mrf.mxu0
    %v1776 = vadd.f32 0.0, %v1775
    %v1777 = vpop.f32.mrf.mxu0
    %v1778 = vadd.f32 0.0, %v1777
    %v1779 = vpop.f32.mrf.mxu0
    %v1780 = vadd.f32 0.0, %v1779
    %v1781 = vpop.f32.mrf.mxu0
    %v1782 = vadd.f32 0.0, %v1781
    %1783 = vmatprep.mubr.bf16.mxu0 0
    %1784 = vmatmul.mubr.bf16.gmra.mxu0 %v1174
    %v1785 = vpop.f32.mrf.mxu0
    %v1786 = vadd.f32 0.0, %v1785
    %v1787 = vpop.f32.mrf.mxu0
    %v1788 = vadd.f32 0.0, %v1787
    %v1789 = vpop.f32.mrf.mxu0
    %v1790 = vadd.f32 0.0, %v1789
    %v1791 = vpop.f32.mrf.mxu0
    %v1792 = vadd.f32 0.0, %v1791
    %1793 = vmatprep.mubr.bf16.mxu0 0
    %1794 = vmatmul.mubr.bf16.gmra.mxu0 %v1175
    %v1795 = vpop.f32.mrf.mxu0
    %v1796 = vadd.f32 0.0, %v1795
    %v1797 = vpop.f32.mrf.mxu0
    %v1798 = vadd.f32 0.0, %v1797
    %v1799 = vpop.f32.mrf.mxu0
    %v1800 = vadd.f32 0.0, %v1799
    %v1801 = vpop.f32.mrf.mxu0
    %v1802 = vadd.f32 0.0, %v1801
    %1803 = vmatprep.mubr.bf16.mxu0 0
    %1804 = vmatmul.mubr.bf16.gmra.mxu0 %v1176
    %v1805 = vpop.f32.mrf.mxu0
    %v1806 = vadd.f32 0.0, %v1805
    %v1807 = vpop.f32.mrf.mxu0
    %v1808 = vadd.f32 0.0, %v1807
    %v1809 = vpop.f32.mrf.mxu0
    %v1810 = vadd.f32 0.0, %v1809
    %v1811 = vpop.f32.mrf.mxu0
    %v1812 = vadd.f32 0.0, %v1811
    %1813 = vmatprep.mubr.bf16.mxu0 0
    %1814 = vmatmul.mubr.bf16.gmra.mxu0 %v1177
    %v1815 = vpop.f32.mrf.mxu0
    %v1816 = vadd.f32 0.0, %v1815
    %v1817 = vpop.f32.mrf.mxu0
    %v1818 = vadd.f32 0.0, %v1817
    %v1819 = vpop.f32.mrf.mxu0
    %v1820 = vadd.f32 0.0, %v1819
    %v1821 = vpop.f32.mrf.mxu0
    %v1822 = vadd.f32 0.0, %v1821
    %1823 = vmatprep.mubr.bf16.mxu0 0
    %1824 = vmatmul.mubr.bf16.gmra.mxu0 %v1178
    %v1825 = vpop.f32.mrf.mxu0
    %v1826 = vadd.f32 0.0, %v1825
    %v1827 = vpop.f32.mrf.mxu0
    %v1828 = vadd.f32 0.0, %v1827
    %v1829 = vpop.f32.mrf.mxu0
    %v1830 = vadd.f32 0.0, %v1829
    %v1831 = vpop.f32.mrf.mxu0
    %v1832 = vadd.f32 0.0, %v1831
    %1833 = vmatprep.mubr.bf16.mxu0 0
    %1834 = vmatmul.mubr.bf16.gmra.mxu0 %v1179
    %v1835 = vpop.f32.mrf.mxu0
    %v1836 = vadd.f32 0.0, %v1835
    %v1837 = vpop.f32.mrf.mxu0
    %v1838 = vadd.f32 0.0, %v1837
    %v1839 = vpop.f32.mrf.mxu0
    %v1840 = vadd.f32 0.0, %v1839
    %v1841 = vpop.f32.mrf.mxu0
    %v1842 = vadd.f32 0.0, %v1841
    %1843 = vmatprep.mubr.bf16.mxu0 0
    %1844 = vmatmul.mubr.bf16.gmra.mxu0 %v1180
    %v1845 = vpop.f32.mrf.mxu0
    %v1846 = vadd.f32 0.0, %v1845
    %v1847 = vpop.f32.mrf.mxu0
    %v1848 = vadd.f32 0.0, %v1847
    %v1849 = vpop.f32.mrf.mxu0
    %v1850 = vadd.f32 0.0, %v1849
    %v1851 = vpop.f32.mrf.mxu0
    %v1852 = vadd.f32 0.0, %v1851
    %1853 = vmatprep.mubr.bf16.mxu0 0
    %1854 = vmatmul.mubr.bf16.gmra.mxu0 %v1181
    %v1855 = vpop.f32.mrf.mxu0
    %v1856 = vadd.f32 0.0, %v1855
    %v1857 = vpop.f32.mrf.mxu0
    %v1858 = vadd.f32 0.0, %v1857
    %v1859 = vpop.f32.mrf.mxu0
    %v1860 = vadd.f32 0.0, %v1859
    %v1861 = vpop.f32.mrf.mxu0
    %v1862 = vadd.f32 0.0, %v1861
    %1863 = vmatprep.mubr.bf16.mxu0 0
    %1864 = vmatmul.mubr.bf16.gmra.mxu0 %v1182
    %v1865 = vpop.f32.mrf.mxu0
    %v1866 = vadd.f32 0.0, %v1865
    %v1867 = vpop.f32.mrf.mxu0
    %v1868 = vadd.f32 0.0, %v1867
    %v1869 = vpop.f32.mrf.mxu0
    %v1870 = vadd.f32 0.0, %v1869
    %v1871 = vpop.f32.mrf.mxu0
    %v1872 = vadd.f32 0.0, %v1871
    %1873 = vdwg.mxu0
    %v1874 = vxor.u32 %v1716, 2147483648
    %v1875 = vxor.u32 %v1718, 2147483648
    %v1876 = vxor.u32 %v1720, 2147483648
    %v1877 = vxor.u32 %v1722, 2147483648
    %v1878 = vxor.u32 %v1726, 2147483648
    %v1879 = vxor.u32 %v1728, 2147483648
    %v1880 = vxor.u32 %v1730, 2147483648
    %v1881 = vxor.u32 %v1732, 2147483648
    %v1882 = vxor.u32 %v1736, 2147483648
    %v1883 = vxor.u32 %v1738, 2147483648
    %v1884 = vxor.u32 %v1740, 2147483648
    %v1885 = vxor.u32 %v1742, 2147483648
    %v1886 = vxor.u32 %v1746, 2147483648
    %v1887 = vxor.u32 %v1748, 2147483648
    %v1888 = vxor.u32 %v1750, 2147483648
    %v1889 = vxor.u32 %v1752, 2147483648
    %v1890 = vxor.u32 %v1756, 2147483648
    %v1891 = vxor.u32 %v1758, 2147483648
    %v1892 = vxor.u32 %v1760, 2147483648
    %v1893 = vxor.u32 %v1762, 2147483648
    %v1894 = vxor.u32 %v1766, 2147483648
    %v1895 = vxor.u32 %v1768, 2147483648
    %v1896 = vxor.u32 %v1770, 2147483648
    %v1897 = vxor.u32 %v1772, 2147483648
    %v1898 = vxor.u32 %v1776, 2147483648
    %v1899 = vxor.u32 %v1778, 2147483648
    %v1900 = vxor.u32 %v1780, 2147483648
    %v1901 = vxor.u32 %v1782, 2147483648
    %v1902 = vxor.u32 %v1786, 2147483648
    %v1903 = vxor.u32 %v1788, 2147483648
    %v1904 = vxor.u32 %v1790, 2147483648
    %v1905 = vxor.u32 %v1792, 2147483648
    %v1906 = vxor.u32 %v1796, 2147483648
    %v1907 = vxor.u32 %v1798, 2147483648
    %v1908 = vxor.u32 %v1800, 2147483648
    %v1909 = vxor.u32 %v1802, 2147483648
    %v1910 = vxor.u32 %v1806, 2147483648
    %v1911 = vxor.u32 %v1808, 2147483648
    %v1912 = vxor.u32 %v1810, 2147483648
    %v1913 = vxor.u32 %v1812, 2147483648
    %v1914 = vxor.u32 %v1816, 2147483648
    %v1915 = vxor.u32 %v1818, 2147483648
    %v1916 = vxor.u32 %v1820, 2147483648
    %v1917 = vxor.u32 %v1822, 2147483648
    %v1918 = vxor.u32 %v1826, 2147483648
    %v1919 = vxor.u32 %v1828, 2147483648
    %v1920 = vxor.u32 %v1830, 2147483648
    %v1921 = vxor.u32 %v1832, 2147483648
    %v1922 = vxor.u32 %v1836, 2147483648
    %v1923 = vxor.u32 %v1838, 2147483648
    %v1924 = vxor.u32 %v1840, 2147483648
    %v1925 = vxor.u32 %v1842, 2147483648
    %v1926 = vxor.u32 %v1846, 2147483648
    %v1927 = vxor.u32 %v1848, 2147483648
    %v1928 = vxor.u32 %v1850, 2147483648
    %v1929 = vxor.u32 %v1852, 2147483648
    %v1930 = vxor.u32 %v1856, 2147483648
    %v1931 = vxor.u32 %v1858, 2147483648
    %v1932 = vxor.u32 %v1860, 2147483648
    %v1933 = vxor.u32 %v1862, 2147483648
    %v1934 = vxor.u32 %v1866, 2147483648
    %v1935 = vxor.u32 %v1868, 2147483648
    %v1936 = vxor.u32 %v1870, 2147483648
    %v1937 = vxor.u32 %v1872, 2147483648
    %v1938 = vmul.f32 %v1874, 1.442695
    %v1939 = vpow.pop %v1938
    %v1940 = vmul.f32 %v1875, 1.442695
    %v1941 = vpow.pop %v1940
    %v1942 = vmul.f32 %v1876, 1.442695
    %v1943 = vpow.pop %v1942
    %v1944 = vmul.f32 %v1877, 1.442695
    %v1945 = vpow.pop %v1944
    %v1946 = vmul.f32 %v1878, 1.442695
    %v1947 = vpow.pop %v1946
    %v1948 = vmul.f32 %v1879, 1.442695
    %v1949 = vpow.pop %v1948
    %v1950 = vmul.f32 %v1880, 1.442695
    %v1951 = vpow.pop %v1950
    %v1952 = vmul.f32 %v1881, 1.442695
    %v1953 = vpow.pop %v1952
    %v1954 = vmul.f32 %v1882, 1.442695
    %v1955 = vpow.pop %v1954
    %v1956 = vmul.f32 %v1883, 1.442695
    %v1957 = vpow.pop %v1956
    %v1958 = vmul.f32 %v1884, 1.442695
    %v1959 = vpow.pop %v1958
    %v1960 = vmul.f32 %v1885, 1.442695
    %v1961 = vpow.pop %v1960
    %v1962 = vmul.f32 %v1886, 1.442695
    %v1963 = vpow.pop %v1962
    %v1964 = vmul.f32 %v1887, 1.442695
    %v1965 = vpow.pop %v1964
    %v1966 = vmul.f32 %v1888, 1.442695
    %v1967 = vpow.pop %v1966
    %v1968 = vmul.f32 %v1889, 1.442695
    %v1969 = vpow.pop %v1968
    %v1970 = vmul.f32 %v1890, 1.442695
    %v1971 = vpow.pop %v1970
    %v1972 = vmul.f32 %v1891, 1.442695
    %v1973 = vpow.pop %v1972
    %v1974 = vmul.f32 %v1892, 1.442695
    %v1975 = vpow.pop %v1974
    %v1976 = vmul.f32 %v1893, 1.442695
    %v1977 = vpow.pop %v1976
    %v1978 = vmul.f32 %v1894, 1.442695
    %v1979 = vpow.pop %v1978
    %v1980 = vmul.f32 %v1895, 1.442695
    %v1981 = vpow.pop %v1980
    %v1982 = vmul.f32 %v1896, 1.442695
    %v1983 = vpow.pop %v1982
    %v1984 = vmul.f32 %v1897, 1.442695
    %v1985 = vpow.pop %v1984
    %v1986 = vmul.f32 %v1898, 1.442695
    %v1987 = vpow.pop %v1986
    %v1988 = vmul.f32 %v1899, 1.442695
    %v1989 = vpow.pop %v1988
    %v1990 = vmul.f32 %v1900, 1.442695
    %v1991 = vpow.pop %v1990
    %v1992 = vmul.f32 %v1901, 1.442695
    %v1993 = vpow.pop %v1992
    %v1994 = vmul.f32 %v1902, 1.442695
    %v1995 = vpow.pop %v1994
    %v1996 = vmul.f32 %v1903, 1.442695
    %v1997 = vpow.pop %v1996
    %v1998 = vmul.f32 %v1904, 1.442695
    %v1999 = vpow.pop %v1998
    %v2000 = vmul.f32 %v1905, 1.442695
    %v2001 = vpow.pop %v2000
    %v2002 = vmul.f32 %v1906, 1.442695
    %v2003 = vpow.pop %v2002
    %v2004 = vmul.f32 %v1907, 1.442695
    %v2005 = vpow.pop %v2004
    %v2006 = vmul.f32 %v1908, 1.442695
    %v2007 = vpow.pop %v2006
    %v2008 = vmul.f32 %v1909, 1.442695
    %v2009 = vpow.pop %v2008
    %v2010 = vmul.f32 %v1910, 1.442695
    %v2011 = vpow.pop %v2010
    %v2012 = vmul.f32 %v1911, 1.442695
    %v2013 = vpow.pop %v2012
    %v2014 = vmul.f32 %v1912, 1.442695
    %v2015 = vpow.pop %v2014
    %v2016 = vmul.f32 %v1913, 1.442695
    %v2017 = vpow.pop %v2016
    %v2018 = vmul.f32 %v1914, 1.442695
    %v2019 = vpow.pop %v2018
    %v2020 = vmul.f32 %v1915, 1.442695
    %v2021 = vpow.pop %v2020
    %v2022 = vmul.f32 %v1916, 1.442695
    %v2023 = vpow.pop %v2022
    %v2024 = vmul.f32 %v1917, 1.442695
    %v2025 = vpow.pop %v2024
    %v2026 = vmul.f32 %v1918, 1.442695
    %v2027 = vpow.pop %v2026
    %v2028 = vmul.f32 %v1919, 1.442695
    %v2029 = vpow.pop %v2028
    %v2030 = vmul.f32 %v1920, 1.442695
    %v2031 = vpow.pop %v2030
    %v2032 = vmul.f32 %v1921, 1.442695
    %v2033 = vpow.pop %v2032
    %v2034 = vmul.f32 %v1922, 1.442695
    %v2035 = vpow.pop %v2034
    %v2036 = vmul.f32 %v1923, 1.442695
    %v2037 = vpow.pop %v2036
    %v2038 = vmul.f32 %v1924, 1.442695
    %v2039 = vpow.pop %v2038
    %v2040 = vmul.f32 %v1925, 1.442695
    %v2041 = vpow.pop %v2040
    %v2042 = vmul.f32 %v1926, 1.442695
    %v2043 = vpow.pop %v2042
    %v2044 = vmul.f32 %v1927, 1.442695
    %v2045 = vpow.pop %v2044
    %v2046 = vmul.f32 %v1928, 1.442695
    %v2047 = vpow.pop %v2046
    %v2048 = vmul.f32 %v1929, 1.442695
    %v2049 = vpow.pop %v2048
    %v2050 = vmul.f32 %v1930, 1.442695
    %v2051 = vpow.pop %v2050
    %v2052 = vmul.f32 %v1931, 1.442695
    %v2053 = vpow.pop %v2052
    %v2054 = vmul.f32 %v1932, 1.442695
    %v2055 = vpow.pop %v2054
    %v2056 = vmul.f32 %v1933, 1.442695
    %v2057 = vpow.pop %v2056
    %v2058 = vmul.f32 %v1934, 1.442695
    %v2059 = vpow.pop %v2058
    %v2060 = vmul.f32 %v1935, 1.442695
    %v2061 = vpow.pop %v2060
    %v2062 = vmul.f32 %v1936, 1.442695
    %v2063 = vpow.pop %v2062
    %v2064 = vmul.f32 %v1937, 1.442695
    %v2065 = vpow.pop %v2064
    %v2066 = vadd.f32 %v1939, 1.0
    %v2067 = vadd.f32 %v1941, 1.0
    %v2068 = vadd.f32 %v1943, 1.0
    %v2069 = vadd.f32 %v1945, 1.0
    %v2070 = vadd.f32 %v1947, 1.0
    %v2071 = vadd.f32 %v1949, 1.0
    %v2072 = vadd.f32 %v1951, 1.0
    %v2073 = vadd.f32 %v1953, 1.0
    %v2074 = vadd.f32 %v1955, 1.0
    %v2075 = vadd.f32 %v1957, 1.0
    %v2076 = vadd.f32 %v1959, 1.0
    %v2077 = vadd.f32 %v1961, 1.0
    %v2078 = vadd.f32 %v1963, 1.0
    %v2079 = vadd.f32 %v1965, 1.0
    %v2080 = vadd.f32 %v1967, 1.0
    %v2081 = vadd.f32 %v1969, 1.0
    %v2082 = vadd.f32 %v1971, 1.0
    %v2083 = vadd.f32 %v1973, 1.0
    %v2084 = vadd.f32 %v1975, 1.0
    %v2085 = vadd.f32 %v1977, 1.0
    %v2086 = vadd.f32 %v1979, 1.0
    %v2087 = vadd.f32 %v1981, 1.0
    %v2088 = vadd.f32 %v1983, 1.0
    %v2089 = vadd.f32 %v1985, 1.0
    %v2090 = vadd.f32 %v1987, 1.0
    %v2091 = vadd.f32 %v1989, 1.0
    %v2092 = vadd.f32 %v1991, 1.0
    %v2093 = vadd.f32 %v1993, 1.0
    %v2094 = vadd.f32 %v1995, 1.0
    %v2095 = vadd.f32 %v1997, 1.0
    %v2096 = vadd.f32 %v1999, 1.0
    %v2097 = vadd.f32 %v2001, 1.0
    %v2098 = vadd.f32 %v2003, 1.0
    %v2099 = vadd.f32 %v2005, 1.0
    %v2100 = vadd.f32 %v2007, 1.0
    %v2101 = vadd.f32 %v2009, 1.0
    %v2102 = vadd.f32 %v2011, 1.0
    %v2103 = vadd.f32 %v2013, 1.0
    %v2104 = vadd.f32 %v2015, 1.0
    %v2105 = vadd.f32 %v2017, 1.0
    %v2106 = vadd.f32 %v2019, 1.0
    %v2107 = vadd.f32 %v2021, 1.0
    %v2108 = vadd.f32 %v2023, 1.0
    %v2109 = vadd.f32 %v2025, 1.0
    %v2110 = vadd.f32 %v2027, 1.0
    %v2111 = vadd.f32 %v2029, 1.0
    %v2112 = vadd.f32 %v2031, 1.0
    %v2113 = vadd.f32 %v2033, 1.0
    %v2114 = vadd.f32 %v2035, 1.0
    %v2115 = vadd.f32 %v2037, 1.0
    %v2116 = vadd.f32 %v2039, 1.0
    %v2117 = vadd.f32 %v2041, 1.0
    %v2118 = vadd.f32 %v2043, 1.0
    %v2119 = vadd.f32 %v2045, 1.0
    %v2120 = vadd.f32 %v2047, 1.0
    %v2121 = vadd.f32 %v2049, 1.0
    %v2122 = vadd.f32 %v2051, 1.0
    %v2123 = vadd.f32 %v2053, 1.0
    %v2124 = vadd.f32 %v2055, 1.0
    %v2125 = vadd.f32 %v2057, 1.0
    %v2126 = vadd.f32 %v2059, 1.0
    %v2127 = vadd.f32 %v2061, 1.0
    %v2128 = vadd.f32 %v2063, 1.0
    %v2129 = vadd.f32 %v2065, 1.0
    %v2130 = vrcp.pop %v2066
    %v2131 = vmul.f32 1.0, %v2130
    %v2132 = vrcp.pop %v2067
    %v2133 = vmul.f32 1.0, %v2132
    %v2134 = vrcp.pop %v2068
    %v2135 = vmul.f32 1.0, %v2134
    %v2136 = vrcp.pop %v2069
    %v2137 = vmul.f32 1.0, %v2136
    %v2138 = vrcp.pop %v2070
    %v2139 = vmul.f32 1.0, %v2138
    %v2140 = vrcp.pop %v2071
    %v2141 = vmul.f32 1.0, %v2140
    %v2142 = vrcp.pop %v2072
    %v2143 = vmul.f32 1.0, %v2142
    %v2144 = vrcp.pop %v2073
    %v2145 = vmul.f32 1.0, %v2144
    %v2146 = vrcp.pop %v2074
    %v2147 = vmul.f32 1.0, %v2146
    %v2148 = vrcp.pop %v2075
    %v2149 = vmul.f32 1.0, %v2148
    %v2150 = vrcp.pop %v2076
    %v2151 = vmul.f32 1.0, %v2150
    %v2152 = vrcp.pop %v2077
    %v2153 = vmul.f32 1.0, %v2152
    %v2154 = vrcp.pop %v2078
    %v2155 = vmul.f32 1.0, %v2154
    %v2156 = vrcp.pop %v2079
    %v2157 = vmul.f32 1.0, %v2156
    %v2158 = vrcp.pop %v2080
    %v2159 = vmul.f32 1.0, %v2158
    %v2160 = vrcp.pop %v2081
    %v2161 = vmul.f32 1.0, %v2160
    %v2162 = vrcp.pop %v2082
    %v2163 = vmul.f32 1.0, %v2162
    %v2164 = vrcp.pop %v2083
    %v2165 = vmul.f32 1.0, %v2164
    %v2166 = vrcp.pop %v2084
    %v2167 = vmul.f32 1.0, %v2166
    %v2168 = vrcp.pop %v2085
    %v2169 = vmul.f32 1.0, %v2168
    %v2170 = vrcp.pop %v2086
    %v2171 = vmul.f32 1.0, %v2170
    %v2172 = vrcp.pop %v2087
    %v2173 = vmul.f32 1.0, %v2172
    %v2174 = vrcp.pop %v2088
    %v2175 = vmul.f32 1.0, %v2174
    %v2176 = vrcp.pop %v2089
    %v2177 = vmul.f32 1.0, %v2176
    %v2178 = vrcp.pop %v2090
    %v2179 = vmul.f32 1.0, %v2178
    %v2180 = vrcp.pop %v2091
    %v2181 = vmul.f32 1.0, %v2180
    %v2182 = vrcp.pop %v2092
    %v2183 = vmul.f32 1.0, %v2182
    %v2184 = vrcp.pop %v2093
    %v2185 = vmul.f32 1.0, %v2184
    %v2186 = vrcp.pop %v2094
    %v2187 = vmul.f32 1.0, %v2186
    %v2188 = vrcp.pop %v2095
    %v2189 = vmul.f32 1.0, %v2188
    %v2190 = vrcp.pop %v2096
    %v2191 = vmul.f32 1.0, %v2190
    %v2192 = vrcp.pop %v2097
    %v2193 = vmul.f32 1.0, %v2192
    %v2194 = vrcp.pop %v2098
    %v2195 = vmul.f32 1.0, %v2194
    %v2196 = vrcp.pop %v2099
    %v2197 = vmul.f32 1.0, %v2196
    %v2198 = vrcp.pop %v2100
    %v2199 = vmul.f32 1.0, %v2198
    %v2200 = vrcp.pop %v2101
    %v2201 = vmul.f32 1.0, %v2200
    %v2202 = vrcp.pop %v2102
    %v2203 = vmul.f32 1.0, %v2202
    %v2204 = vrcp.pop %v2103
    %v2205 = vmul.f32 1.0, %v2204
    %v2206 = vrcp.pop %v2104
    %v2207 = vmul.f32 1.0, %v2206
    %v2208 = vrcp.pop %v2105
    %v2209 = vmul.f32 1.0, %v2208
    %v2210 = vrcp.pop %v2106
    %v2211 = vmul.f32 1.0, %v2210
    %v2212 = vrcp.pop %v2107
    %v2213 = vmul.f32 1.0, %v2212
    %v2214 = vrcp.pop %v2108
    %v2215 = vmul.f32 1.0, %v2214
    %v2216 = vrcp.pop %v2109
    %v2217 = vmul.f32 1.0, %v2216
    %v2218 = vrcp.pop %v2110
    %v2219 = vmul.f32 1.0, %v2218
    %v2220 = vrcp.pop %v2111
    %v2221 = vmul.f32 1.0, %v2220
    %v2222 = vrcp.pop %v2112
    %v2223 = vmul.f32 1.0, %v2222
    %v2224 = vrcp.pop %v2113
    %v2225 = vmul.f32 1.0, %v2224
    %v2226 = vrcp.pop %v2114
    %v2227 = vmul.f32 1.0, %v2226
    %v2228 = vrcp.pop %v2115
    %v2229 = vmul.f32 1.0, %v2228
    %v2230 = vrcp.pop %v2116
    %v2231 = vmul.f32 1.0, %v2230
    %v2232 = vrcp.pop %v2117
    %v2233 = vmul.f32 1.0, %v2232
    %v2234 = vrcp.pop %v2118
    %v2235 = vmul.f32 1.0, %v2234
    %v2236 = vrcp.pop %v2119
    %v2237 = vmul.f32 1.0, %v2236
    %v2238 = vrcp.pop %v2120
    %v2239 = vmul.f32 1.0, %v2238
    %v2240 = vrcp.pop %v2121
    %v2241 = vmul.f32 1.0, %v2240
    %v2242 = vrcp.pop %v2122
    %v2243 = vmul.f32 1.0, %v2242
    %v2244 = vrcp.pop %v2123
    %v2245 = vmul.f32 1.0, %v2244
    %v2246 = vrcp.pop %v2124
    %v2247 = vmul.f32 1.0, %v2246
    %v2248 = vrcp.pop %v2125
    %v2249 = vmul.f32 1.0, %v2248
    %v2250 = vrcp.pop %v2126
    %v2251 = vmul.f32 1.0, %v2250
    %v2252 = vrcp.pop %v2127
    %v2253 = vmul.f32 1.0, %v2252
    %v2254 = vrcp.pop %v2128
    %v2255 = vmul.f32 1.0, %v2254
    %v2256 = vrcp.pop %v2129
    %v2257 = vmul.f32 1.0, %v2256
    %v2258 = vmul.f32 %v1716, %v2131
    %v2259 = vmul.f32 %v1718, %v2133
    %v2260 = vmul.f32 %v1720, %v2135
    %v2261 = vmul.f32 %v1722, %v2137
    %v2262 = vmul.f32 %v1726, %v2139
    %v2263 = vmul.f32 %v1728, %v2141
    %v2264 = vmul.f32 %v1730, %v2143
    %v2265 = vmul.f32 %v1732, %v2145
    %v2266 = vmul.f32 %v1736, %v2147
    %v2267 = vmul.f32 %v1738, %v2149
    %v2268 = vmul.f32 %v1740, %v2151
    %v2269 = vmul.f32 %v1742, %v2153
    %v2270 = vmul.f32 %v1746, %v2155
    %v2271 = vmul.f32 %v1748, %v2157
    %v2272 = vmul.f32 %v1750, %v2159
    %v2273 = vmul.f32 %v1752, %v2161
    %v2274 = vmul.f32 %v1756, %v2163
    %v2275 = vmul.f32 %v1758, %v2165
    %v2276 = vmul.f32 %v1760, %v2167
    %v2277 = vmul.f32 %v1762, %v2169
    %v2278 = vmul.f32 %v1766, %v2171
    %v2279 = vmul.f32 %v1768, %v2173
    %v2280 = vmul.f32 %v1770, %v2175
    %v2281 = vmul.f32 %v1772, %v2177
    %v2282 = vmul.f32 %v1776, %v2179
    %v2283 = vmul.f32 %v1778, %v2181
    %v2284 = vmul.f32 %v1780, %v2183
    %v2285 = vmul.f32 %v1782, %v2185
    %v2286 = vmul.f32 %v1786, %v2187
    %v2287 = vmul.f32 %v1788, %v2189
    %v2288 = vmul.f32 %v1790, %v2191
    %v2289 = vmul.f32 %v1792, %v2193
    %v2290 = vmul.f32 %v1796, %v2195
    %v2291 = vmul.f32 %v1798, %v2197
    %v2292 = vmul.f32 %v1800, %v2199
    %v2293 = vmul.f32 %v1802, %v2201
    %v2294 = vmul.f32 %v1806, %v2203
    %v2295 = vmul.f32 %v1808, %v2205
    %v2296 = vmul.f32 %v1810, %v2207
    %v2297 = vmul.f32 %v1812, %v2209
    %v2298 = vmul.f32 %v1816, %v2211
    %v2299 = vmul.f32 %v1818, %v2213
    %v2300 = vmul.f32 %v1820, %v2215
    %v2301 = vmul.f32 %v1822, %v2217
    %v2302 = vmul.f32 %v1826, %v2219
    %v2303 = vmul.f32 %v1828, %v2221
    %v2304 = vmul.f32 %v1830, %v2223
    %v2305 = vmul.f32 %v1832, %v2225
    %v2306 = vmul.f32 %v1836, %v2227
    %v2307 = vmul.f32 %v1838, %v2229
    %v2308 = vmul.f32 %v1840, %v2231
    %v2309 = vmul.f32 %v1842, %v2233
    %v2310 = vmul.f32 %v1846, %v2235
    %v2311 = vmul.f32 %v1848, %v2237
    %v2312 = vmul.f32 %v1850, %v2239
    %v2313 = vmul.f32 %v1852, %v2241
    %v2314 = vmul.f32 %v1856, %v2243
    %v2315 = vmul.f32 %v1858, %v2245
    %v2316 = vmul.f32 %v1860, %v2247
    %v2317 = vmul.f32 %v1862, %v2249
    %v2318 = vmul.f32 %v1866, %v2251
    %v2319 = vmul.f32 %v1868, %v2253
    %v2320 = vmul.f32 %v1870, %v2255
    %v2321 = vmul.f32 %v1872, %v2257
    %v2322 = vld [vmem:[%s9] sm:$0xff]
    %v2323 = vld [vmem:[%s9 + $0x8] sm:$0xff]
    %v2324 = vld [vmem:[%s9 + $0x10] sm:$0xff]
    %v2325 = vld [vmem:[%s9 + $0x18] sm:$0xff]
    %v2326 = vld [vmem:[%s9 + $0x20] sm:$0xff]
    %v2327 = vld [vmem:[%s9 + $0x28] sm:$0xff]
    %v2328 = vld [vmem:[%s9 + $0x30] sm:$0xff]
    %v2329 = vld [vmem:[%s9 + $0x38] sm:$0xff]
    %v2330 = vld [vmem:[%s9 + $0x40] sm:$0xff]
    %v2331 = vld [vmem:[%s9 + $0x48] sm:$0xff]
    %v2332 = vld [vmem:[%s9 + $0x50] sm:$0xff]
    %v2333 = vld [vmem:[%s9 + $0x58] sm:$0xff]
    %v2334 = vld [vmem:[%s9 + $0x60] sm:$0xff]
    %v2335 = vld [vmem:[%s9 + $0x68] sm:$0xff]
    %v2336 = vld [vmem:[%s9 + $0x70] sm:$0xff]
    %v2337 = vld [vmem:[%s9 + $0x78] sm:$0xff]
    %v2354 = vunpack.c.l.b16 %v2322
    %v2355 = vunpack.c.h.b16 %v2322
    %v2356 = vunpack.c.l.b16 %v2323
    %v2357 = vunpack.c.h.b16 %v2323
    %v2358 = vunpack.c.l.b16 %v2324
    %v2359 = vunpack.c.h.b16 %v2324
    %v2360 = vunpack.c.l.b16 %v2325
    %v2361 = vunpack.c.h.b16 %v2325
    %v2362 = vunpack.c.l.b16 %v2326
    %v2363 = vunpack.c.h.b16 %v2326
    %v2364 = vunpack.c.l.b16 %v2327
    %v2365 = vunpack.c.h.b16 %v2327
    %v2366 = vunpack.c.l.b16 %v2328
    %v2367 = vunpack.c.h.b16 %v2328
    %v2368 = vunpack.c.l.b16 %v2329
    %v2369 = vunpack.c.h.b16 %v2329
    %v2370 = vunpack.c.l.b16 %v2330
    %v2371 = vunpack.c.h.b16 %v2330
    %v2372 = vunpack.c.l.b16 %v2331
    %v2373 = vunpack.c.h.b16 %v2331
    %v2374 = vunpack.c.l.b16 %v2332
    %v2375 = vunpack.c.h.b16 %v2332
    %v2376 = vunpack.c.l.b16 %v2333
    %v2377 = vunpack.c.h.b16 %v2333
    %v2378 = vunpack.c.l.b16 %v2334
    %v2379 = vunpack.c.h.b16 %v2334
    %v2380 = vunpack.c.l.b16 %v2335
    %v2381 = vunpack.c.h.b16 %v2335
    %v2382 = vunpack.c.l.b16 %v2336
    %v2383 = vunpack.c.h.b16 %v2336
    %v2384 = vunpack.c.l.b16 %v2337
    %v2385 = vunpack.c.h.b16 %v2337
    %v2386 = vpack.c.b16 %v2356, %v2354
    %v2387 = vpack.c.b16 %v2357, %v2355
    %v2388 = vpack.c.b16 %v2360, %v2358
    %v2389 = vpack.c.b16 %v2361, %v2359
    %v2390 = vpack.c.b16 %v2364, %v2362
    %v2391 = vpack.c.b16 %v2365, %v2363
    %v2392 = vpack.c.b16 %v2368, %v2366
    %v2393 = vpack.c.b16 %v2369, %v2367
    %v2394 = vpack.c.b16 %v2372, %v2370
    %v2395 = vpack.c.b16 %v2373, %v2371
    %v2396 = vpack.c.b16 %v2376, %v2374
    %v2397 = vpack.c.b16 %v2377, %v2375
    %v2398 = vpack.c.b16 %v2380, %v2378
    %v2399 = vpack.c.b16 %v2381, %v2379
    %v2400 = vpack.c.b16 %v2384, %v2382
    %v2401 = vpack.c.b16 %v2385, %v2383
    %2418 = vmatprep.subr.bf16.mxu0 %v2401
    %2419 = vmatpush1.bf16.msra.mxu0 %v2400
    %2420 = vmatprep.subr.bf16.mxu0 %v2399
    %2421 = vmatpush1.bf16.msra.mxu0 %v2398
    %2422 = vmatprep.subr.bf16.mxu0 %v2397
    %2423 = vmatpush1.bf16.msra.mxu0 %v2396
    %2424 = vmatprep.subr.bf16.mxu0 %v2395
    %2425 = vmatpush1.bf16.msra.mxu0 %v2394
    %2426 = vmatprep.subr.bf16.mxu0 %v2393
    %2427 = vmatpush1.bf16.msra.mxu0 %v2392
    %2428 = vmatprep.subr.bf16.mxu0 %v2391
    %2429 = vmatpush1.bf16.msra.mxu0 %v2390
    %2430 = vmatprep.subr.bf16.mxu0 %v2389
    %2431 = vmatpush1.bf16.msra.mxu0 %v2388
    %2432 = vmatprep.subr.bf16.mxu0 %v2387
    %2433 = vmatpush1.bf16.msra.mxu0 %v2386
    %2434 = vmatprep.subr.bf16.mxu0 0
    %2435 = vmatpush2.bf16.msra.mxu0 0
    %2436 = vmatprep.subr.bf16.mxu0 0
    %2437 = vmatpush2.bf16.msra.mxu0 0
    %2438 = vmatprep.subr.bf16.mxu0 0
    %2439 = vmatpush2.bf16.msra.mxu0 0
    %2440 = vmatprep.subr.bf16.mxu0 0
    %2441 = vmatpush2.bf16.msra.mxu0 0
    %2442 = vmatprep.subr.bf16.mxu0 0
    %2443 = vmatpush2.bf16.msra.mxu0 0
    %2444 = vmatprep.subr.bf16.mxu0 0
    %2445 = vmatpush2.bf16.msra.mxu0 0
    %2446 = vmatprep.subr.bf16.mxu0 0
    %2447 = vmatpush2.bf16.msra.mxu0 0
    %2448 = vmatprep.subr.bf16.mxu0 0
    %2449 = vmatpush2.bf16.msra.mxu0 0
    %2450 = vmatprep.mubr.bf16.mxu0 0
    %2451 = vmatmul.mubr.bf16.gmra.mxu0 %v1167
    %v2452 = vpop.f32.mrf.mxu0
    %v2453 = vadd.f32 0.0, %v2452
    %v2454 = vpop.f32.mrf.mxu0
    %v2455 = vadd.f32 0.0, %v2454
    %v2456 = vpop.f32.mrf.mxu0
    %v2457 = vadd.f32 0.0, %v2456
    %v2458 = vpop.f32.mrf.mxu0
    %v2459 = vadd.f32 0.0, %v2458
    %2460 = vmatprep.mubr.bf16.mxu0 0
    %2461 = vmatmul.mubr.bf16.gmra.mxu0 %v1168
    %v2462 = vpop.f32.mrf.mxu0
    %v2463 = vadd.f32 0.0, %v2462
    %v2464 = vpop.f32.mrf.mxu0
    %v2465 = vadd.f32 0.0, %v2464
    %v2466 = vpop.f32.mrf.mxu0
    %v2467 = vadd.f32 0.0, %v2466
    %v2468 = vpop.f32.mrf.mxu0
    %v2469 = vadd.f32 0.0, %v2468
    %2470 = vmatprep.mubr.bf16.mxu0 0
    %2471 = vmatmul.mubr.bf16.gmra.mxu0 %v1169
    %v2472 = vpop.f32.mrf.mxu0
    %v2473 = vadd.f32 0.0, %v2472
    %v2474 = vpop.f32.mrf.mxu0
    %v2475 = vadd.f32 0.0, %v2474
    %v2476 = vpop.f32.mrf.mxu0
    %v2477 = vadd.f32 0.0, %v2476
    %v2478 = vpop.f32.mrf.mxu0
    %v2479 = vadd.f32 0.0, %v2478
    %2480 = vmatprep.mubr.bf16.mxu0 0
    %2481 = vmatmul.mubr.bf16.gmra.mxu0 %v1170
    %v2482 = vpop.f32.mrf.mxu0
    %v2483 = vadd.f32 0.0, %v2482
    %v2484 = vpop.f32.mrf.mxu0
    %v2485 = vadd.f32 0.0, %v2484
    %v2486 = vpop.f32.mrf.mxu0
    %v2487 = vadd.f32 0.0, %v2486
    %v2488 = vpop.f32.mrf.mxu0
    %v2489 = vadd.f32 0.0, %v2488
    %2490 = vmatprep.mubr.bf16.mxu0 0
    %2491 = vmatmul.mubr.bf16.gmra.mxu0 %v1171
    %v2492 = vpop.f32.mrf.mxu0
    %v2493 = vadd.f32 0.0, %v2492
    %v2494 = vpop.f32.mrf.mxu0
    %v2495 = vadd.f32 0.0, %v2494
    %v2496 = vpop.f32.mrf.mxu0
    %v2497 = vadd.f32 0.0, %v2496
    %v2498 = vpop.f32.mrf.mxu0
    %v2499 = vadd.f32 0.0, %v2498
    %2500 = vmatprep.mubr.bf16.mxu0 0
    %2501 = vmatmul.mubr.bf16.gmra.mxu0 %v1172
    %v2502 = vpop.f32.mrf.mxu0
    %v2503 = vadd.f32 0.0, %v2502
    %v2504 = vpop.f32.mrf.mxu0
    %v2505 = vadd.f32 0.0, %v2504
    %v2506 = vpop.f32.mrf.mxu0
    %v2507 = vadd.f32 0.0, %v2506
    %v2508 = vpop.f32.mrf.mxu0
    %v2509 = vadd.f32 0.0, %v2508
    %2510 = vmatprep.mubr.bf16.mxu0 0
    %2511 = vmatmul.mubr.bf16.gmra.mxu0 %v1173
    %v2512 = vpop.f32.mrf.mxu0
    %v2513 = vadd.f32 0.0, %v2512
    %v2514 = vpop.f32.mrf.mxu0
    %v2515 = vadd.f32 0.0, %v2514
    %v2516 = vpop.f32.mrf.mxu0
    %v2517 = vadd.f32 0.0, %v2516
    %v2518 = vpop.f32.mrf.mxu0
    %v2519 = vadd.f32 0.0, %v2518
    %2520 = vmatprep.mubr.bf16.mxu0 0
    %2521 = vmatmul.mubr.bf16.gmra.mxu0 %v1174
    %v2522 = vpop.f32.mrf.mxu0
    %v2523 = vadd.f32 0.0, %v2522
    %v2524 = vpop.f32.mrf.mxu0
    %v2525 = vadd.f32 0.0, %v2524
    %v2526 = vpop.f32.mrf.mxu0
    %v2527 = vadd.f32 0.0, %v2526
    %v2528 = vpop.f32.mrf.mxu0
    %v2529 = vadd.f32 0.0, %v2528
    %2530 = vmatprep.mubr.bf16.mxu0 0
    %2531 = vmatmul.mubr.bf16.gmra.mxu0 %v1175
    %v2532 = vpop.f32.mrf.mxu0
    %v2533 = vadd.f32 0.0, %v2532
    %v2534 = vpop.f32.mrf.mxu0
    %v2535 = vadd.f32 0.0, %v2534
    %v2536 = vpop.f32.mrf.mxu0
    %v2537 = vadd.f32 0.0, %v2536
    %v2538 = vpop.f32.mrf.mxu0
    %v2539 = vadd.f32 0.0, %v2538
    %2540 = vmatprep.mubr.bf16.mxu0 0
    %2541 = vmatmul.mubr.bf16.gmra.mxu0 %v1176
    %v2542 = vpop.f32.mrf.mxu0
    %v2543 = vadd.f32 0.0, %v2542
    %v2544 = vpop.f32.mrf.mxu0
    %v2545 = vadd.f32 0.0, %v2544
    %v2546 = vpop.f32.mrf.mxu0
    %v2547 = vadd.f32 0.0, %v2546
    %v2548 = vpop.f32.mrf.mxu0
    %v2549 = vadd.f32 0.0, %v2548
    %2550 = vmatprep.mubr.bf16.mxu0 0
    %2551 = vmatmul.mubr.bf16.gmra.mxu0 %v1177
    %v2552 = vpop.f32.mrf.mxu0
    %v2553 = vadd.f32 0.0, %v2552
    %v2554 = vpop.f32.mrf.mxu0
    %v2555 = vadd.f32 0.0, %v2554
    %v2556 = vpop.f32.mrf.mxu0
    %v2557 = vadd.f32 0.0, %v2556
    %v2558 = vpop.f32.mrf.mxu0
    %v2559 = vadd.f32 0.0, %v2558
    %2560 = vmatprep.mubr.bf16.mxu0 0
    %2561 = vmatmul.mubr.bf16.gmra.mxu0 %v1178
    %v2562 = vpop.f32.mrf.mxu0
    %v2563 = vadd.f32 0.0, %v2562
    %v2564 = vpop.f32.mrf.mxu0
    %v2565 = vadd.f32 0.0, %v2564
    %v2566 = vpop.f32.mrf.mxu0
    %v2567 = vadd.f32 0.0, %v2566
    %v2568 = vpop.f32.mrf.mxu0
    %v2569 = vadd.f32 0.0, %v2568
    %2570 = vmatprep.mubr.bf16.mxu0 0
    %2571 = vmatmul.mubr.bf16.gmra.mxu0 %v1179
    %v2572 = vpop.f32.mrf.mxu0
    %v2573 = vadd.f32 0.0, %v2572
    %v2574 = vpop.f32.mrf.mxu0
    %v2575 = vadd.f32 0.0, %v2574
    %v2576 = vpop.f32.mrf.mxu0
    %v2577 = vadd.f32 0.0, %v2576
    %v2578 = vpop.f32.mrf.mxu0
    %v2579 = vadd.f32 0.0, %v2578
    %2580 = vmatprep.mubr.bf16.mxu0 0
    %2581 = vmatmul.mubr.bf16.gmra.mxu0 %v1180
    %v2582 = vpop.f32.mrf.mxu0
    %v2583 = vadd.f32 0.0, %v2582
    %v2584 = vpop.f32.mrf.mxu0
    %v2585 = vadd.f32 0.0, %v2584
    %v2586 = vpop.f32.mrf.mxu0
    %v2587 = vadd.f32 0.0, %v2586
    %v2588 = vpop.f32.mrf.mxu0
    %v2589 = vadd.f32 0.0, %v2588
    %2590 = vmatprep.mubr.bf16.mxu0 0
    %2591 = vmatmul.mubr.bf16.gmra.mxu0 %v1181
    %v2592 = vpop.f32.mrf.mxu0
    %v2593 = vadd.f32 0.0, %v2592
    %v2594 = vpop.f32.mrf.mxu0
    %v2595 = vadd.f32 0.0, %v2594
    %v2596 = vpop.f32.mrf.mxu0
    %v2597 = vadd.f32 0.0, %v2596
    %v2598 = vpop.f32.mrf.mxu0
    %v2599 = vadd.f32 0.0, %v2598
    %2600 = vmatprep.mubr.bf16.mxu0 0
    %2601 = vmatmul.mubr.bf16.gmra.mxu0 %v1182
    %v2602 = vpop.f32.mrf.mxu0
    %v2603 = vadd.f32 0.0, %v2602
    %v2604 = vpop.f32.mrf.mxu0
    %v2605 = vadd.f32 0.0, %v2604
    %v2606 = vpop.f32.mrf.mxu0
    %v2607 = vadd.f32 0.0, %v2606
    %v2608 = vpop.f32.mrf.mxu0
    %v2609 = vadd.f32 0.0, %v2608
    %2610 = vdwg.mxu0
    %v2611 = vmul.f32 %v2258, %v2453
    %v2612 = vmul.f32 %v2259, %v2455
    %v2613 = vmul.f32 %v2260, %v2457
    %v2614 = vmul.f32 %v2261, %v2459
    %v2615 = vmul.f32 %v2262, %v2463
    %v2616 = vmul.f32 %v2263, %v2465
    %v2617 = vmul.f32 %v2264, %v2467
    %v2618 = vmul.f32 %v2265, %v2469
    %v2619 = vmul.f32 %v2266, %v2473
    %v2620 = vmul.f32 %v2267, %v2475
    %v2621 = vmul.f32 %v2268, %v2477
    %v2622 = vmul.f32 %v2269, %v2479
    %v2623 = vmul.f32 %v2270, %v2483
    %v2624 = vmul.f32 %v2271, %v2485
    %v2625 = vmul.f32 %v2272, %v2487
    %v2626 = vmul.f32 %v2273, %v2489
    %v2627 = vmul.f32 %v2274, %v2493
    %v2628 = vmul.f32 %v2275, %v2495
    %v2629 = vmul.f32 %v2276, %v2497
    %v2630 = vmul.f32 %v2277, %v2499
    %v2631 = vmul.f32 %v2278, %v2503
    %v2632 = vmul.f32 %v2279, %v2505
    %v2633 = vmul.f32 %v2280, %v2507
    %v2634 = vmul.f32 %v2281, %v2509
    %v2635 = vmul.f32 %v2282, %v2513
    %v2636 = vmul.f32 %v2283, %v2515
    %v2637 = vmul.f32 %v2284, %v2517
    %v2638 = vmul.f32 %v2285, %v2519
    %v2639 = vmul.f32 %v2286, %v2523
    %v2640 = vmul.f32 %v2287, %v2525
    %v2641 = vmul.f32 %v2288, %v2527
    %v2642 = vmul.f32 %v2289, %v2529
    %v2643 = vmul.f32 %v2290, %v2533
    %v2644 = vmul.f32 %v2291, %v2535
    %v2645 = vmul.f32 %v2292, %v2537
    %v2646 = vmul.f32 %v2293, %v2539
    %v2647 = vmul.f32 %v2294, %v2543
    %v2648 = vmul.f32 %v2295, %v2545
    %v2649 = vmul.f32 %v2296, %v2547
    %v2650 = vmul.f32 %v2297, %v2549
    %v2651 = vmul.f32 %v2298, %v2553
    %v2652 = vmul.f32 %v2299, %v2555
    %v2653 = vmul.f32 %v2300, %v2557
    %v2654 = vmul.f32 %v2301, %v2559
    %v2655 = vmul.f32 %v2302, %v2563
    %v2656 = vmul.f32 %v2303, %v2565
    %v2657 = vmul.f32 %v2304, %v2567
    %v2658 = vmul.f32 %v2305, %v2569
    %v2659 = vmul.f32 %v2306, %v2573
    %v2660 = vmul.f32 %v2307, %v2575
    %v2661 = vmul.f32 %v2308, %v2577
    %v2662 = vmul.f32 %v2309, %v2579
    %v2663 = vmul.f32 %v2310, %v2583
    %v2664 = vmul.f32 %v2311, %v2585
    %v2665 = vmul.f32 %v2312, %v2587
    %v2666 = vmul.f32 %v2313, %v2589
    %v2667 = vmul.f32 %v2314, %v2593
    %v2668 = vmul.f32 %v2315, %v2595
    %v2669 = vmul.f32 %v2316, %v2597
    %v2670 = vmul.f32 %v2317, %v2599
    %v2671 = vmul.f32 %v2318, %v2603
    %v2672 = vmul.f32 %v2319, %v2605
    %v2673 = vmul.f32 %v2320, %v2607
    %v2674 = vmul.f32 %v2321, %v2609
    %v2675 = vpack.c.bf16 %v2613, %v2611
    %v2676 = vpack.c.bf16 %v2614, %v2612
    %v2677 = vpack.c.bf16 %v2617, %v2615
    %v2678 = vpack.c.bf16 %v2618, %v2616
    %v2679 = vpack.c.bf16 %v2621, %v2619
    %v2680 = vpack.c.bf16 %v2622, %v2620
    %v2681 = vpack.c.bf16 %v2625, %v2623
    %v2682 = vpack.c.bf16 %v2626, %v2624
    %v2683 = vpack.c.bf16 %v2629, %v2627
    %v2684 = vpack.c.bf16 %v2630, %v2628
    %v2685 = vpack.c.bf16 %v2633, %v2631
    %v2686 = vpack.c.bf16 %v2634, %v2632
    %v2687 = vpack.c.bf16 %v2637, %v2635
    %v2688 = vpack.c.bf16 %v2638, %v2636
    %v2689 = vpack.c.bf16 %v2641, %v2639
    %v2690 = vpack.c.bf16 %v2642, %v2640
    %v2691 = vpack.c.bf16 %v2645, %v2643
    %v2692 = vpack.c.bf16 %v2646, %v2644
    %v2693 = vpack.c.bf16 %v2649, %v2647
    %v2694 = vpack.c.bf16 %v2650, %v2648
    %v2695 = vpack.c.bf16 %v2653, %v2651
    %v2696 = vpack.c.bf16 %v2654, %v2652
    %v2697 = vpack.c.bf16 %v2657, %v2655
    %v2698 = vpack.c.bf16 %v2658, %v2656
    %v2699 = vpack.c.bf16 %v2661, %v2659
    %v2700 = vpack.c.bf16 %v2662, %v2660
    %v2701 = vpack.c.bf16 %v2665, %v2663
    %v2702 = vpack.c.bf16 %v2666, %v2664
    %v2703 = vpack.c.bf16 %v2669, %v2667
    %v2704 = vpack.c.bf16 %v2670, %v2668
    %v2705 = vpack.c.bf16 %v2673, %v2671
    %v2706 = vpack.c.bf16 %v2674, %v2672
    %v2707 = vld [vmem:[%s10] sm:$0xf]
    %v2708 = vld [vmem:[%s10 + $0x4] sm:$0xf]
    %v2709 = vld [vmem:[%s10 + $0x8] sm:$0xf]
    %v2710 = vld [vmem:[%s10 + $0xc] sm:$0xf]
    %v2711 = vld [vmem:[%s10 + $0x10] sm:$0xf]
    %v2712 = vld [vmem:[%s10 + $0x14] sm:$0xf]
    %v2713 = vld [vmem:[%s10 + $0x18] sm:$0xf]
    %v2714 = vld [vmem:[%s10 + $0x1c] sm:$0xf]
    %v2715 = vld [vmem:[%s10 + $0x20] sm:$0xf]
    %v2716 = vld [vmem:[%s10 + $0x24] sm:$0xf]
    %v2717 = vld [vmem:[%s10 + $0x28] sm:$0xf]
    %v2718 = vld [vmem:[%s10 + $0x2c] sm:$0xf]
    %v2719 = vld [vmem:[%s10 + $0x30] sm:$0xf]
    %v2720 = vld [vmem:[%s10 + $0x34] sm:$0xf]
    %v2721 = vld [vmem:[%s10 + $0x38] sm:$0xf]
    %v2722 = vld [vmem:[%s10 + $0x3c] sm:$0xf]
    %v2723 = vld [vmem:[%s10 + $0x40] sm:$0xf]
    %v2724 = vld [vmem:[%s10 + $0x44] sm:$0xf]
    %v2725 = vld [vmem:[%s10 + $0x48] sm:$0xf]
    %v2726 = vld [vmem:[%s10 + $0x4c] sm:$0xf]
    %v2727 = vld [vmem:[%s10 + $0x50] sm:$0xf]
    %v2728 = vld [vmem:[%s10 + $0x54] sm:$0xf]
    %v2729 = vld [vmem:[%s10 + $0x58] sm:$0xf]
    %v2730 = vld [vmem:[%s10 + $0x5c] sm:$0xf]
    %v2731 = vld [vmem:[%s10 + $0x60] sm:$0xf]
    %v2732 = vld [vmem:[%s10 + $0x64] sm:$0xf]
    %v2733 = vld [vmem:[%s10 + $0x68] sm:$0xf]
    %v2734 = vld [vmem:[%s10 + $0x6c] sm:$0xf]
    %v2735 = vld [vmem:[%s10 + $0x70] sm:$0xf]
    %v2736 = vld [vmem:[%s10 + $0x74] sm:$0xf]
    %v2737 = vld [vmem:[%s10 + $0x78] sm:$0xf]
    %v2738 = vld [vmem:[%s10 + $0x7c] sm:$0xf]
    %v2771 = vunpack.c.l.b16 %v2707
    %v2772 = vunpack.c.l.b16 %v2708
    %v2773 = vunpack.c.l.b16 %v2709
    %v2774 = vunpack.c.l.b16 %v2710
    %v2775 = vunpack.c.l.b16 %v2711
    %v2776 = vunpack.c.l.b16 %v2712
    %v2777 = vunpack.c.l.b16 %v2713
    %v2778 = vunpack.c.l.b16 %v2714
    %v2779 = vunpack.c.l.b16 %v2715
    %v2780 = vunpack.c.l.b16 %v2716
    %v2781 = vunpack.c.l.b16 %v2717
    %v2782 = vunpack.c.l.b16 %v2718
    %v2783 = vunpack.c.l.b16 %v2719
    %v2784 = vunpack.c.l.b16 %v2720
    %v2785 = vunpack.c.l.b16 %v2721
    %v2786 = vunpack.c.l.b16 %v2722
    %v2787 = vunpack.c.l.b16 %v2723
    %v2788 = vunpack.c.l.b16 %v2724
    %v2789 = vunpack.c.l.b16 %v2725
    %v2790 = vunpack.c.l.b16 %v2726
    %v2791 = vunpack.c.l.b16 %v2727
    %v2792 = vunpack.c.l.b16 %v2728
    %v2793 = vunpack.c.l.b16 %v2729
    %v2794 = vunpack.c.l.b16 %v2730
    %v2795 = vunpack.c.l.b16 %v2731
    %v2796 = vunpack.c.l.b16 %v2732
    %v2797 = vunpack.c.l.b16 %v2733
    %v2798 = vunpack.c.l.b16 %v2734
    %v2799 = vunpack.c.l.b16 %v2735
    %v2800 = vunpack.c.l.b16 %v2736
    %v2801 = vunpack.c.l.b16 %v2737
    %v2802 = vunpack.c.l.b16 %v2738
    %v2803 = vpack.c.b16 %v2772, %v2771
    %v2804 = vpack.c.b16 %v2774, %v2773
    %v2805 = vpack.c.b16 %v2776, %v2775
    %v2806 = vpack.c.b16 %v2778, %v2777
    %v2807 = vpack.c.b16 %v2780, %v2779
    %v2808 = vpack.c.b16 %v2782, %v2781
    %v2809 = vpack.c.b16 %v2784, %v2783
    %v2810 = vpack.c.b16 %v2786, %v2785
    %v2811 = vpack.c.b16 %v2788, %v2787
    %v2812 = vpack.c.b16 %v2790, %v2789
    %v2813 = vpack.c.b16 %v2792, %v2791
    %v2814 = vpack.c.b16 %v2794, %v2793
    %v2815 = vpack.c.b16 %v2796, %v2795
    %v2816 = vpack.c.b16 %v2798, %v2797
    %v2817 = vpack.c.b16 %v2800, %v2799
    %v2818 = vpack.c.b16 %v2802, %v2801
    %2835 = vmatprep.subr.bf16.mxu0 0
    %2836 = vmatpush1.bf16.msra.mxu0 %v2810
    %2837 = vmatprep.subr.bf16.mxu0 0
    %2838 = vmatpush1.bf16.msra.mxu0 %v2809
    %2839 = vmatprep.subr.bf16.mxu0 0
    %2840 = vmatpush1.bf16.msra.mxu0 %v2808
    %2841 = vmatprep.subr.bf16.mxu0 0
    %2842 = vmatpush1.bf16.msra.mxu0 %v2807
    %2843 = vmatprep.subr.bf16.mxu0 0
    %2844 = vmatpush1.bf16.msra.mxu0 %v2806
    %2845 = vmatprep.subr.bf16.mxu0 0
    %2846 = vmatpush1.bf16.msra.mxu0 %v2805
    %2847 = vmatprep.subr.bf16.mxu0 0
    %2848 = vmatpush1.bf16.msra.mxu0 %v2804
    %2849 = vmatprep.subr.bf16.mxu0 0
    %2850 = vmatpush1.bf16.msra.mxu0 %v2803
    %2851 = vmatprep.subr.bf16.mxu0 0
    %2852 = vmatpush2.bf16.msra.mxu0 %v2818
    %2853 = vmatprep.subr.bf16.mxu0 0
    %2854 = vmatpush2.bf16.msra.mxu0 %v2817
    %2855 = vmatprep.subr.bf16.mxu0 0
    %2856 = vmatpush2.bf16.msra.mxu0 %v2816
    %2857 = vmatprep.subr.bf16.mxu0 0
    %2858 = vmatpush2.bf16.msra.mxu0 %v2815
    %2859 = vmatprep.subr.bf16.mxu0 0
    %2860 = vmatpush2.bf16.msra.mxu0 %v2814
    %2861 = vmatprep.subr.bf16.mxu0 0
    %2862 = vmatpush2.bf16.msra.mxu0 %v2813
    %2863 = vmatprep.subr.bf16.mxu0 0
    %2864 = vmatpush2.bf16.msra.mxu0 %v2812
    %2865 = vmatprep.subr.bf16.mxu0 0
    %2866 = vmatpush2.bf16.msra.mxu0 %v2811
    %2867 = vmatprep.mubr.bf16.mxu0 %v2676
    %2868 = vmatmul.mubr.bf16.gmra.mxu0 %v2675
    %v2869 = vpop.f32.mrf.mxu0
    %v2870 = vadd.f32 0.0, %v2869
    %v2871 = vpop.f32.mrf.mxu0
    %v2872 = vpop.f32.mrf.mxu0
    %v2873 = vadd.f32 0.0, %v2872
    %v2874 = vpop.f32.mrf.mxu0
    %2875 = vmatprep.mubr.bf16.mxu0 %v2678
    %2876 = vmatmul.mubr.bf16.gmra.mxu0 %v2677
    %v2877 = vpop.f32.mrf.mxu0
    %v2878 = vadd.f32 0.0, %v2877
    %v2879 = vpop.f32.mrf.mxu0
    %v2880 = vpop.f32.mrf.mxu0
    %v2881 = vadd.f32 0.0, %v2880
    %v2882 = vpop.f32.mrf.mxu0
    %2883 = vmatprep.mubr.bf16.mxu0 %v2680
    %2884 = vmatmul.mubr.bf16.gmra.mxu0 %v2679
    %v2885 = vpop.f32.mrf.mxu0
    %v2886 = vadd.f32 0.0, %v2885
    %v2887 = vpop.f32.mrf.mxu0
    %v2888 = vpop.f32.mrf.mxu0
    %v2889 = vadd.f32 0.0, %v2888
    %v2890 = vpop.f32.mrf.mxu0
    %2891 = vmatprep.mubr.bf16.mxu0 %v2682
    %2892 = vmatmul.mubr.bf16.gmra.mxu0 %v2681
    %v2893 = vpop.f32.mrf.mxu0
    %v2894 = vadd.f32 0.0, %v2893
    %v2895 = vpop.f32.mrf.mxu0
    %v2896 = vpop.f32.mrf.mxu0
    %v2897 = vadd.f32 0.0, %v2896
    %v2898 = vpop.f32.mrf.mxu0
    %2899 = vmatprep.mubr.bf16.mxu0 %v2684
    %2900 = vmatmul.mubr.bf16.gmra.mxu0 %v2683
    %v2901 = vpop.f32.mrf.mxu0
    %v2902 = vadd.f32 0.0, %v2901
    %v2903 = vpop.f32.mrf.mxu0
    %v2904 = vpop.f32.mrf.mxu0
    %v2905 = vadd.f32 0.0, %v2904
    %v2906 = vpop.f32.mrf.mxu0
    %2907 = vmatprep.mubr.bf16.mxu0 %v2686
    %2908 = vmatmul.mubr.bf16.gmra.mxu0 %v2685
    %v2909 = vpop.f32.mrf.mxu0
    %v2910 = vadd.f32 0.0, %v2909
    %v2911 = vpop.f32.mrf.mxu0
    %v2912 = vpop.f32.mrf.mxu0
    %v2913 = vadd.f32 0.0, %v2912
    %v2914 = vpop.f32.mrf.mxu0
    %2915 = vmatprep.mubr.bf16.mxu0 %v2688
    %2916 = vmatmul.mubr.bf16.gmra.mxu0 %v2687
    %v2917 = vpop.f32.mrf.mxu0
    %v2918 = vadd.f32 0.0, %v2917
    %v2919 = vpop.f32.mrf.mxu0
    %v2920 = vpop.f32.mrf.mxu0
    %v2921 = vadd.f32 0.0, %v2920
    %v2922 = vpop.f32.mrf.mxu0
    %2923 = vmatprep.mubr.bf16.mxu0 %v2690
    %2924 = vmatmul.mubr.bf16.gmra.mxu0 %v2689
    %v2925 = vpop.f32.mrf.mxu0
    %v2926 = vadd.f32 0.0, %v2925
    %v2927 = vpop.f32.mrf.mxu0
    %v2928 = vpop.f32.mrf.mxu0
    %v2929 = vadd.f32 0.0, %v2928
    %v2930 = vpop.f32.mrf.mxu0
    %2931 = vmatprep.mubr.bf16.mxu0 %v2692
    %2932 = vmatmul.mubr.bf16.gmra.mxu0 %v2691
    %v2933 = vpop.f32.mrf.mxu0
    %v2934 = vadd.f32 0.0, %v2933
    %v2935 = vpop.f32.mrf.mxu0
    %v2936 = vpop.f32.mrf.mxu0
    %v2937 = vadd.f32 0.0, %v2936
    %v2938 = vpop.f32.mrf.mxu0
    %2939 = vmatprep.mubr.bf16.mxu0 %v2694
    %2940 = vmatmul.mubr.bf16.gmra.mxu0 %v2693
    %v2941 = vpop.f32.mrf.mxu0
    %v2942 = vadd.f32 0.0, %v2941
    %v2943 = vpop.f32.mrf.mxu0
    %v2944 = vpop.f32.mrf.mxu0
    %v2945 = vadd.f32 0.0, %v2944
    %v2946 = vpop.f32.mrf.mxu0
    %2947 = vmatprep.mubr.bf16.mxu0 %v2696
    %2948 = vmatmul.mubr.bf16.gmra.mxu0 %v2695
    %v2949 = vpop.f32.mrf.mxu0
    %v2950 = vadd.f32 0.0, %v2949
    %v2951 = vpop.f32.mrf.mxu0
    %v2952 = vpop.f32.mrf.mxu0
    %v2953 = vadd.f32 0.0, %v2952
    %v2954 = vpop.f32.mrf.mxu0
    %2955 = vmatprep.mubr.bf16.mxu0 %v2698
    %2956 = vmatmul.mubr.bf16.gmra.mxu0 %v2697
    %v2957 = vpop.f32.mrf.mxu0
    %v2958 = vadd.f32 0.0, %v2957
    %v2959 = vpop.f32.mrf.mxu0
    %v2960 = vpop.f32.mrf.mxu0
    %v2961 = vadd.f32 0.0, %v2960
    %v2962 = vpop.f32.mrf.mxu0
    %2963 = vmatprep.mubr.bf16.mxu0 %v2700
    %2964 = vmatmul.mubr.bf16.gmra.mxu0 %v2699
    %v2965 = vpop.f32.mrf.mxu0
    %v2966 = vadd.f32 0.0, %v2965
    %v2967 = vpop.f32.mrf.mxu0
    %v2968 = vpop.f32.mrf.mxu0
    %v2969 = vadd.f32 0.0, %v2968
    %v2970 = vpop.f32.mrf.mxu0
    %2971 = vmatprep.mubr.bf16.mxu0 %v2702
    %2972 = vmatmul.mubr.bf16.gmra.mxu0 %v2701
    %v2973 = vpop.f32.mrf.mxu0
    %v2974 = vadd.f32 0.0, %v2973
    %v2975 = vpop.f32.mrf.mxu0
    %v2976 = vpop.f32.mrf.mxu0
    %v2977 = vadd.f32 0.0, %v2976
    %v2978 = vpop.f32.mrf.mxu0
    %2979 = vmatprep.mubr.bf16.mxu0 %v2704
    %2980 = vmatmul.mubr.bf16.gmra.mxu0 %v2703
    %v2981 = vpop.f32.mrf.mxu0
    %v2982 = vadd.f32 0.0, %v2981
    %v2983 = vpop.f32.mrf.mxu0
    %v2984 = vpop.f32.mrf.mxu0
    %v2985 = vadd.f32 0.0, %v2984
    %v2986 = vpop.f32.mrf.mxu0
    %2987 = vmatprep.mubr.bf16.mxu0 %v2706
    %2988 = vmatmul.mubr.bf16.gmra.mxu0 %v2705
    %v2989 = vpop.f32.mrf.mxu0
    %v2990 = vadd.f32 0.0, %v2989
    %v2991 = vpop.f32.mrf.mxu0
    %v2992 = vpop.f32.mrf.mxu0
    %v2993 = vadd.f32 0.0, %v2992
    %v2994 = vpop.f32.mrf.mxu0
    %2995 = vdwg.mxu0
    %v2996 = vpack.c.bf16 %v2873, %v2870
    %v2997 = vpack.c.bf16 %v2881, %v2878
    %v2998 = vpack.c.bf16 %v2889, %v2886
    %v2999 = vpack.c.bf16 %v2897, %v2894
    %v3000 = vpack.c.bf16 %v2905, %v2902
    %v3001 = vpack.c.bf16 %v2913, %v2910
    %v3002 = vpack.c.bf16 %v2921, %v2918
    %v3003 = vpack.c.bf16 %v2929, %v2926
    %v3004 = vpack.c.bf16 %v2937, %v2934
    %v3005 = vpack.c.bf16 %v2945, %v2942
    %v3006 = vpack.c.bf16 %v2953, %v2950
    %v3007 = vpack.c.bf16 %v2961, %v2958
    %v3008 = vpack.c.bf16 %v2969, %v2966
    %v3009 = vpack.c.bf16 %v2977, %v2974
    %v3010 = vpack.c.bf16 %v2985, %v2982
    %v3011 = vpack.c.bf16 %v2993, %v2990
    %v3028 = vunpack.c.l.b16 %v2996
    %v3029 = vunpack.c.h.b16 %v2996
    %v3030 = vunpack.c.l.b16 %v2997
    %v3031 = vunpack.c.h.b16 %v2997
    %v3032 = vunpack.c.l.b16 %v2998
    %v3033 = vunpack.c.h.b16 %v2998
    %v3034 = vunpack.c.l.b16 %v2999
    %v3035 = vunpack.c.h.b16 %v2999
    %v3036 = vunpack.c.l.b16 %v3000
    %v3037 = vunpack.c.h.b16 %v3000
    %v3038 = vunpack.c.l.b16 %v3001
    %v3039 = vunpack.c.h.b16 %v3001
    %v3040 = vunpack.c.l.b16 %v3002
    %v3041 = vunpack.c.h.b16 %v3002
    %v3042 = vunpack.c.l.b16 %v3003
    %v3043 = vunpack.c.h.b16 %v3003
    %v3044 = vunpack.c.l.b16 %v3004
    %v3045 = vunpack.c.h.b16 %v3004
    %v3046 = vunpack.c.l.b16 %v3005
    %v3047 = vunpack.c.h.b16 %v3005
    %v3048 = vunpack.c.l.b16 %v3006
    %v3049 = vunpack.c.h.b16 %v3006
    %v3050 = vunpack.c.l.b16 %v3007
    %v3051 = vunpack.c.h.b16 %v3007
    %v3052 = vunpack.c.l.b16 %v3008
    %v3053 = vunpack.c.h.b16 %v3008
    %v3054 = vunpack.c.l.b16 %v3009
    %v3055 = vunpack.c.h.b16 %v3009
    %v3056 = vunpack.c.l.b16 %v3010
    %v3057 = vunpack.c.h.b16 %v3010
    %v3058 = vunpack.c.l.b16 %v3011
    %v3059 = vunpack.c.h.b16 %v3011
    %v3060 = vpack.c.b16 %v3028, %v3028
    %v3061 = vpack.c.b16 %v3029, %v3029
    %v3062 = vpack.c.b16 %v3030, %v3030
    %v3063 = vpack.c.b16 %v3031, %v3031
    %v3064 = vpack.c.b16 %v3032, %v3032
    %v3065 = vpack.c.b16 %v3033, %v3033
    %v3066 = vpack.c.b16 %v3034, %v3034
    %v3067 = vpack.c.b16 %v3035, %v3035
    %v3068 = vpack.c.b16 %v3036, %v3036
    %v3069 = vpack.c.b16 %v3037, %v3037
    %v3070 = vpack.c.b16 %v3038, %v3038
    %v3071 = vpack.c.b16 %v3039, %v3039
    %v3072 = vpack.c.b16 %v3040, %v3040
    %v3073 = vpack.c.b16 %v3041, %v3041
    %v3074 = vpack.c.b16 %v3042, %v3042
    %v3075 = vpack.c.b16 %v3043, %v3043
    %v3076 = vpack.c.b16 %v3044, %v3044
    %v3077 = vpack.c.b16 %v3045, %v3045
    %v3078 = vpack.c.b16 %v3046, %v3046
    %v3079 = vpack.c.b16 %v3047, %v3047
    %v3080 = vpack.c.b16 %v3048, %v3048
    %v3081 = vpack.c.b16 %v3049, %v3049
    %v3082 = vpack.c.b16 %v3050, %v3050
    %v3083 = vpack.c.b16 %v3051, %v3051
    %v3084 = vpack.c.b16 %v3052, %v3052
    %v3085 = vpack.c.b16 %v3053, %v3053
    %v3086 = vpack.c.b16 %v3054, %v3054
    %v3087 = vpack.c.b16 %v3055, %v3055
    %v3088 = vpack.c.b16 %v3056, %v3056
    %v3089 = vpack.c.b16 %v3057, %v3057
    %v3090 = vpack.c.b16 %v3058, %v3058
    %v3091 = vpack.c.b16 %v3059, %v3059
    %3124 = vst [vmem:[%s13] sm:$0xf] %v3060
    %3125 = vst [vmem:[%s13 + $0x4] sm:$0xf] %v3061
    %3126 = vst [vmem:[%s13 + $0x8] sm:$0xf] %v3062
    %3127 = vst [vmem:[%s13 + $0xc] sm:$0xf] %v3063
    %3128 = vst [vmem:[%s13 + $0x10] sm:$0xf] %v3064
    %3129 = vst [vmem:[%s13 + $0x14] sm:$0xf] %v3065
    %3130 = vst [vmem:[%s13 + $0x18] sm:$0xf] %v3066
    %3131 = vst [vmem:[%s13 + $0x1c] sm:$0xf] %v3067
    %3132 = vst [vmem:[%s13 + $0x20] sm:$0xf] %v3068
    %3133 = vst [vmem:[%s13 + $0x24] sm:$0xf] %v3069
    %3134 = vst [vmem:[%s13 + $0x28] sm:$0xf] %v3070
    %3135 = vst [vmem:[%s13 + $0x2c] sm:$0xf] %v3071
    %3136 = vst [vmem:[%s13 + $0x30] sm:$0xf] %v3072
    %3137 = vst [vmem:[%s13 + $0x34] sm:$0xf] %v3073
    %3138 = vst [vmem:[%s13 + $0x38] sm:$0xf] %v3074
    %3139 = vst [vmem:[%s13 + $0x3c] sm:$0xf] %v3075
    %3140 = vst [vmem:[%s13 + $0x40] sm:$0xf] %v3076
    %3141 = vst [vmem:[%s13 + $0x44] sm:$0xf] %v3077
    %3142 = vst [vmem:[%s13 + $0x48] sm:$0xf] %v3078
    %3143 = vst [vmem:[%s13 + $0x4c] sm:$0xf] %v3079
    %3144 = vst [vmem:[%s13 + $0x50] sm:$0xf] %v3080
    %3145 = vst [vmem:[%s13 + $0x54] sm:$0xf] %v3081
    %3146 = vst [vmem:[%s13 + $0x58] sm:$0xf] %v3082
    %3147 = vst [vmem:[%s13 + $0x5c] sm:$0xf] %v3083
    %3148 = vst [vmem:[%s13 + $0x60] sm:$0xf] %v3084
    %3149 = vst [vmem:[%s13 + $0x64] sm:$0xf] %v3085
    %3150 = vst [vmem:[%s13 + $0x68] sm:$0xf] %v3086
    %3151 = vst [vmem:[%s13 + $0x6c] sm:$0xf] %v3087
    %3152 = vst [vmem:[%s13 + $0x70] sm:$0xf] %v3088
    %3153 = vst [vmem:[%s13 + $0x74] sm:$0xf] %v3089
    %3154 = vst [vmem:[%s13 + $0x78] sm:$0xf] %v3090
    %3155 = vst [vmem:[%s13 + $0x7c] sm:$0xf] %v3091
    // Predicated region
    $region54: #{_lambda_.3} parent=1 // pred_check
      _
    $region55: #{_lambda_.3} parent=1 // pred_check_branch
      %3157 = sbr.rel (0) target = $region57
    $region56: #{_lambda_.3} parent=1 // pred_region
      _
    $region57: #{_lambda_.3} parent=1 // pred_fallthru
      _
    // Predicated region
    $region58: #{_lambda_.3} parent=1 // pred_check
      _
    $region59: #{_lambda_.3} parent=1 // pred_check_branch
      %3159 = sbr.rel (0) target = $region61
    $region60: #{_lambda_.3} parent=1 // pred_region
      _
    $region61: #{_lambda_.3} parent=1 // pred_fallthru
      _
    // Predicated region
    $region62: #{_lambda_.3} parent=1 // pred_check
      _
    $region63: #{_lambda_.3} parent=1 // pred_check_branch
      %3161 = sbr.rel (0) target = $region65
    $region64: #{_lambda_.3} parent=1 // pred_region
      _
    $region65: #{_lambda_.3} parent=1 // pred_fallthru
      _
    // Predicated region
    $region66: #{_lambda_.3} parent=1 // pred_check
      _
    $region67: #{_lambda_.3} parent=1 // pred_check_branch
      %3163 = sbr.rel (0) target = $region69
    $region68: #{_lambda_.3} parent=1 // pred_region
      _
    $region69: #{_lambda_.3} parent=1 // pred_fallthru
      _
    // Predicated region
    $region70: #{_lambda_.3} parent=1 // pred_check
      _
    $region71: #{_lambda_.3} parent=1 // pred_check_branch
      %3165 = sbr.rel (0) target = $region73
    $region72: #{_lambda_.3} parent=1 // pred_region
      _
    $region73: #{_lambda_.3} parent=1 // pred_fallthru
      _
    // Predicated region
    $region74: #{_lambda_.3} parent=1 // pred_check
      _
    $region75: #{_lambda_.3} parent=1 // pred_check_branch
      %3167 = sbr.rel (0) target = $region77
    $region76: #{_lambda_.3} parent=1 // pred_region
      _
    $region77: #{_lambda_.3} parent=1 // pred_fallthru
      _
    %3168 = vsyncpa [#allocation3], 1
    %3169 = vsyncpa [#allocation5], 1

// kernel: _lambda_.4
$region0: #{_lambda_.4}
  #allocation0 [shape = 'u32[]', space=smem, size = 0x4, offset = 0x4, fixed_abs, tag = 'smem constant byte address 0x4 - core index']
  #allocation1 [shape = 'u32[144,128]{1,0:T(1,128)}', space=vmem, size = 0x12000, scoped, tag = 'internal scratch']
  #allocation2 [shape = 'f32[128,128]{1,0:T(8,128)}', space=vmem, size = 0x10000, scoped, tag = 'scratch operand']
  #allocation3 [shape = 's32[1]{0}', space=sflag, size = 0x4, scoped, tag = 'scoped memory for _lambda_.4']
  #allocation4 [shape = 'u8[512]{0}', space=smem, size = 0x200, scoped, tag = 'prefetched SMEM operand 0']
  %s0 = inlined_call_operand.vmem [shape: s32[16], index: 0, kind: input, shape index: {}]
  %s1 = inlined_call_operand.vmem [shape: bf16[2048,128], index: 1, kind: input, shape index: {}]
  %s2 = inlined_call_operand.vmem [shape: f32[2048,1], index: 2, kind: input, shape index: {}]
  %s3 = inlined_call_operand.vmem [shape: bf16[8,128,128], index: 3, kind: input, shape index: {}]
  %s4 = inlined_call_operand.vmem [shape: bf16[8,128,128], index: 4, kind: input, shape index: {}]
  %s5 = inlined_call_operand.vmem [shape: bf16[8,128,128], index: 5, kind: input, shape index: {}]
  %s6 = inlined_call_operand.vmem [shape: bf16[2048,128], index: 6, kind: output, shape index: {}]
  %s7 = sld [smem:[#allocation0]]
  $region61: #{_lambda_.4} parent=0
    _
  %s9 = ssub.s32 1, %s7
  %s10 = scalar_select 0, %s9, %s7
  %s11 = sshll.u32 %s0, 4
  %s12 = int_to_ptr.vmem [resolvable:$true] %s11
  %14 = dma.vmem_to_smem %s12, 16, [#allocation4], [#allocation3]
  %15 = dma.done [#allocation3], 16
  %16 = sfence
  loop: start=0, step=1, limit=18
  $region2: #{_lambda_.4} parent=0 // loop_pre_header
    _
  $region3: #{_lambda_.4} parent=0 // loop_header
    %s18 = sphi 0, %s22
    %p19 = scmp.ge.s32.totalorder %s18, 18
    %s25 = sphi 0, %s37
    %s26 = sphi 0, %s33
    %s27 = sphi 0, %s25
    %s28 = sphi 0, %s26
    %s29 = sphi 0, %s27
    %s30 = sphi 0, %s28
    %s40 = sphi 0, %s42
    %s43 = sphi 0, %s40
    %s44 = sphi 0, %s43
    %s60 = sphi 0, %s44
    %s66 = sphi 0, %s68
    %s69 = sphi 0, %s66
    %s70 = sphi 0, %s69
    %s86 = sphi 0, %s70
    %s96 = sphi 0, %s98
    %s99 = sphi 0, %s96
    %s100 = sphi 0, %s99
    %s116 = sphi 0, %s100
    %s126 = sphi 0, %s128
    %s129 = sphi 0, %s126
    %s130 = sphi 0, %s129
    %s146 = sphi 0, %s130
    %s156 = sphi 0, %s158
    %s159 = sphi 0, %s156
    %s160 = sphi 0, %s159
    %s176 = sphi 0, %s160
    %s182 = sphi 0, %s184
    %s185 = sphi 0, %s182
    %s186 = sphi 0, %s185
    %s202 = sphi 0, %s186
  $region4: #{_lambda_.4} parent=0 // loop_header_branch
    %21 = sbr.rel (%p19) target = $region8
  $region5: #{_lambda_.4} parent=0 // loop_body
    %s23 = ssub.s32 %s18, 1
    %s24 = ssub.s32 %s18, 2
    %s31 = sadd.s32 1, %s26
    %p32 = scmp.ge.s32.totalorder %s31, 1
    %s33 = scalar_select %p32, 0, %s31
    %s34 = sadd.s32 1, %s25
    %s35 = scalar_select %p32, %s34, %s25
    %p36 = scmp.ge.s32.totalorder %s35, 16
    %s37 = scalar_select %p36, 0, %s35
    %s38 = ssub.s32 %s25, %s37
    %p39 = scmp.eq.s32.totalorder %s38, 0
    %s41 = sadd.s32 %s40, 1
    %s42 = scalar_select %p39, %s40, %s41
    %p45 = pneg %p39
    %p46 = scmp.eq.s32.totalorder %s18, 15
    %p47 = por %p45, %p46
    %p48 = scmp.ne.s32.totalorder %s40, %s43
    %p49 = scmp.eq.s32.totalorder %s18, 0
    %p50 = por %p48, %p49
    %p51 = scmp.ne.s32.totalorder %s40, %s43
    %p52 = scmp.eq.s32.totalorder %s23, 15
    %p53 = por %p51, %p52
    %p54 = scmp.ne.s32.totalorder %s43, %s44
    %p55 = scmp.eq.s32.totalorder %s23, 0
    %p56 = por %p54, %p55
    %p57 = scmp.ne.s32.totalorder %s43, %s44
    %p58 = scmp.eq.s32.totalorder %s24, 15
    %p59 = por %p57, %p58
    %p61 = scmp.ne.s32.totalorder %s44, %s60
    %p62 = scmp.eq.s32.totalorder %s24, 0
    %p63 = por %p61, %p62
    %s64 = ssub.s32 %s25, %s37
    %p65 = scmp.eq.s32.totalorder %s64, 0
    %s67 = sadd.s32 %s66, 1
    %s68 = scalar_select %p65, %s66, %s67
    %p71 = pneg %p65
    %p72 = scmp.eq.s32.totalorder %s18, 15
    %p73 = por %p71, %p72
    %p74 = scmp.ne.s32.totalorder %s66, %s69
    %p75 = scmp.eq.s32.totalorder %s18, 0
    %p76 = por %p74, %p75
    %p77 = scmp.ne.s32.totalorder %s66, %s69
    %p78 = scmp.eq.s32.totalorder %s23, 15
    %p79 = por %p77, %p78
    %p80 = scmp.ne.s32.totalorder %s69, %s70
    %p81 = scmp.eq.s32.totalorder %s23, 0
    %p82 = por %p80, %p81
    %p83 = scmp.ne.s32.totalorder %s69, %s70
    %p84 = scmp.eq.s32.totalorder %s24, 15
    %p85 = por %p83, %p84
    %p87 = scmp.ne.s32.totalorder %s70, %s86
    %p88 = scmp.eq.s32.totalorder %s24, 0
    %p89 = por %p87, %p88
    %s90 = sld [smem:[#allocation4 + %s25]]
    %s91 = sld [smem:[#allocation4 + %s37]]
    %s92 = ssub.s32 %s90, %s91
    %s93 = ssub.s32 %s26, %s33
    %s94 = sor.u32 %s92, %s93
    %p95 = scmp.eq.s32.totalorder %s94, 0
    %s97 = sadd.s32 %s96, 1
    %s98 = scalar_select %p95, %s96, %s97
    %p101 = pneg %p95
    %p102 = scmp.eq.s32.totalorder %s18, 15
    %p103 = por %p101, %p102
    %p104 = scmp.ne.s32.totalorder %s96, %s99
    %p105 = scmp.eq.s32.totalorder %s18, 0
    %p106 = por %p104, %p105
    %p107 = scmp.ne.s32.totalorder %s96, %s99
    %p108 = scmp.eq.s32.totalorder %s23, 15
    %p109 = por %p107, %p108
    %p110 = scmp.ne.s32.totalorder %s99, %s100
    %p111 = scmp.eq.s32.totalorder %s23, 0
    %p112 = por %p110, %p111
    %p113 = scmp.ne.s32.totalorder %s99, %s100
    %p114 = scmp.eq.s32.totalorder %s24, 15
    %p115 = por %p113, %p114
    %p117 = scmp.ne.s32.totalorder %s100, %s116
    %p118 = scmp.eq.s32.totalorder %s24, 0
    %p119 = por %p117, %p118
    %s120 = sld [smem:[#allocation4 + %s25]]
    %s121 = sld [smem:[#allocation4 + %s37]]
    %s122 = ssub.s32 %s120, %s121
    %s123 = ssub.s32 %s26, %s33
    %s124 = sor.u32 %s122, %s123
    %p125 = scmp.eq.s32.totalorder %s124, 0
    %s127 = sadd.s32 %s126, 1
    %s128 = scalar_select %p125, %s126, %s127
    %p131 = pneg %p125
    %p132 = scmp.eq.s32.totalorder %s18, 15
    %p133 = por %p131, %p132
    %p134 = scmp.ne.s32.totalorder %s126, %s129
    %p135 = scmp.eq.s32.totalorder %s18, 0
    %p136 = por %p134, %p135
    %p137 = scmp.ne.s32.totalorder %s126, %s129
    %p138 = scmp.eq.s32.totalorder %s23, 15
    %p139 = por %p137, %p138
    %p140 = scmp.ne.s32.totalorder %s129, %s130
    %p141 = scmp.eq.s32.totalorder %s23, 0
    %p142 = por %p140, %p141
    %p143 = scmp.ne.s32.totalorder %s129, %s130
    %p144 = scmp.eq.s32.totalorder %s24, 15
    %p145 = por %p143, %p144
    %p147 = scmp.ne.s32.totalorder %s130, %s146
    %p148 = scmp.eq.s32.totalorder %s24, 0
    %p149 = por %p147, %p148
    %s150 = sld [smem:[#allocation4 + %s25]]
    %s151 = sld [smem:[#allocation4 + %s37]]
    %s152 = ssub.s32 %s150, %s151
    %s153 = ssub.s32 %s26, %s33
    %s154 = sor.u32 %s152, %s153
    %p155 = scmp.eq.s32.totalorder %s154, 0
    %s157 = sadd.s32 %s156, 1
    %s158 = scalar_select %p155, %s156, %s157
    %p161 = pneg %p155
    %p162 = scmp.eq.s32.totalorder %s18, 15
    %p163 = por %p161, %p162
    %p164 = scmp.ne.s32.totalorder %s156, %s159
    %p165 = scmp.eq.s32.totalorder %s18, 0
    %p166 = por %p164, %p165
    %p167 = scmp.ne.s32.totalorder %s156, %s159
    %p168 = scmp.eq.s32.totalorder %s23, 15
    %p169 = por %p167, %p168
    %p170 = scmp.ne.s32.totalorder %s159, %s160
    %p171 = scmp.eq.s32.totalorder %s23, 0
    %p172 = por %p170, %p171
    %p173 = scmp.ne.s32.totalorder %s159, %s160
    %p174 = scmp.eq.s32.totalorder %s24, 15
    %p175 = por %p173, %p174
    %p177 = scmp.ne.s32.totalorder %s160, %s176
    %p178 = scmp.eq.s32.totalorder %s24, 0
    %p179 = por %p177, %p178
    %s180 = ssub.s32 %s25, %s37
    %p181 = scmp.eq.s32.totalorder %s180, 0
    %s183 = sadd.s32 %s182, 1
    %s184 = scalar_select %p181, %s182, %s183
    %p187 = pneg %p181
    %p188 = scmp.eq.s32.totalorder %s18, 15
    %p189 = por %p187, %p188
    %p190 = scmp.ne.s32.totalorder %s182, %s185
    %p191 = scmp.eq.s32.totalorder %s18, 0
    %p192 = por %p190, %p191
    %p193 = scmp.ne.s32.totalorder %s182, %s185
    %p194 = scmp.eq.s32.totalorder %s23, 15
    %p195 = por %p193, %p194
    %p196 = scmp.ne.s32.totalorder %s185, %s186
    %p197 = scmp.eq.s32.totalorder %s23, 0
    %p198 = por %p196, %p197
    %p199 = scmp.ne.s32.totalorder %s185, %s186
    %p200 = scmp.eq.s32.totalorder %s24, 15
    %p201 = por %p199, %p200
    %p203 = scmp.ne.s32.totalorder %s186, %s202
    %p204 = scmp.eq.s32.totalorder %s24, 0
    %p205 = por %p203, %p204
    %p206 = scmp.le.s32.totalorder 1, %s18
    %p207 = scmp.lt.s32.totalorder %s18, 17
    %p208 = pnand %p206, %p207
    %p209 = pneg %p208
    // Predicated region
    $region9: #{_lambda_.4} parent=5 // pred_check
      _
    $region10: #{_lambda_.4} parent=5 // pred_check_branch
      %211 = sbr.rel (%p208) target = $region12
    $region11: #{_lambda_.4} parent=5 // pred_region
      %s212 = ssub.s32 %s18, 1
    $region12: #{_lambda_.4} parent=5 // pred_fallthru
      _
    %p213 = scmp.lt.s32.totalorder %s18, 16
    // Predicated region
    $region13: #{_lambda_.4} parent=5 // pred_check
      %p214 = pneg %p213
    $region14: #{_lambda_.4} parent=5 // pred_check_branch
      %216 = sbr.rel (%p214) target = $region16
    $region15: #{_lambda_.4} parent=5 // pred_region
      // Predicated region
      $region17: #{_lambda_.4} parent=15 // pred_check
        %p217 = pneg %p50
      $region18: #{_lambda_.4} parent=15 // pred_check_branch
        %219 = sbr.rel (%p217) target = $region20
      $region19: #{_lambda_.4} parent=15 // pred_region
        %s220 = smul.u32 16, %s25
        %p221 = scmp.lt.s32.totalorder %s220, 255
        %s222 = scalar_select %p221, %s220, 255
        %s223 = smul.addr %s222, 4
        %s224 = scalar_lea.vmem %s1, %s223
        %s225 = smul.u32 16, %s25
      $region20: #{_lambda_.4} parent=15 // pred_fallthru
        _
      // Predicated region
      $region21: #{_lambda_.4} parent=15 // pred_check
        %p226 = pneg %p76
      $region22: #{_lambda_.4} parent=15 // pred_check_branch
        %228 = sbr.rel (%p226) target = $region24
      $region23: #{_lambda_.4} parent=15 // pred_region
        %s229 = smul.u32 16, %s25
        %p230 = scmp.lt.s32.totalorder %s229, 255
        %s231 = scalar_select %p230, %s229, 255
        %s232 = smul.addr %s231, 8
        %s233 = scalar_lea.vmem %s2, %s232
        %s234 = smul.u32 16, %s25
      $region24: #{_lambda_.4} parent=15 // pred_fallthru
        _
      // Predicated region
      $region25: #{_lambda_.4} parent=15 // pred_check
        %p235 = pneg %p106
      $region26: #{_lambda_.4} parent=15 // pred_check_branch
        %237 = sbr.rel (%p235) target = $region28
      $region27: #{_lambda_.4} parent=15 // pred_region
        %s238 = sld [smem:[#allocation4 + %s25]]
        %p239 = scmp.lt.s32.totalorder %s238, 7
        %s240 = scalar_select %p239, %s238, 7
        %p241 = scmp.lt.s32.totalorder %s26, 0
        %s242 = scalar_select %p241, %s26, 0
        %s243 = smul.addr %s240, 16
        %s244 = sadd.s32 %s242, %s243
        %s245 = smul.addr %s244, 4
        %s246 = scalar_lea.vmem %s3, %s245
        %s247 = sld [smem:[#allocation4 + %s25]]
      $region28: #{_lambda_.4} parent=15 // pred_fallthru
        _
      // Predicated region
      $region29: #{_lambda_.4} parent=15 // pred_check
        %p248 = pneg %p136
      $region30: #{_lambda_.4} parent=15 // pred_check_branch
        %250 = sbr.rel (%p248) target = $region32
      $region31: #{_lambda_.4} parent=15 // pred_region
        %s251 = sld [smem:[#allocation4 + %s25]]
        %p252 = scmp.lt.s32.totalorder %s251, 7
        %s253 = scalar_select %p252, %s251, 7
        %p254 = scmp.lt.s32.totalorder %s26, 0
        %s255 = scalar_select %p254, %s26, 0
        %s256 = smul.addr %s253, 16
        %s257 = sadd.s32 %s255, %s256
        %s258 = smul.addr %s257, 4
        %s259 = scalar_lea.vmem %s4, %s258
        %s260 = sld [smem:[#allocation4 + %s25]]
      $region32: #{_lambda_.4} parent=15 // pred_fallthru
        _
      // Predicated region
      $region33: #{_lambda_.4} parent=15 // pred_check
        %p261 = pneg %p166
      $region34: #{_lambda_.4} parent=15 // pred_check_branch
        %263 = sbr.rel (%p261) target = $region36
      $region35: #{_lambda_.4} parent=15 // pred_region
        %s264 = sld [smem:[#allocation4 + %s25]]
        %s265 = smul.u32 16, %s26
        %p266 = scmp.lt.s32.totalorder %s264, 7
        %s267 = scalar_select %p266, %s264, 7
        %p268 = scmp.lt.s32.totalorder %s265, 15
        %s269 = scalar_select %p268, %s265, 15
        %s270 = smul.addr %s267, 16
        %s271 = sadd.s32 %s269, %s270
        %s272 = smul.addr %s271, 4
        %s273 = scalar_lea.vmem %s5, %s272
        %s274 = sld [smem:[#allocation4 + %s25]]
        %s275 = smul.u32 16, %s26
      $region36: #{_lambda_.4} parent=15 // pred_fallthru
        _
    $region16: #{_lambda_.4} parent=5 // pred_fallthru
      _
    %p276 = scmp.le.s32.totalorder 1, %s18
    %p277 = scmp.lt.s32.totalorder %s18, 17
    %p278 = pnand %p276, %p277
    %p279 = pneg %p278
    // Predicated region
    $region37: #{_lambda_.4} parent=5 // pred_check
      _
    $region38: #{_lambda_.4} parent=5 // pred_check_branch
      %281 = sbr.rel (%p278) target = $region40
    $region39: #{_lambda_.4} parent=5 // pred_region
      %s282 = ssub.s32 %s18, 1
      %s283 = smul.u32 16, %s27
      %p284 = scmp.lt.s32.totalorder %s283, 255
      %s285 = scalar_select %p284, %s283, 255
      %s286 = smul.addr %s285, 4
      %s287 = scalar_lea.vmem %s1, %s286
      %p288 = pneg %p56
      %p289 = pneg %p53
      %s290 = smul.u32 16, %s27
      %p291 = scmp.lt.s32.totalorder %s290, 255
      %s292 = scalar_select %p291, %s290, 255
      %s293 = smul.addr %s292, 8
      %s294 = scalar_lea.vmem %s2, %s293
      %p295 = pneg %p82
      %p296 = pneg %p79
      %s297 = sld [smem:[#allocation4 + %s27]]
      %p298 = scmp.lt.s32.totalorder %s297, 7
      %s299 = scalar_select %p298, %s297, 7
      %p300 = scmp.lt.s32.totalorder %s28, 0
      %s301 = scalar_select %p300, %s28, 0
      %s302 = smul.addr %s299, 16
      %s303 = sadd.s32 %s301, %s302
      %s304 = smul.addr %s303, 4
      %s305 = scalar_lea.vmem %s3, %s304
      %p306 = pneg %p112
      %p307 = pneg %p109
      %s308 = sld [smem:[#allocation4 + %s27]]
      %p309 = scmp.lt.s32.totalorder %s308, 7
      %s310 = scalar_select %p309, %s308, 7
      %p311 = scmp.lt.s32.totalorder %s28, 0
      %s312 = scalar_select %p311, %s28, 0
      %s313 = smul.addr %s310, 16
      %s314 = sadd.s32 %s312, %s313
      %s315 = smul.addr %s314, 4
      %s316 = scalar_lea.vmem %s4, %s315
      %p317 = pneg %p142
      %p318 = pneg %p139
      %s319 = sld [smem:[#allocation4 + %s27]]
      %s320 = smul.u32 16, %s28
      %p321 = scmp.lt.s32.totalorder %s319, 7
      %s322 = scalar_select %p321, %s319, 7
      %p323 = scmp.lt.s32.totalorder %s320, 15
      %s324 = scalar_select %p323, %s320, 15
      %s325 = smul.addr %s322, 16
      %s326 = sadd.s32 %s324, %s325
      %s327 = smul.addr %s326, 4
      %s328 = scalar_lea.vmem %s5, %s327
      %p329 = pneg %p172
      %p330 = pneg %p169
      %p331 = pneg %p198
      %p332 = pneg %p195
      %s333 = smul.u32 16, %s27
      %p334 = scmp.lt.s32.totalorder %s333, 255
      %s335 = scalar_select %p334, %s333, 255
      %s336 = smul.addr %s335, 4
      %s337 = scalar_lea.vmem %s6, %s336
      %s338 = smul.u32 16, %s27
      %p339 = scmp.lt.s32.totalorder %s338, 255
      %s340 = scalar_select %p339, %s338, 255
      %s341 = smul.addr %s340, 4
      %s342 = scalar_lea.vmem %s1, %s341
      %s343 = smul.u32 16, %s27
      %s344 = smul.u32 16, %s27
      %p345 = scmp.lt.s32.totalorder %s344, 255
      %s346 = scalar_select %p345, %s344, 255
      %s347 = smul.addr %s346, 8
      %s348 = scalar_lea.vmem %s2, %s347
      %s349 = smul.u32 16, %s27
      %s350 = sld [smem:[#allocation4 + %s27]]
      %p351 = scmp.lt.s32.totalorder %s350, 7
      %s352 = scalar_select %p351, %s350, 7
      %p353 = scmp.lt.s32.totalorder %s28, 0
      %s354 = scalar_select %p353, %s28, 0
      %s355 = smul.addr %s352, 16
      %s356 = sadd.s32 %s354, %s355
      %s357 = smul.addr %s356, 4
      %s358 = scalar_lea.vmem %s3, %s357
      %s359 = sld [smem:[#allocation4 + %s27]]
      %s360 = sld [smem:[#allocation4 + %s27]]
      %p361 = scmp.lt.s32.totalorder %s360, 7
      %s362 = scalar_select %p361, %s360, 7
      %p363 = scmp.lt.s32.totalorder %s28, 0
      %s364 = scalar_select %p363, %s28, 0
      %s365 = smul.addr %s362, 16
      %s366 = sadd.s32 %s364, %s365
      %s367 = smul.addr %s366, 4
      %s368 = scalar_lea.vmem %s4, %s367
      %s369 = sld [smem:[#allocation4 + %s27]]
      %s370 = sld [smem:[#allocation4 + %s27]]
      %s371 = smul.u32 16, %s28
      %p372 = scmp.lt.s32.totalorder %s370, 7
      %s373 = scalar_select %p372, %s370, 7
      %p374 = scmp.lt.s32.totalorder %s371, 15
      %s375 = scalar_select %p374, %s371, 15
      %s376 = smul.addr %s373, 16
      %s377 = sadd.s32 %s375, %s376
      %s378 = smul.addr %s377, 4
      %s379 = scalar_lea.vmem %s5, %s378
      %s380 = sld [smem:[#allocation4 + %s27]]
      %s381 = smul.u32 16, %s28
      %s382 = smul.u32 16, %s27
      %p383 = scmp.lt.s32.totalorder %s382, 255
      %s384 = scalar_select %p383, %s382, 255
      %s385 = smul.addr %s384, 4
      %s386 = scalar_lea.vmem %s6, %s385
      %s387 = smul.u32 16, %s27
      %p389 = scmp.eq.s32.totalorder %s28, 0
      // Predicated region
      $region41: #{_lambda_.4} parent=39 // pred_check
        %p390 = pneg %p389
      $region42: #{_lambda_.4} parent=39 // pred_check_branch
        %392 = sbr.rel (%p390) target = $region44
      $region43: #{_lambda_.4} parent=39 // pred_region
        %393 = vst [vmem:[#allocation2] sm:$0xff] 0.0
        %394 = vst [vmem:[#allocation2 + $0x8] sm:$0xff] 0.0
        %395 = vst [vmem:[#allocation2 + $0x10] sm:$0xff] 0.0
        %396 = vst [vmem:[#allocation2 + $0x18] sm:$0xff] 0.0
        %397 = vst [vmem:[#allocation2 + $0x20] sm:$0xff] 0.0
        %398 = vst [vmem:[#allocation2 + $0x28] sm:$0xff] 0.0
        %399 = vst [vmem:[#allocation2 + $0x30] sm:$0xff] 0.0
        %400 = vst [vmem:[#allocation2 + $0x38] sm:$0xff] 0.0
        %401 = vst [vmem:[#allocation2 + $0x40] sm:$0xff] 0.0
        %402 = vst [vmem:[#allocation2 + $0x48] sm:$0xff] 0.0
        %403 = vst [vmem:[#allocation2 + $0x50] sm:$0xff] 0.0
        %404 = vst [vmem:[#allocation2 + $0x58] sm:$0xff] 0.0
        %405 = vst [vmem:[#allocation2 + $0x60] sm:$0xff] 0.0
        %406 = vst [vmem:[#allocation2 + $0x68] sm:$0xff] 0.0
        %407 = vst [vmem:[#allocation2 + $0x70] sm:$0xff] 0.0
        %408 = vst [vmem:[#allocation2 + $0x78] sm:$0xff] 0.0
      $region44: #{_lambda_.4} parent=39 // pred_fallthru
        _
      %v409 = vld [vmem:[%s342] sm:$0xf]
      %v410 = vld [vmem:[%s342 + $0x4] sm:$0xf]
      %v411 = vld [vmem:[%s342 + $0x8] sm:$0xf]
      %v412 = vld [vmem:[%s342 + $0xc] sm:$0xf]
      %v413 = vld [vmem:[%s342 + $0x10] sm:$0xf]
      %v414 = vld [vmem:[%s342 + $0x14] sm:$0xf]
      %v415 = vld [vmem:[%s342 + $0x18] sm:$0xf]
      %v416 = vld [vmem:[%s342 + $0x1c] sm:$0xf]
      %v417 = vld [vmem:[%s342 + $0x20] sm:$0xf]
      %v418 = vld [vmem:[%s342 + $0x24] sm:$0xf]
      %v419 = vld [vmem:[%s342 + $0x28] sm:$0xf]
      %v420 = vld [vmem:[%s342 + $0x2c] sm:$0xf]
      %v421 = vld [vmem:[%s342 + $0x30] sm:$0xf]
      %v422 = vld [vmem:[%s342 + $0x34] sm:$0xf]
      %v423 = vld [vmem:[%s342 + $0x38] sm:$0xf]
      %v424 = vld [vmem:[%s342 + $0x3c] sm:$0xf]
      %v425 = vld [vmem:[%s358] sm:$0xf]
      %v426 = vld [vmem:[%s358 + $0x4] sm:$0xf]
      %v427 = vld [vmem:[%s358 + $0x8] sm:$0xf]
      %v428 = vld [vmem:[%s358 + $0xc] sm:$0xf]
      %v429 = vld [vmem:[%s358 + $0x10] sm:$0xf]
      %v430 = vld [vmem:[%s358 + $0x14] sm:$0xf]
      %v431 = vld [vmem:[%s358 + $0x18] sm:$0xf]
      %v432 = vld [vmem:[%s358 + $0x1c] sm:$0xf]
      %v433 = vld [vmem:[%s358 + $0x20] sm:$0xf]
      %v434 = vld [vmem:[%s358 + $0x24] sm:$0xf]
      %v435 = vld [vmem:[%s358 + $0x28] sm:$0xf]
      %v436 = vld [vmem:[%s358 + $0x2c] sm:$0xf]
      %v437 = vld [vmem:[%s358 + $0x30] sm:$0xf]
      %v438 = vld [vmem:[%s358 + $0x34] sm:$0xf]
      %v439 = vld [vmem:[%s358 + $0x38] sm:$0xf]
      %v440 = vld [vmem:[%s358 + $0x3c] sm:$0xf]
      %v457 = vunpack.c.l.b16 %v409
      %v458 = vunpack.c.l.b16 %v410
      %v459 = vunpack.c.l.b16 %v411
      %v460 = vunpack.c.l.b16 %v412
      %v461 = vunpack.c.l.b16 %v413
      %v462 = vunpack.c.l.b16 %v414
      %v463 = vunpack.c.l.b16 %v415
      %v464 = vunpack.c.l.b16 %v416
      %v465 = vunpack.c.l.b16 %v417
      %v466 = vunpack.c.l.b16 %v418
      %v467 = vunpack.c.l.b16 %v419
      %v468 = vunpack.c.l.b16 %v420
      %v469 = vunpack.c.l.b16 %v421
      %v470 = vunpack.c.l.b16 %v422
      %v471 = vunpack.c.l.b16 %v423
      %v472 = vunpack.c.l.b16 %v424
      %v473 = vpack.c.b16 %v458, %v457
      %v474 = vpack.c.b16 %v460, %v459
      %v475 = vpack.c.b16 %v462, %v461
      %v476 = vpack.c.b16 %v464, %v463
      %v477 = vpack.c.b16 %v466, %v465
      %v478 = vpack.c.b16 %v468, %v467
      %v479 = vpack.c.b16 %v470, %v469
      %v480 = vpack.c.b16 %v472, %v471
      %v505 = vunpack.c.l.b16 %v425
      %v506 = vunpack.c.l.b16 %v426
      %v507 = vunpack.c.l.b16 %v427
      %v508 = vunpack.c.l.b16 %v428
      %v509 = vunpack.c.l.b16 %v429
      %v510 = vunpack.c.l.b16 %v430
      %v511 = vunpack.c.l.b16 %v431
      %v512 = vunpack.c.l.b16 %v432
      %v513 = vunpack.c.l.b16 %v433
      %v514 = vunpack.c.l.b16 %v434
      %v515 = vunpack.c.l.b16 %v435
      %v516 = vunpack.c.l.b16 %v436
      %v517 = vunpack.c.l.b16 %v437
      %v518 = vunpack.c.l.b16 %v438
      %v519 = vunpack.c.l.b16 %v439
      %v520 = vunpack.c.l.b16 %v440
      %v521 = vpack.c.b16 %v506, %v505
      %v522 = vpack.c.b16 %v508, %v507
      %v523 = vpack.c.b16 %v510, %v509
      %v524 = vpack.c.b16 %v512, %v511
      %v525 = vpack.c.b16 %v514, %v513
      %v526 = vpack.c.b16 %v516, %v515
      %v527 = vpack.c.b16 %v518, %v517
      %v528 = vpack.c.b16 %v520, %v519
      %537 = vmatprep.subr.bf16.mxu0 0
      %538 = vmatpush1.bf16.msra.mxu0 %v528
      %539 = vmatprep.subr.bf16.mxu0 0
      %540 = vmatpush1.bf16.msra.mxu0 %v527
      %541 = vmatprep.subr.bf16.mxu0 0
      %542 = vmatpush1.bf16.msra.mxu0 %v526
      %543 = vmatprep.subr.bf16.mxu0 0
      %544 = vmatpush1.bf16.msra.mxu0 %v525
      %545 = vmatprep.subr.bf16.mxu0 0
      %546 = vmatpush1.bf16.msra.mxu0 %v524
      %547 = vmatprep.subr.bf16.mxu0 0
      %548 = vmatpush1.bf16.msra.mxu0 %v523
      %549 = vmatprep.subr.bf16.mxu0 0
      %550 = vmatpush1.bf16.msra.mxu0 %v522
      %551 = vmatprep.subr.bf16.mxu0 0
      %552 = vmatpush1.bf16.msra.mxu0 %v521
      %553 = vmatprep.subr.bf16.mxu0 0
      %554 = vmatpush2.bf16.msra.mxu0 0
      %555 = vmatprep.subr.bf16.mxu0 0
      %556 = vmatpush2.bf16.msra.mxu0 0
      %557 = vmatprep.subr.bf16.mxu0 0
      %558 = vmatpush2.bf16.msra.mxu0 0
      %559 = vmatprep.subr.bf16.mxu0 0
      %560 = vmatpush2.bf16.msra.mxu0 0
      %561 = vmatprep.subr.bf16.mxu0 0
      %562 = vmatpush2.bf16.msra.mxu0 0
      %563 = vmatprep.subr.bf16.mxu0 0
      %564 = vmatpush2.bf16.msra.mxu0 0
      %565 = vmatprep.subr.bf16.mxu0 0
      %566 = vmatpush2.bf16.msra.mxu0 0
      %567 = vmatprep.subr.bf16.mxu0 0
      %568 = vmatpush2.bf16.msra.mxu0 0
      %569 = vmatprep.mubr.bf16.mxu0 0
      %570 = vmatmul.mubr.bf16.gmra.mxu0 %v473
      %v571 = vpop.f32.mrf.mxu0
      %v572 = vadd.f32 0.0, %v571
      %v573 = vpop.f32.mrf.mxu0
      %v574 = vpop.f32.mrf.mxu0
      %v575 = vadd.f32 0.0, %v574
      %v576 = vpop.f32.mrf.mxu0
      %577 = vmatprep.mubr.bf16.mxu0 0
      %578 = vmatmul.mubr.bf16.gmra.mxu0 %v474
      %v579 = vpop.f32.mrf.mxu0
      %v580 = vadd.f32 0.0, %v579
      %v581 = vpop.f32.mrf.mxu0
      %v582 = vpop.f32.mrf.mxu0
      %v583 = vadd.f32 0.0, %v582
      %v584 = vpop.f32.mrf.mxu0
      %585 = vmatprep.mubr.bf16.mxu0 0
      %586 = vmatmul.mubr.bf16.gmra.mxu0 %v475
      %v587 = vpop.f32.mrf.mxu0
      %v588 = vadd.f32 0.0, %v587
      %v589 = vpop.f32.mrf.mxu0
      %v590 = vpop.f32.mrf.mxu0
      %v591 = vadd.f32 0.0, %v590
      %v592 = vpop.f32.mrf.mxu0
      %593 = vmatprep.mubr.bf16.mxu0 0
      %594 = vmatmul.mubr.bf16.gmra.mxu0 %v476
      %v595 = vpop.f32.mrf.mxu0
      %v596 = vadd.f32 0.0, %v595
      %v597 = vpop.f32.mrf.mxu0
      %v598 = vpop.f32.mrf.mxu0
      %v599 = vadd.f32 0.0, %v598
      %v600 = vpop.f32.mrf.mxu0
      %601 = vmatprep.mubr.bf16.mxu0 0
      %602 = vmatmul.mubr.bf16.gmra.mxu0 %v477
      %v603 = vpop.f32.mrf.mxu0
      %v604 = vadd.f32 0.0, %v603
      %v605 = vpop.f32.mrf.mxu0
      %v606 = vpop.f32.mrf.mxu0
      %v607 = vadd.f32 0.0, %v606
      %v608 = vpop.f32.mrf.mxu0
      %609 = vmatprep.mubr.bf16.mxu0 0
      %610 = vmatmul.mubr.bf16.gmra.mxu0 %v478
      %v611 = vpop.f32.mrf.mxu0
      %v612 = vadd.f32 0.0, %v611
      %v613 = vpop.f32.mrf.mxu0
      %v614 = vpop.f32.mrf.mxu0
      %v615 = vadd.f32 0.0, %v614
      %v616 = vpop.f32.mrf.mxu0
      %617 = vmatprep.mubr.bf16.mxu0 0
      %618 = vmatmul.mubr.bf16.gmra.mxu0 %v479
      %v619 = vpop.f32.mrf.mxu0
      %v620 = vadd.f32 0.0, %v619
      %v621 = vpop.f32.mrf.mxu0
      %v622 = vpop.f32.mrf.mxu0
      %v623 = vadd.f32 0.0, %v622
      %v624 = vpop.f32.mrf.mxu0
      %625 = vmatprep.mubr.bf16.mxu0 0
      %626 = vmatmul.mubr.bf16.gmra.mxu0 %v480
      %v627 = vpop.f32.mrf.mxu0
      %v628 = vadd.f32 0.0, %v627
      %v629 = vpop.f32.mrf.mxu0
      %v630 = vpop.f32.mrf.mxu0
      %v631 = vadd.f32 0.0, %v630
      %v632 = vpop.f32.mrf.mxu0
      %633 = vdwg.mxu0
      %v634 = vxor.u32 %v572, 2147483648
      %v635 = vxor.u32 %v575, 2147483648
      %v636 = vxor.u32 %v580, 2147483648
      %v637 = vxor.u32 %v583, 2147483648
      %v638 = vxor.u32 %v588, 2147483648
      %v639 = vxor.u32 %v591, 2147483648
      %v640 = vxor.u32 %v596, 2147483648
      %v641 = vxor.u32 %v599, 2147483648
      %v642 = vxor.u32 %v604, 2147483648
      %v643 = vxor.u32 %v607, 2147483648
      %v644 = vxor.u32 %v612, 2147483648
      %v645 = vxor.u32 %v615, 2147483648
      %v646 = vxor.u32 %v620, 2147483648
      %v647 = vxor.u32 %v623, 2147483648
      %v648 = vxor.u32 %v628, 2147483648
      %v649 = vxor.u32 %v631, 2147483648
      %v650 = vmul.f32 %v634, 1.442695
      %v651 = vpow.pop %v650
      %v652 = vmul.f32 %v635, 1.442695
      %v653 = vpow.pop %v652
      %v654 = vmul.f32 %v636, 1.442695
      %v655 = vpow.pop %v654
      %v656 = vmul.f32 %v637, 1.442695
      %v657 = vpow.pop %v656
      %v658 = vmul.f32 %v638, 1.442695
      %v659 = vpow.pop %v658
      %v660 = vmul.f32 %v639, 1.442695
      %v661 = vpow.pop %v660
      %v662 = vmul.f32 %v640, 1.442695
      %v663 = vpow.pop %v662
      %v664 = vmul.f32 %v641, 1.442695
      %v665 = vpow.pop %v664
      %v666 = vmul.f32 %v642, 1.442695
      %v667 = vpow.pop %v666
      %v668 = vmul.f32 %v643, 1.442695
      %v669 = vpow.pop %v668
      %v670 = vmul.f32 %v644, 1.442695
      %v671 = vpow.pop %v670
      %v672 = vmul.f32 %v645, 1.442695
      %v673 = vpow.pop %v672
      %v674 = vmul.f32 %v646, 1.442695
      %v675 = vpow.pop %v674
      %v676 = vmul.f32 %v647, 1.442695
      %v677 = vpow.pop %v676
      %v678 = vmul.f32 %v648, 1.442695
      %v679 = vpow.pop %v678
      %v680 = vmul.f32 %v649, 1.442695
      %v681 = vpow.pop %v680
      %v682 = vadd.f32 %v651, 1.0
      %v683 = vadd.f32 %v653, 1.0
      %v684 = vadd.f32 %v655, 1.0
      %v685 = vadd.f32 %v657, 1.0
      %v686 = vadd.f32 %v659, 1.0
      %v687 = vadd.f32 %v661, 1.0
      %v688 = vadd.f32 %v663, 1.0
      %v689 = vadd.f32 %v665, 1.0
      %v690 = vadd.f32 %v667, 1.0
      %v691 = vadd.f32 %v669, 1.0
      %v692 = vadd.f32 %v671, 1.0
      %v693 = vadd.f32 %v673, 1.0
      %v694 = vadd.f32 %v675, 1.0
      %v695 = vadd.f32 %v677, 1.0
      %v696 = vadd.f32 %v679, 1.0
      %v697 = vadd.f32 %v681, 1.0
      %v698 = vrcp.pop %v682
      %v699 = vmul.f32 1.0, %v698
      %v700 = vrcp.pop %v683
      %v701 = vmul.f32 1.0, %v700
      %v702 = vrcp.pop %v684
      %v703 = vmul.f32 1.0, %v702
      %v704 = vrcp.pop %v685
      %v705 = vmul.f32 1.0, %v704
      %v706 = vrcp.pop %v686
      %v707 = vmul.f32 1.0, %v706
      %v708 = vrcp.pop %v687
      %v709 = vmul.f32 1.0, %v708
      %v710 = vrcp.pop %v688
      %v711 = vmul.f32 1.0, %v710
      %v712 = vrcp.pop %v689
      %v713 = vmul.f32 1.0, %v712
      %v714 = vrcp.pop %v690
      %v715 = vmul.f32 1.0, %v714
      %v716 = vrcp.pop %v691
      %v717 = vmul.f32 1.0, %v716
      %v718 = vrcp.pop %v692
      %v719 = vmul.f32 1.0, %v718
      %v720 = vrcp.pop %v693
      %v721 = vmul.f32 1.0, %v720
      %v722 = vrcp.pop %v694
      %v723 = vmul.f32 1.0, %v722
      %v724 = vrcp.pop %v695
      %v725 = vmul.f32 1.0, %v724
      %v726 = vrcp.pop %v696
      %v727 = vmul.f32 1.0, %v726
      %v728 = vrcp.pop %v697
      %v729 = vmul.f32 1.0, %v728
      %v730 = vmul.f32 %v572, %v699
      %v731 = vmul.f32 %v575, %v701
      %v732 = vmul.f32 %v580, %v703
      %v733 = vmul.f32 %v583, %v705
      %v734 = vmul.f32 %v588, %v707
      %v735 = vmul.f32 %v591, %v709
      %v736 = vmul.f32 %v596, %v711
      %v737 = vmul.f32 %v599, %v713
      %v738 = vmul.f32 %v604, %v715
      %v739 = vmul.f32 %v607, %v717
      %v740 = vmul.f32 %v612, %v719
      %v741 = vmul.f32 %v615, %v721
      %v742 = vmul.f32 %v620, %v723
      %v743 = vmul.f32 %v623, %v725
      %v744 = vmul.f32 %v628, %v727
      %v745 = vmul.f32 %v631, %v729
      %v746 = vld [vmem:[%s368] sm:$0xf]
      %v747 = vld [vmem:[%s368 + $0x4] sm:$0xf]
      %v748 = vld [vmem:[%s368 + $0x8] sm:$0xf]
      %v749 = vld [vmem:[%s368 + $0xc] sm:$0xf]
      %v750 = vld [vmem:[%s368 + $0x10] sm:$0xf]
      %v751 = vld [vmem:[%s368 + $0x14] sm:$0xf]
      %v752 = vld [vmem:[%s368 + $0x18] sm:$0xf]
      %v753 = vld [vmem:[%s368 + $0x1c] sm:$0xf]
      %v754 = vld [vmem:[%s368 + $0x20] sm:$0xf]
      %v755 = vld [vmem:[%s368 + $0x24] sm:$0xf]
      %v756 = vld [vmem:[%s368 + $0x28] sm:$0xf]
      %v757 = vld [vmem:[%s368 + $0x2c] sm:$0xf]
      %v758 = vld [vmem:[%s368 + $0x30] sm:$0xf]
      %v759 = vld [vmem:[%s368 + $0x34] sm:$0xf]
      %v760 = vld [vmem:[%s368 + $0x38] sm:$0xf]
      %v761 = vld [vmem:[%s368 + $0x3c] sm:$0xf]
      %v778 = vunpack.c.l.b16 %v746
      %v779 = vunpack.c.l.b16 %v747
      %v780 = vunpack.c.l.b16 %v748
      %v781 = vunpack.c.l.b16 %v749
      %v782 = vunpack.c.l.b16 %v750
      %v783 = vunpack.c.l.b16 %v751
      %v784 = vunpack.c.l.b16 %v752
      %v785 = vunpack.c.l.b16 %v753
      %v786 = vunpack.c.l.b16 %v754
      %v787 = vunpack.c.l.b16 %v755
      %v788 = vunpack.c.l.b16 %v756
      %v789 = vunpack.c.l.b16 %v757
      %v790 = vunpack.c.l.b16 %v758
      %v791 = vunpack.c.l.b16 %v759
      %v792 = vunpack.c.l.b16 %v760
      %v793 = vunpack.c.l.b16 %v761
      %v794 = vpack.c.b16 %v779, %v778
      %v795 = vpack.c.b16 %v781, %v780
      %v796 = vpack.c.b16 %v783, %v782
      %v797 = vpack.c.b16 %v785, %v784
      %v798 = vpack.c.b16 %v787, %v786
      %v799 = vpack.c.b16 %v789, %v788
      %v800 = vpack.c.b16 %v791, %v790
      %v801 = vpack.c.b16 %v793, %v792
      %810 = vmatprep.subr.bf16.mxu0 0
      %811 = vmatpush1.bf16.msra.mxu0 %v801
      %812 = vmatprep.subr.bf16.mxu0 0
      %813 = vmatpush1.bf16.msra.mxu0 %v800
      %814 = vmatprep.subr.bf16.mxu0 0
      %815 = vmatpush1.bf16.msra.mxu0 %v799
      %816 = vmatprep.subr.bf16.mxu0 0
      %817 = vmatpush1.bf16.msra.mxu0 %v798
      %818 = vmatprep.subr.bf16.mxu0 0
      %819 = vmatpush1.bf16.msra.mxu0 %v797
      %820 = vmatprep.subr.bf16.mxu0 0
      %821 = vmatpush1.bf16.msra.mxu0 %v796
      %822 = vmatprep.subr.bf16.mxu0 0
      %823 = vmatpush1.bf16.msra.mxu0 %v795
      %824 = vmatprep.subr.bf16.mxu0 0
      %825 = vmatpush1.bf16.msra.mxu0 %v794
      %826 = vmatprep.subr.bf16.mxu0 0
      %827 = vmatpush2.bf16.msra.mxu0 0
      %828 = vmatprep.subr.bf16.mxu0 0
      %829 = vmatpush2.bf16.msra.mxu0 0
      %830 = vmatprep.subr.bf16.mxu0 0
      %831 = vmatpush2.bf16.msra.mxu0 0
      %832 = vmatprep.subr.bf16.mxu0 0
      %833 = vmatpush2.bf16.msra.mxu0 0
      %834 = vmatprep.subr.bf16.mxu0 0
      %835 = vmatpush2.bf16.msra.mxu0 0
      %836 = vmatprep.subr.bf16.mxu0 0
      %837 = vmatpush2.bf16.msra.mxu0 0
      %838 = vmatprep.subr.bf16.mxu0 0
      %839 = vmatpush2.bf16.msra.mxu0 0
      %840 = vmatprep.subr.bf16.mxu0 0
      %841 = vmatpush2.bf16.msra.mxu0 0
      %842 = vmatprep.mubr.bf16.mxu0 0
      %843 = vmatmul.mubr.bf16.gmra.mxu0 %v473
      %v844 = vpop.f32.mrf.mxu0
      %v845 = vadd.f32 0.0, %v844
      %v846 = vpop.f32.mrf.mxu0
      %v847 = vpop.f32.mrf.mxu0
      %v848 = vadd.f32 0.0, %v847
      %v849 = vpop.f32.mrf.mxu0
      %850 = vmatprep.mubr.bf16.mxu0 0
      %851 = vmatmul.mubr.bf16.gmra.mxu0 %v474
      %v852 = vpop.f32.mrf.mxu0
      %v853 = vadd.f32 0.0, %v852
      %v854 = vpop.f32.mrf.mxu0
      %v855 = vpop.f32.mrf.mxu0
      %v856 = vadd.f32 0.0, %v855
      %v857 = vpop.f32.mrf.mxu0
      %858 = vmatprep.mubr.bf16.mxu0 0
      %859 = vmatmul.mubr.bf16.gmra.mxu0 %v475
      %v860 = vpop.f32.mrf.mxu0
      %v861 = vadd.f32 0.0, %v860
      %v862 = vpop.f32.mrf.mxu0
      %v863 = vpop.f32.mrf.mxu0
      %v864 = vadd.f32 0.0, %v863
      %v865 = vpop.f32.mrf.mxu0
      %866 = vmatprep.mubr.bf16.mxu0 0
      %867 = vmatmul.mubr.bf16.gmra.mxu0 %v476
      %v868 = vpop.f32.mrf.mxu0
      %v869 = vadd.f32 0.0, %v868
      %v870 = vpop.f32.mrf.mxu0
      %v871 = vpop.f32.mrf.mxu0
      %v872 = vadd.f32 0.0, %v871
      %v873 = vpop.f32.mrf.mxu0
      %874 = vmatprep.mubr.bf16.mxu0 0
      %875 = vmatmul.mubr.bf16.gmra.mxu0 %v477
      %v876 = vpop.f32.mrf.mxu0
      %v877 = vadd.f32 0.0, %v876
      %v878 = vpop.f32.mrf.mxu0
      %v879 = vpop.f32.mrf.mxu0
      %v880 = vadd.f32 0.0, %v879
      %v881 = vpop.f32.mrf.mxu0
      %882 = vmatprep.mubr.bf16.mxu0 0
      %883 = vmatmul.mubr.bf16.gmra.mxu0 %v478
      %v884 = vpop.f32.mrf.mxu0
      %v885 = vadd.f32 0.0, %v884
      %v886 = vpop.f32.mrf.mxu0
      %v887 = vpop.f32.mrf.mxu0
      %v888 = vadd.f32 0.0, %v887
      %v889 = vpop.f32.mrf.mxu0
      %890 = vmatprep.mubr.bf16.mxu0 0
      %891 = vmatmul.mubr.bf16.gmra.mxu0 %v479
      %v892 = vpop.f32.mrf.mxu0
      %v893 = vadd.f32 0.0, %v892
      %v894 = vpop.f32.mrf.mxu0
      %v895 = vpop.f32.mrf.mxu0
      %v896 = vadd.f32 0.0, %v895
      %v897 = vpop.f32.mrf.mxu0
      %898 = vmatprep.mubr.bf16.mxu0 0
      %899 = vmatmul.mubr.bf16.gmra.mxu0 %v480
      %v900 = vpop.f32.mrf.mxu0
      %v901 = vadd.f32 0.0, %v900
      %v902 = vpop.f32.mrf.mxu0
      %v903 = vpop.f32.mrf.mxu0
      %v904 = vadd.f32 0.0, %v903
      %v905 = vpop.f32.mrf.mxu0
      %906 = vdwg.mxu0
      %v907 = vmul.f32 %v730, %v845
      %v908 = vmul.f32 %v731, %v848
      %v909 = vmul.f32 %v732, %v853
      %v910 = vmul.f32 %v733, %v856
      %v911 = vmul.f32 %v734, %v861
      %v912 = vmul.f32 %v735, %v864
      %v913 = vmul.f32 %v736, %v869
      %v914 = vmul.f32 %v737, %v872
      %v915 = vmul.f32 %v738, %v877
      %v916 = vmul.f32 %v739, %v880
      %v917 = vmul.f32 %v740, %v885
      %v918 = vmul.f32 %v741, %v888
      %v919 = vmul.f32 %v742, %v893
      %v920 = vmul.f32 %v743, %v896
      %v921 = vmul.f32 %v744, %v901
      %v922 = vmul.f32 %v745, %v904
      %v923 = vld [vmem:[#allocation2] sm:$0xff]
      %v924 = vld [vmem:[#allocation2 + $0x8] sm:$0xff]
      %v925 = vld [vmem:[#allocation2 + $0x10] sm:$0xff]
      %v926 = vld [vmem:[#allocation2 + $0x18] sm:$0xff]
      %v927 = vld [vmem:[#allocation2 + $0x20] sm:$0xff]
      %v928 = vld [vmem:[#allocation2 + $0x28] sm:$0xff]
      %v929 = vld [vmem:[#allocation2 + $0x30] sm:$0xff]
      %v930 = vld [vmem:[#allocation2 + $0x38] sm:$0xff]
      %v931 = vld [vmem:[#allocation2 + $0x40] sm:$0xff]
      %v932 = vld [vmem:[#allocation2 + $0x48] sm:$0xff]
      %v933 = vld [vmem:[#allocation2 + $0x50] sm:$0xff]
      %v934 = vld [vmem:[#allocation2 + $0x58] sm:$0xff]
      %v935 = vld [vmem:[#allocation2 + $0x60] sm:$0xff]
      %v936 = vld [vmem:[#allocation2 + $0x68] sm:$0xff]
      %v937 = vld [vmem:[#allocation2 + $0x70] sm:$0xff]
      %v938 = vld [vmem:[#allocation2 + $0x78] sm:$0xff]
      %v939 = vpack.c.bf16 %v908, %v907
      %v940 = vpack.c.bf16 %v910, %v909
      %v941 = vpack.c.bf16 %v912, %v911
      %v942 = vpack.c.bf16 %v914, %v913
      %v943 = vpack.c.bf16 %v916, %v915
      %v944 = vpack.c.bf16 %v918, %v917
      %v945 = vpack.c.bf16 %v920, %v919
      %v946 = vpack.c.bf16 %v922, %v921
      %v947 = vld [vmem:[%s379] sm:$0xf]
      %v948 = vld [vmem:[%s379 + $0x4] sm:$0xf]
      %v949 = vld [vmem:[%s379 + $0x8] sm:$0xf]
      %v950 = vld [vmem:[%s379 + $0xc] sm:$0xf]
      %v951 = vld [vmem:[%s379 + $0x10] sm:$0xf]
      %v952 = vld [vmem:[%s379 + $0x14] sm:$0xf]
      %v953 = vld [vmem:[%s379 + $0x18] sm:$0xf]
      %v954 = vld [vmem:[%s379 + $0x1c] sm:$0xf]
      %v955 = vld [vmem:[%s379 + $0x20] sm:$0xf]
      %v956 = vld [vmem:[%s379 + $0x24] sm:$0xf]
      %v957 = vld [vmem:[%s379 + $0x28] sm:$0xf]
      %v958 = vld [vmem:[%s379 + $0x2c] sm:$0xf]
      %v959 = vld [vmem:[%s379 + $0x30] sm:$0xf]
      %v960 = vld [vmem:[%s379 + $0x34] sm:$0xf]
      %v961 = vld [vmem:[%s379 + $0x38] sm:$0xf]
      %v962 = vld [vmem:[%s379 + $0x3c] sm:$0xf]
      %v979 = vunpack.c.l.b16 %v947
      %v980 = vunpack.c.l.b16 %v948
      %v981 = vunpack.c.l.b16 %v949
      %v982 = vunpack.c.l.b16 %v950
      %v983 = vunpack.c.l.b16 %v951
      %v984 = vunpack.c.l.b16 %v952
      %v985 = vunpack.c.l.b16 %v953
      %v986 = vunpack.c.l.b16 %v954
      %v987 = vunpack.c.l.b16 %v955
      %v988 = vunpack.c.l.b16 %v956
      %v989 = vunpack.c.l.b16 %v957
      %v990 = vunpack.c.l.b16 %v958
      %v991 = vunpack.c.l.b16 %v959
      %v992 = vunpack.c.l.b16 %v960
      %v993 = vunpack.c.l.b16 %v961
      %v994 = vunpack.c.l.b16 %v962
      %v995 = vpack.c.b16 %v980, %v979
      %v996 = vpack.c.b16 %v982, %v981
      %v997 = vpack.c.b16 %v984, %v983
      %v998 = vpack.c.b16 %v986, %v985
      %v999 = vpack.c.b16 %v988, %v987
      %v1000 = vpack.c.b16 %v990, %v989
      %v1001 = vpack.c.b16 %v992, %v991
      %v1002 = vpack.c.b16 %v994, %v993
      %1011 = vmatprep.subr.bf16.mxu0 0
      %1012 = vmatpush1.bf16.msra.mxu0 %v1002
      %1013 = vmatprep.subr.bf16.mxu0 0
      %1014 = vmatpush1.bf16.msra.mxu0 %v1001
      %1015 = vmatprep.subr.bf16.mxu0 0
      %1016 = vmatpush1.bf16.msra.mxu0 %v1000
      %1017 = vmatprep.subr.bf16.mxu0 0
      %1018 = vmatpush1.bf16.msra.mxu0 %v999
      %1019 = vmatprep.subr.bf16.mxu0 0
      %1020 = vmatpush1.bf16.msra.mxu0 %v998
      %1021 = vmatprep.subr.bf16.mxu0 0
      %1022 = vmatpush1.bf16.msra.mxu0 %v997
      %1023 = vmatprep.subr.bf16.mxu0 0
      %1024 = vmatpush1.bf16.msra.mxu0 %v996
      %1025 = vmatprep.subr.bf16.mxu0 0
      %1026 = vmatpush1.bf16.msra.mxu0 %v995
      %1027 = vmatprep.subr.bf16.mxu0 0
      %1028 = vmatpush2.bf16.msra.mxu0 0
      %1029 = vmatprep.subr.bf16.mxu0 0
      %1030 = vmatpush2.bf16.msra.mxu0 0
      %1031 = vmatprep.subr.bf16.mxu0 0
      %1032 = vmatpush2.bf16.msra.mxu0 0
      %1033 = vmatprep.subr.bf16.mxu0 0
      %1034 = vmatpush2.bf16.msra.mxu0 0
      %1035 = vmatprep.subr.bf16.mxu0 0
      %1036 = vmatpush2.bf16.msra.mxu0 0
      %1037 = vmatprep.subr.bf16.mxu0 0
      %1038 = vmatpush2.bf16.msra.mxu0 0
      %1039 = vmatprep.subr.bf16.mxu0 0
      %1040 = vmatpush2.bf16.msra.mxu0 0
      %1041 = vmatprep.subr.bf16.mxu0 0
      %1042 = vmatpush2.bf16.msra.mxu0 0
      %1043 = vmatprep.mubr.bf16.mxu0 0
      %1044 = vmatmul.mubr.bf16.gmra.mxu0 %v939
      %v1045 = vpop.f32.mrf.mxu0
      %v1046 = vadd.f32 0.0, %v1045
      %v1047 = vpop.f32.mrf.mxu0
      %v1048 = vpop.f32.mrf.mxu0
      %v1049 = vadd.f32 0.0, %v1048
      %v1050 = vpop.f32.mrf.mxu0
      %1051 = vmatprep.mubr.bf16.mxu0 0
      %1052 = vmatmul.mubr.bf16.gmra.mxu0 %v940
      %v1053 = vpop.f32.mrf.mxu0
      %v1054 = vadd.f32 0.0, %v1053
      %v1055 = vpop.f32.mrf.mxu0
      %v1056 = vpop.f32.mrf.mxu0
      %v1057 = vadd.f32 0.0, %v1056
      %v1058 = vpop.f32.mrf.mxu0
      %1059 = vmatprep.mubr.bf16.mxu0 0
      %1060 = vmatmul.mubr.bf16.gmra.mxu0 %v941
      %v1061 = vpop.f32.mrf.mxu0
      %v1062 = vadd.f32 0.0, %v1061
      %v1063 = vpop.f32.mrf.mxu0
      %v1064 = vpop.f32.mrf.mxu0
      %v1065 = vadd.f32 0.0, %v1064
      %v1066 = vpop.f32.mrf.mxu0
      %1067 = vmatprep.mubr.bf16.mxu0 0
      %1068 = vmatmul.mubr.bf16.gmra.mxu0 %v942
      %v1069 = vpop.f32.mrf.mxu0
      %v1070 = vadd.f32 0.0, %v1069
      %v1071 = vpop.f32.mrf.mxu0
      %v1072 = vpop.f32.mrf.mxu0
      %v1073 = vadd.f32 0.0, %v1072
      %v1074 = vpop.f32.mrf.mxu0
      %1075 = vmatprep.mubr.bf16.mxu0 0
      %1076 = vmatmul.mubr.bf16.gmra.mxu0 %v943
      %v1077 = vpop.f32.mrf.mxu0
      %v1078 = vadd.f32 0.0, %v1077
      %v1079 = vpop.f32.mrf.mxu0
      %v1080 = vpop.f32.mrf.mxu0
      %v1081 = vadd.f32 0.0, %v1080
      %v1082 = vpop.f32.mrf.mxu0
      %1083 = vmatprep.mubr.bf16.mxu0 0
      %1084 = vmatmul.mubr.bf16.gmra.mxu0 %v944
      %v1085 = vpop.f32.mrf.mxu0
      %v1086 = vadd.f32 0.0, %v1085
      %v1087 = vpop.f32.mrf.mxu0
      %v1088 = vpop.f32.mrf.mxu0
      %v1089 = vadd.f32 0.0, %v1088
      %v1090 = vpop.f32.mrf.mxu0
      %1091 = vmatprep.mubr.bf16.mxu0 0
      %1092 = vmatmul.mubr.bf16.gmra.mxu0 %v945
      %v1093 = vpop.f32.mrf.mxu0
      %v1094 = vadd.f32 0.0, %v1093
      %v1095 = vpop.f32.mrf.mxu0
      %v1096 = vpop.f32.mrf.mxu0
      %v1097 = vadd.f32 0.0, %v1096
      %v1098 = vpop.f32.mrf.mxu0
      %1099 = vmatprep.mubr.bf16.mxu0 0
      %1100 = vmatmul.mubr.bf16.gmra.mxu0 %v946
      %v1101 = vpop.f32.mrf.mxu0
      %v1102 = vadd.f32 0.0, %v1101
      %v1103 = vpop.f32.mrf.mxu0
      %v1104 = vpop.f32.mrf.mxu0
      %v1105 = vadd.f32 0.0, %v1104
      %v1106 = vpop.f32.mrf.mxu0
      %1107 = vdwg.mxu0
      %v1108 = vadd.f32 %v923, %v1046
      %v1109 = vadd.f32 %v924, %v1049
      %v1110 = vadd.f32 %v925, %v1054
      %v1111 = vadd.f32 %v926, %v1057
      %v1112 = vadd.f32 %v927, %v1062
      %v1113 = vadd.f32 %v928, %v1065
      %v1114 = vadd.f32 %v929, %v1070
      %v1115 = vadd.f32 %v930, %v1073
      %v1116 = vadd.f32 %v931, %v1078
      %v1117 = vadd.f32 %v932, %v1081
      %v1118 = vadd.f32 %v933, %v1086
      %v1119 = vadd.f32 %v934, %v1089
      %v1120 = vadd.f32 %v935, %v1094
      %v1121 = vadd.f32 %v936, %v1097
      %v1122 = vadd.f32 %v937, %v1102
      %v1123 = vadd.f32 %v938, %v1105
      %1124 = vst [vmem:[#allocation2] sm:$0xff] %v1108
      %1125 = vst [vmem:[#allocation2 + $0x8] sm:$0xff] %v1109
      %1126 = vst [vmem:[#allocation2 + $0x10] sm:$0xff] %v1110
      %1127 = vst [vmem:[#allocation2 + $0x18] sm:$0xff] %v1111
      %1128 = vst [vmem:[#allocation2 + $0x20] sm:$0xff] %v1112
      %1129 = vst [vmem:[#allocation2 + $0x28] sm:$0xff] %v1113
      %1130 = vst [vmem:[#allocation2 + $0x30] sm:$0xff] %v1114
      %1131 = vst [vmem:[#allocation2 + $0x38] sm:$0xff] %v1115
      %1132 = vst [vmem:[#allocation2 + $0x40] sm:$0xff] %v1116
      %1133 = vst [vmem:[#allocation2 + $0x48] sm:$0xff] %v1117
      %1134 = vst [vmem:[#allocation2 + $0x50] sm:$0xff] %v1118
      %1135 = vst [vmem:[#allocation2 + $0x58] sm:$0xff] %v1119
      %1136 = vst [vmem:[#allocation2 + $0x60] sm:$0xff] %v1120
      %1137 = vst [vmem:[#allocation2 + $0x68] sm:$0xff] %v1121
      %1138 = vst [vmem:[#allocation2 + $0x70] sm:$0xff] %v1122
      %1139 = vst [vmem:[#allocation2 + $0x78] sm:$0xff] %v1123
      // Predicated region
      $region45: #{_lambda_.4} parent=39 // pred_check
        %p1140 = pneg %p389
      $region46: #{_lambda_.4} parent=39 // pred_check_branch
        %1142 = sbr.rel (%p1140) target = $region48
      $region47: #{_lambda_.4} parent=39 // pred_region
        %v1143 = vld [vmem:[#allocation2] sm:$0xff]
        %v1144 = vld [vmem:[#allocation2 + $0x8] sm:$0xff]
        %v1145 = vld [vmem:[#allocation2 + $0x10] sm:$0xff]
        %v1146 = vld [vmem:[#allocation2 + $0x18] sm:$0xff]
        %v1147 = vld [vmem:[#allocation2 + $0x20] sm:$0xff]
        %v1148 = vld [vmem:[#allocation2 + $0x28] sm:$0xff]
        %v1149 = vld [vmem:[#allocation2 + $0x30] sm:$0xff]
        %v1150 = vld [vmem:[#allocation2 + $0x38] sm:$0xff]
        %v1151 = vld [vmem:[#allocation2 + $0x40] sm:$0xff]
        %v1152 = vld [vmem:[#allocation2 + $0x48] sm:$0xff]
        %v1153 = vld [vmem:[#allocation2 + $0x50] sm:$0xff]
        %v1154 = vld [vmem:[#allocation2 + $0x58] sm:$0xff]
        %v1155 = vld [vmem:[#allocation2 + $0x60] sm:$0xff]
        %v1156 = vld [vmem:[#allocation2 + $0x68] sm:$0xff]
        %v1157 = vld [vmem:[#allocation2 + $0x70] sm:$0xff]
        %v1158 = vld [vmem:[#allocation2 + $0x78] sm:$0xff]
        %v1159 = vld [vmem:[%s348] sm:$0xff]
        %v1160 = vld [vmem:[%s348 + $0x8] sm:$0xff]
        %v1161 = vld [vmem:[%s348 + $0x10] sm:$0xff]
        %v1162 = vld [vmem:[%s348 + $0x18] sm:$0xff]
        %v1163 = vld [vmem:[%s348 + $0x20] sm:$0xff]
        %v1164 = vld [vmem:[%s348 + $0x28] sm:$0xff]
        %v1165 = vld [vmem:[%s348 + $0x30] sm:$0xff]
        %v1166 = vld [vmem:[%s348 + $0x38] sm:$0xff]
        %v1167 = vld [vmem:[%s348 + $0x40] sm:$0xff]
        %v1168 = vld [vmem:[%s348 + $0x48] sm:$0xff]
        %v1169 = vld [vmem:[%s348 + $0x50] sm:$0xff]
        %v1170 = vld [vmem:[%s348 + $0x58] sm:$0xff]
        %v1171 = vld [vmem:[%s348 + $0x60] sm:$0xff]
        %v1172 = vld [vmem:[%s348 + $0x68] sm:$0xff]
        %v1173 = vld [vmem:[%s348 + $0x70] sm:$0xff]
        %v1174 = vld [vmem:[%s348 + $0x78] sm:$0xff]
        %1176 = vset.pattern.permute.xlu0 0
        %1177 = vperm.xlu0 %1176, %v1159
        %v1178 = vpop.permute.xlu0 %1177
        %1181 = vset.pattern.permute.xlu0 0
        %1182 = vperm.xlu0 %1181, %v1160
        %v1183 = vpop.permute.xlu0 %1182
        %1186 = vset.pattern.permute.xlu0 0
        %1187 = vperm.xlu0 %1186, %v1161
        %v1188 = vpop.permute.xlu0 %1187
        %1191 = vset.pattern.permute.xlu0 0
        %1192 = vperm.xlu0 %1191, %v1162
        %v1193 = vpop.permute.xlu0 %1192
        %1196 = vset.pattern.permute.xlu0 0
        %1197 = vperm.xlu0 %1196, %v1163
        %v1198 = vpop.permute.xlu0 %1197
        %1201 = vset.pattern.permute.xlu0 0
        %1202 = vperm.xlu0 %1201, %v1164
        %v1203 = vpop.permute.xlu0 %1202
        %1206 = vset.pattern.permute.xlu0 0
        %1207 = vperm.xlu0 %1206, %v1165
        %v1208 = vpop.permute.xlu0 %1207
        %1211 = vset.pattern.permute.xlu0 0
        %1212 = vperm.xlu0 %1211, %v1166
        %v1213 = vpop.permute.xlu0 %1212
        %1216 = vset.pattern.permute.xlu0 0
        %1217 = vperm.xlu0 %1216, %v1167
        %v1218 = vpop.permute.xlu0 %1217
        %1221 = vset.pattern.permute.xlu0 0
        %1222 = vperm.xlu0 %1221, %v1168
        %v1223 = vpop.permute.xlu0 %1222
        %1226 = vset.pattern.permute.xlu0 0
        %1227 = vperm.xlu0 %1226, %v1169
        %v1228 = vpop.permute.xlu0 %1227
        %1231 = vset.pattern.permute.xlu0 0
        %1232 = vperm.xlu0 %1231, %v1170
        %v1233 = vpop.permute.xlu0 %1232
        %1236 = vset.pattern.permute.xlu0 0
        %1237 = vperm.xlu0 %1236, %v1171
        %v1238 = vpop.permute.xlu0 %1237
        %1241 = vset.pattern.permute.xlu0 0
        %1242 = vperm.xlu0 %1241, %v1172
        %v1243 = vpop.permute.xlu0 %1242
        %1246 = vset.pattern.permute.xlu0 0
        %1247 = vperm.xlu0 %1246, %v1173
        %v1248 = vpop.permute.xlu0 %1247
        %1251 = vset.pattern.permute.xlu0 0
        %1252 = vperm.xlu0 %1251, %v1174
        %v1253 = vpop.permute.xlu0 %1252
        %v1255 = vmul.f32 %v1143, %v1178
        %v1256 = vmul.f32 %v1144, %v1183
        %v1257 = vmul.f32 %v1145, %v1188
        %v1258 = vmul.f32 %v1146, %v1193
        %v1259 = vmul.f32 %v1147, %v1198
        %v1260 = vmul.f32 %v1148, %v1203
        %v1261 = vmul.f32 %v1149, %v1208
        %v1262 = vmul.f32 %v1150, %v1213
        %v1263 = vmul.f32 %v1151, %v1218
        %v1264 = vmul.f32 %v1152, %v1223
        %v1265 = vmul.f32 %v1153, %v1228
        %v1266 = vmul.f32 %v1154, %v1233
        %v1267 = vmul.f32 %v1155, %v1238
        %v1268 = vmul.f32 %v1156, %v1243
        %v1269 = vmul.f32 %v1157, %v1248
        %v1270 = vmul.f32 %v1158, %v1253
        %v1271 = vpack.c.bf16 %v1256, %v1255
        %v1272 = vpack.c.bf16 %v1258, %v1257
        %v1273 = vpack.c.bf16 %v1260, %v1259
        %v1274 = vpack.c.bf16 %v1262, %v1261
        %v1275 = vpack.c.bf16 %v1264, %v1263
        %v1276 = vpack.c.bf16 %v1266, %v1265
        %v1277 = vpack.c.bf16 %v1268, %v1267
        %v1278 = vpack.c.bf16 %v1270, %v1269
        %v1287 = vunpack.c.l.b16 %v1271
        %v1288 = vunpack.c.h.b16 %v1271
        %v1289 = vunpack.c.l.b16 %v1272
        %v1290 = vunpack.c.h.b16 %v1272
        %v1291 = vunpack.c.l.b16 %v1273
        %v1292 = vunpack.c.h.b16 %v1273
        %v1293 = vunpack.c.l.b16 %v1274
        %v1294 = vunpack.c.h.b16 %v1274
        %v1295 = vunpack.c.l.b16 %v1275
        %v1296 = vunpack.c.h.b16 %v1275
        %v1297 = vunpack.c.l.b16 %v1276
        %v1298 = vunpack.c.h.b16 %v1276
        %v1299 = vunpack.c.l.b16 %v1277
        %v1300 = vunpack.c.h.b16 %v1277
        %v1301 = vunpack.c.l.b16 %v1278
        %v1302 = vunpack.c.h.b16 %v1278
        %v1303 = vpack.c.b16 %v1287, %v1287
        %v1304 = vpack.c.b16 %v1288, %v1288
        %v1305 = vpack.c.b16 %v1289, %v1289
        %v1306 = vpack.c.b16 %v1290, %v1290
        %v1307 = vpack.c.b16 %v1291, %v1291
        %v1308 = vpack.c.b16 %v1292, %v1292
        %v1309 = vpack.c.b16 %v1293, %v1293
        %v1310 = vpack.c.b16 %v1294, %v1294
        %v1311 = vpack.c.b16 %v1295, %v1295
        %v1312 = vpack.c.b16 %v1296, %v1296
        %v1313 = vpack.c.b16 %v1297, %v1297
        %v1314 = vpack.c.b16 %v1298, %v1298
        %v1315 = vpack.c.b16 %v1299, %v1299
        %v1316 = vpack.c.b16 %v1300, %v1300
        %v1317 = vpack.c.b16 %v1301, %v1301
        %v1318 = vpack.c.b16 %v1302, %v1302
        %1335 = vst [vmem:[%s386] sm:$0xf] %v1303
        %1336 = vst [vmem:[%s386 + $0x4] sm:$0xf] %v1304
        %1337 = vst [vmem:[%s386 + $0x8] sm:$0xf] %v1305
        %1338 = vst [vmem:[%s386 + $0xc] sm:$0xf] %v1306
        %1339 = vst [vmem:[%s386 + $0x10] sm:$0xf] %v1307
        %1340 = vst [vmem:[%s386 + $0x14] sm:$0xf] %v1308
        %1341 = vst [vmem:[%s386 + $0x18] sm:$0xf] %v1309
        %1342 = vst [vmem:[%s386 + $0x1c] sm:$0xf] %v1310
        %1343 = vst [vmem:[%s386 + $0x20] sm:$0xf] %v1311
        %1344 = vst [vmem:[%s386 + $0x24] sm:$0xf] %v1312
        %1345 = vst [vmem:[%s386 + $0x28] sm:$0xf] %v1313
        %1346 = vst [vmem:[%s386 + $0x2c] sm:$0xf] %v1314
        %1347 = vst [vmem:[%s386 + $0x30] sm:$0xf] %v1315
        %1348 = vst [vmem:[%s386 + $0x34] sm:$0xf] %v1316
        %1349 = vst [vmem:[%s386 + $0x38] sm:$0xf] %v1317
        %1350 = vst [vmem:[%s386 + $0x3c] sm:$0xf] %v1318
      $region48: #{_lambda_.4} parent=39 // pred_fallthru
        _
      %s1351 = smul.u32 16, %s27
      %p1352 = scmp.lt.s32.totalorder %s1351, 255
      %s1353 = scalar_select %p1352, %s1351, 255
      %s1354 = smul.addr %s1353, 4
      %s1355 = scalar_lea.vmem %s6, %s1354
      // Predicated region
      $region49: #{_lambda_.4} parent=39 // pred_check
        %p1356 = pneg %p195
      $region50: #{_lambda_.4} parent=39 // pred_check_branch
        %1358 = sbr.rel (%p1356) target = $region52
      $region51: #{_lambda_.4} parent=39 // pred_region
        %s1359 = smul.u32 16, %s27
      $region52: #{_lambda_.4} parent=39 // pred_fallthru
        _
    $region40: #{_lambda_.4} parent=5 // pred_fallthru
      _
    %p1360 = scmp.le.s32.totalorder 2, %s18
    // Predicated region
    $region53: #{_lambda_.4} parent=5 // pred_check
      %p1361 = pneg %p1360
    $region54: #{_lambda_.4} parent=5 // pred_check_branch
      %1363 = sbr.rel (%p1361) target = $region56
    $region55: #{_lambda_.4} parent=5 // pred_region
      %s1364 = ssub.s32 %s18, 2
      // Predicated region
      $region57: #{_lambda_.4} parent=55 // pred_check
        %p1365 = pneg %p201
      $region58: #{_lambda_.4} parent=55 // pred_check_branch
        %1367 = sbr.rel (%p1365) target = $region60
      $region59: #{_lambda_.4} parent=55 // pred_region
        %s1368 = smul.u32 16, %s29
        %p1369 = scmp.lt.s32.totalorder %s1368, 255
        %s1370 = scalar_select %p1369, %s1368, 255
        %s1371 = smul.addr %s1370, 4
        %s1372 = scalar_lea.vmem %s6, %s1371
      $region60: #{_lambda_.4} parent=55 // pred_fallthru
        _
    $region56: #{_lambda_.4} parent=5 // pred_fallthru
      _
  $region6: #{_lambda_.4} parent=0 // loop_footer
    %s22 = sadd.s32 1, %s18
  $region7: #{_lambda_.4} parent=0 // loop_footer_branch
    %17 = sbr.rel target = $region3
  $region8: #{_lambda_.4} parent=0 // loop_exit
    _

// kernel: _lambda_.5
$region0: #{_lambda_.5}
  #allocation0 [shape = 'u32[]', space=smem, size = 0x4, offset = 0x4, fixed_abs, tag = 'smem constant byte address 0x4 - core index']
  #allocation1 [shape = 'u32[144,128]{1,0:T(1,128)}', space=vmem, size = 0x12000, scoped, tag = 'internal scratch']
  %s0 = inlined_call_operand.vmem [shape: bf16[256,128], index: 0, kind: input, shape index: {}]
  %s1 = inlined_call_operand.vmem [shape: bf16[128,128], index: 1, kind: input, shape index: {}]
  %s2 = inlined_call_operand.vmem [shape: f32[1,128], index: 2, kind: input, shape index: {}]
  %s3 = inlined_call_operand.vmem [shape: bf16[128,128], index: 3, kind: input, shape index: {}]
  %s4 = inlined_call_operand.vmem [shape: f32[1,128], index: 4, kind: input, shape index: {}]
  %s5 = inlined_call_operand.vmem [shape: bf16[128,128], index: 5, kind: input, shape index: {}]
  %s6 = inlined_call_operand.vmem [shape: f32[1,128], index: 6, kind: input, shape index: {}]
  %s7 = inlined_call_operand.vmem [shape: bf16[256,128], index: 7, kind: output, shape index: {}]
  %s8 = sld [smem:[#allocation0]]
  $region38: #{_lambda_.5} parent=0
    _
  %s10 = ssub.s32 1, %s8
  %s11 = scalar_select 0, %s10, %s8
  // Predicated region
  $region2: #{_lambda_.5} parent=0 // pred_check
    _
  $region3: #{_lambda_.5} parent=0 // pred_check_branch
    %13 = sbr.rel (0) target = $region5
  $region4: #{_lambda_.5} parent=0 // pred_region
    _
  $region5: #{_lambda_.5} parent=0 // pred_fallthru
    _
  // Predicated region
  $region6: #{_lambda_.5} parent=0 // pred_check
    _
  $region7: #{_lambda_.5} parent=0 // pred_check_branch
    %15 = sbr.rel (0) target = $region9
  $region8: #{_lambda_.5} parent=0 // pred_region
    _
  $region9: #{_lambda_.5} parent=0 // pred_fallthru
    _
  // Predicated region
  $region10: #{_lambda_.5} parent=0 // pred_check
    _
  $region11: #{_lambda_.5} parent=0 // pred_check_branch
    %17 = sbr.rel (0) target = $region13
  $region12: #{_lambda_.5} parent=0 // pred_region
    _
  $region13: #{_lambda_.5} parent=0 // pred_fallthru
    _
  // Predicated region
  $region14: #{_lambda_.5} parent=0 // pred_check
    _
  $region15: #{_lambda_.5} parent=0 // pred_check_branch
    %19 = sbr.rel (0) target = $region17
  $region16: #{_lambda_.5} parent=0 // pred_region
    _
  $region17: #{_lambda_.5} parent=0 // pred_fallthru
    _
  // Predicated region
  $region18: #{_lambda_.5} parent=0 // pred_check
    _
  $region19: #{_lambda_.5} parent=0 // pred_check_branch
    %21 = sbr.rel (0) target = $region21
  $region20: #{_lambda_.5} parent=0 // pred_region
    _
  $region21: #{_lambda_.5} parent=0 // pred_fallthru
    _
  // Predicated region
  $region22: #{_lambda_.5} parent=0 // pred_check
    _
  $region23: #{_lambda_.5} parent=0 // pred_check_branch
    %23 = sbr.rel (0) target = $region25
  $region24: #{_lambda_.5} parent=0 // pred_region
    _
  $region25: #{_lambda_.5} parent=0 // pred_fallthru
    _
  // Predicated region
  $region26: #{_lambda_.5} parent=0 // pred_check
    _
  $region27: #{_lambda_.5} parent=0 // pred_check_branch
    %25 = sbr.rel (0) target = $region29
  $region28: #{_lambda_.5} parent=0 // pred_region
    _
  $region29: #{_lambda_.5} parent=0 // pred_fallthru
    _
  %v27 = vld [vmem:[%s0] sm:$0xf]
  %v28 = vld [vmem:[%s0 + $0x4] sm:$0xf]
  %v29 = vld [vmem:[%s0 + $0x8] sm:$0xf]
  %v30 = vld [vmem:[%s0 + $0xc] sm:$0xf]
  %v31 = vld [vmem:[%s0 + $0x10] sm:$0xf]
  %v32 = vld [vmem:[%s0 + $0x14] sm:$0xf]
  %v33 = vld [vmem:[%s0 + $0x18] sm:$0xf]
  %v34 = vld [vmem:[%s0 + $0x1c] sm:$0xf]
  %v35 = vld [vmem:[%s0 + $0x20] sm:$0xf]
  %v36 = vld [vmem:[%s0 + $0x24] sm:$0xf]
  %v37 = vld [vmem:[%s0 + $0x28] sm:$0xf]
  %v38 = vld [vmem:[%s0 + $0x2c] sm:$0xf]
  %v39 = vld [vmem:[%s0 + $0x30] sm:$0xf]
  %v40 = vld [vmem:[%s0 + $0x34] sm:$0xf]
  %v41 = vld [vmem:[%s0 + $0x38] sm:$0xf]
  %v42 = vld [vmem:[%s0 + $0x3c] sm:$0xf]
  %v43 = vld [vmem:[%s0 + $0x40] sm:$0xf]
  %v44 = vld [vmem:[%s0 + $0x44] sm:$0xf]
  %v45 = vld [vmem:[%s0 + $0x48] sm:$0xf]
  %v46 = vld [vmem:[%s0 + $0x4c] sm:$0xf]
  %v47 = vld [vmem:[%s0 + $0x50] sm:$0xf]
  %v48 = vld [vmem:[%s0 + $0x54] sm:$0xf]
  %v49 = vld [vmem:[%s0 + $0x58] sm:$0xf]
  %v50 = vld [vmem:[%s0 + $0x5c] sm:$0xf]
  %v51 = vld [vmem:[%s0 + $0x60] sm:$0xf]
  %v52 = vld [vmem:[%s0 + $0x64] sm:$0xf]
  %v53 = vld [vmem:[%s0 + $0x68] sm:$0xf]
  %v54 = vld [vmem:[%s0 + $0x6c] sm:$0xf]
  %v55 = vld [vmem:[%s0 + $0x70] sm:$0xf]
  %v56 = vld [vmem:[%s0 + $0x74] sm:$0xf]
  %v57 = vld [vmem:[%s0 + $0x78] sm:$0xf]
  %v58 = vld [vmem:[%s0 + $0x7c] sm:$0xf]
  %v59 = vld [vmem:[%s1] sm:$0xf]
  %v60 = vld [vmem:[%s1 + $0x4] sm:$0xf]
  %v61 = vld [vmem:[%s1 + $0x8] sm:$0xf]
  %v62 = vld [vmem:[%s1 + $0xc] sm:$0xf]
  %v63 = vld [vmem:[%s1 + $0x10] sm:$0xf]
  %v64 = vld [vmem:[%s1 + $0x14] sm:$0xf]
  %v65 = vld [vmem:[%s1 + $0x18] sm:$0xf]
  %v66 = vld [vmem:[%s1 + $0x1c] sm:$0xf]
  %v67 = vld [vmem:[%s1 + $0x20] sm:$0xf]
  %v68 = vld [vmem:[%s1 + $0x24] sm:$0xf]
  %v69 = vld [vmem:[%s1 + $0x28] sm:$0xf]
  %v70 = vld [vmem:[%s1 + $0x2c] sm:$0xf]
  %v71 = vld [vmem:[%s1 + $0x30] sm:$0xf]
  %v72 = vld [vmem:[%s1 + $0x34] sm:$0xf]
  %v73 = vld [vmem:[%s1 + $0x38] sm:$0xf]
  %v74 = vld [vmem:[%s1 + $0x3c] sm:$0xf]
  %v75 = vld [vmem:[%s2] sm:$0x1]
  %v77 = vlaneseq
  %v78 = vshrl.u32 %v77, 7
  %v79 = vsub.s32 0, %v78
  %v80 = vrot.slane %v75, %v79
  %v114 = vunpack.c.l.b16 %v27
  %v115 = vunpack.c.l.b16 %v28
  %v116 = vunpack.c.l.b16 %v29
  %v117 = vunpack.c.l.b16 %v30
  %v118 = vunpack.c.l.b16 %v31
  %v119 = vunpack.c.l.b16 %v32
  %v120 = vunpack.c.l.b16 %v33
  %v121 = vunpack.c.l.b16 %v34
  %v122 = vunpack.c.l.b16 %v35
  %v123 = vunpack.c.l.b16 %v36
  %v124 = vunpack.c.l.b16 %v37
  %v125 = vunpack.c.l.b16 %v38
  %v126 = vunpack.c.l.b16 %v39
  %v127 = vunpack.c.l.b16 %v40
  %v128 = vunpack.c.l.b16 %v41
  %v129 = vunpack.c.l.b16 %v42
  %v130 = vunpack.c.l.b16 %v43
  %v131 = vunpack.c.l.b16 %v44
  %v132 = vunpack.c.l.b16 %v45
  %v133 = vunpack.c.l.b16 %v46
  %v134 = vunpack.c.l.b16 %v47
  %v135 = vunpack.c.l.b16 %v48
  %v136 = vunpack.c.l.b16 %v49
  %v137 = vunpack.c.l.b16 %v50
  %v138 = vunpack.c.l.b16 %v51
  %v139 = vunpack.c.l.b16 %v52
  %v140 = vunpack.c.l.b16 %v53
  %v141 = vunpack.c.l.b16 %v54
  %v142 = vunpack.c.l.b16 %v55
  %v143 = vunpack.c.l.b16 %v56
  %v144 = vunpack.c.l.b16 %v57
  %v145 = vunpack.c.l.b16 %v58
  %v146 = vpack.c.b16 %v115, %v114
  %v147 = vpack.c.b16 %v117, %v116
  %v148 = vpack.c.b16 %v119, %v118
  %v149 = vpack.c.b16 %v121, %v120
  %v150 = vpack.c.b16 %v123, %v122
  %v151 = vpack.c.b16 %v125, %v124
  %v152 = vpack.c.b16 %v127, %v126
  %v153 = vpack.c.b16 %v129, %v128
  %v154 = vpack.c.b16 %v131, %v130
  %v155 = vpack.c.b16 %v133, %v132
  %v156 = vpack.c.b16 %v135, %v134
  %v157 = vpack.c.b16 %v137, %v136
  %v158 = vpack.c.b16 %v139, %v138
  %v159 = vpack.c.b16 %v141, %v140
  %v160 = vpack.c.b16 %v143, %v142
  %v161 = vpack.c.b16 %v145, %v144
  %v194 = vunpack.c.l.b16 %v59
  %v195 = vunpack.c.l.b16 %v60
  %v196 = vunpack.c.l.b16 %v61
  %v197 = vunpack.c.l.b16 %v62
  %v198 = vunpack.c.l.b16 %v63
  %v199 = vunpack.c.l.b16 %v64
  %v200 = vunpack.c.l.b16 %v65
  %v201 = vunpack.c.l.b16 %v66
  %v202 = vunpack.c.l.b16 %v67
  %v203 = vunpack.c.l.b16 %v68
  %v204 = vunpack.c.l.b16 %v69
  %v205 = vunpack.c.l.b16 %v70
  %v206 = vunpack.c.l.b16 %v71
  %v207 = vunpack.c.l.b16 %v72
  %v208 = vunpack.c.l.b16 %v73
  %v209 = vunpack.c.l.b16 %v74
  %v210 = vpack.c.b16 %v195, %v194
  %v211 = vpack.c.b16 %v197, %v196
  %v212 = vpack.c.b16 %v199, %v198
  %v213 = vpack.c.b16 %v201, %v200
  %v214 = vpack.c.b16 %v203, %v202
  %v215 = vpack.c.b16 %v205, %v204
  %v216 = vpack.c.b16 %v207, %v206
  %v217 = vpack.c.b16 %v209, %v208
  %226 = vmatprep.subr.bf16.mxu0 0
  %227 = vmatpush1.bf16.msra.mxu0 %v217
  %228 = vmatprep.subr.bf16.mxu0 0
  %229 = vmatpush1.bf16.msra.mxu0 %v216
  %230 = vmatprep.subr.bf16.mxu0 0
  %231 = vmatpush1.bf16.msra.mxu0 %v215
  %232 = vmatprep.subr.bf16.mxu0 0
  %233 = vmatpush1.bf16.msra.mxu0 %v214
  %234 = vmatprep.subr.bf16.mxu0 0
  %235 = vmatpush1.bf16.msra.mxu0 %v213
  %236 = vmatprep.subr.bf16.mxu0 0
  %237 = vmatpush1.bf16.msra.mxu0 %v212
  %238 = vmatprep.subr.bf16.mxu0 0
  %239 = vmatpush1.bf16.msra.mxu0 %v211
  %240 = vmatprep.subr.bf16.mxu0 0
  %241 = vmatpush1.bf16.msra.mxu0 %v210
  %242 = vmatprep.subr.bf16.mxu0 0
  %243 = vmatpush2.bf16.msra.mxu0 0
  %244 = vmatprep.subr.bf16.mxu0 0
  %245 = vmatpush2.bf16.msra.mxu0 0
  %246 = vmatprep.subr.bf16.mxu0 0
  %247 = vmatpush2.bf16.msra.mxu0 0
  %248 = vmatprep.subr.bf16.mxu0 0
  %249 = vmatpush2.bf16.msra.mxu0 0
  %250 = vmatprep.subr.bf16.mxu0 0
  %251 = vmatpush2.bf16.msra.mxu0 0
  %252 = vmatprep.subr.bf16.mxu0 0
  %253 = vmatpush2.bf16.msra.mxu0 0
  %254 = vmatprep.subr.bf16.mxu0 0
  %255 = vmatpush2.bf16.msra.mxu0 0
  %256 = vmatprep.subr.bf16.mxu0 0
  %257 = vmatpush2.bf16.msra.mxu0 0
  %258 = vmatprep.mubr.bf16.mxu0 0
  %259 = vmatmul.mubr.bf16.gmra.mxu0 %v146
  %v260 = vpop.f32.mrf.mxu0
  %v261 = vadd.f32 %v80, %v260
  %v262 = vpop.f32.mrf.mxu0
  %v263 = vpop.f32.mrf.mxu0
  %v264 = vadd.f32 %v80, %v263
  %v265 = vpop.f32.mrf.mxu0
  %266 = vmatprep.mubr.bf16.mxu0 0
  %267 = vmatmul.mubr.bf16.gmra.mxu0 %v147
  %v268 = vpop.f32.mrf.mxu0
  %v269 = vadd.f32 %v80, %v268
  %v270 = vpop.f32.mrf.mxu0
  %v271 = vpop.f32.mrf.mxu0
  %v272 = vadd.f32 %v80, %v271
  %v273 = vpop.f32.mrf.mxu0
  %274 = vmatprep.mubr.bf16.mxu0 0
  %275 = vmatmul.mubr.bf16.gmra.mxu0 %v148
  %v276 = vpop.f32.mrf.mxu0
  %v277 = vadd.f32 %v80, %v276
  %v278 = vpop.f32.mrf.mxu0
  %v279 = vpop.f32.mrf.mxu0
  %v280 = vadd.f32 %v80, %v279
  %v281 = vpop.f32.mrf.mxu0
  %282 = vmatprep.mubr.bf16.mxu0 0
  %283 = vmatmul.mubr.bf16.gmra.mxu0 %v149
  %v284 = vpop.f32.mrf.mxu0
  %v285 = vadd.f32 %v80, %v284
  %v286 = vpop.f32.mrf.mxu0
  %v287 = vpop.f32.mrf.mxu0
  %v288 = vadd.f32 %v80, %v287
  %v289 = vpop.f32.mrf.mxu0
  %290 = vmatprep.mubr.bf16.mxu0 0
  %291 = vmatmul.mubr.bf16.gmra.mxu0 %v150
  %v292 = vpop.f32.mrf.mxu0
  %v293 = vadd.f32 %v80, %v292
  %v294 = vpop.f32.mrf.mxu0
  %v295 = vpop.f32.mrf.mxu0
  %v296 = vadd.f32 %v80, %v295
  %v297 = vpop.f32.mrf.mxu0
  %298 = vmatprep.mubr.bf16.mxu0 0
  %299 = vmatmul.mubr.bf16.gmra.mxu0 %v151
  %v300 = vpop.f32.mrf.mxu0
  %v301 = vadd.f32 %v80, %v300
  %v302 = vpop.f32.mrf.mxu0
  %v303 = vpop.f32.mrf.mxu0
  %v304 = vadd.f32 %v80, %v303
  %v305 = vpop.f32.mrf.mxu0
  %306 = vmatprep.mubr.bf16.mxu0 0
  %307 = vmatmul.mubr.bf16.gmra.mxu0 %v152
  %v308 = vpop.f32.mrf.mxu0
  %v309 = vadd.f32 %v80, %v308
  %v310 = vpop.f32.mrf.mxu0
  %v311 = vpop.f32.mrf.mxu0
  %v312 = vadd.f32 %v80, %v311
  %v313 = vpop.f32.mrf.mxu0
  %314 = vmatprep.mubr.bf16.mxu0 0
  %315 = vmatmul.mubr.bf16.gmra.mxu0 %v153
  %v316 = vpop.f32.mrf.mxu0
  %v317 = vadd.f32 %v80, %v316
  %v318 = vpop.f32.mrf.mxu0
  %v319 = vpop.f32.mrf.mxu0
  %v320 = vadd.f32 %v80, %v319
  %v321 = vpop.f32.mrf.mxu0
  %322 = vmatprep.mubr.bf16.mxu0 0
  %323 = vmatmul.mubr.bf16.gmra.mxu0 %v154
  %v324 = vpop.f32.mrf.mxu0
  %v325 = vadd.f32 %v80, %v324
  %v326 = vpop.f32.mrf.mxu0
  %v327 = vpop.f32.mrf.mxu0
  %v328 = vadd.f32 %v80, %v327
  %v329 = vpop.f32.mrf.mxu0
  %330 = vmatprep.mubr.bf16.mxu0 0
  %331 = vmatmul.mubr.bf16.gmra.mxu0 %v155
  %v332 = vpop.f32.mrf.mxu0
  %v333 = vadd.f32 %v80, %v332
  %v334 = vpop.f32.mrf.mxu0
  %v335 = vpop.f32.mrf.mxu0
  %v336 = vadd.f32 %v80, %v335
  %v337 = vpop.f32.mrf.mxu0
  %338 = vmatprep.mubr.bf16.mxu0 0
  %339 = vmatmul.mubr.bf16.gmra.mxu0 %v156
  %v340 = vpop.f32.mrf.mxu0
  %v341 = vadd.f32 %v80, %v340
  %v342 = vpop.f32.mrf.mxu0
  %v343 = vpop.f32.mrf.mxu0
  %v344 = vadd.f32 %v80, %v343
  %v345 = vpop.f32.mrf.mxu0
  %346 = vmatprep.mubr.bf16.mxu0 0
  %347 = vmatmul.mubr.bf16.gmra.mxu0 %v157
  %v348 = vpop.f32.mrf.mxu0
  %v349 = vadd.f32 %v80, %v348
  %v350 = vpop.f32.mrf.mxu0
  %v351 = vpop.f32.mrf.mxu0
  %v352 = vadd.f32 %v80, %v351
  %v353 = vpop.f32.mrf.mxu0
  %354 = vmatprep.mubr.bf16.mxu0 0
  %355 = vmatmul.mubr.bf16.gmra.mxu0 %v158
  %v356 = vpop.f32.mrf.mxu0
  %v357 = vadd.f32 %v80, %v356
  %v358 = vpop.f32.mrf.mxu0
  %v359 = vpop.f32.mrf.mxu0
  %v360 = vadd.f32 %v80, %v359
  %v361 = vpop.f32.mrf.mxu0
  %362 = vmatprep.mubr.bf16.mxu0 0
  %363 = vmatmul.mubr.bf16.gmra.mxu0 %v159
  %v364 = vpop.f32.mrf.mxu0
  %v365 = vadd.f32 %v80, %v364
  %v366 = vpop.f32.mrf.mxu0
  %v367 = vpop.f32.mrf.mxu0
  %v368 = vadd.f32 %v80, %v367
  %v369 = vpop.f32.mrf.mxu0
  %370 = vmatprep.mubr.bf16.mxu0 0
  %371 = vmatmul.mubr.bf16.gmra.mxu0 %v160
  %v372 = vpop.f32.mrf.mxu0
  %v373 = vadd.f32 %v80, %v372
  %v374 = vpop.f32.mrf.mxu0
  %v375 = vpop.f32.mrf.mxu0
  %v376 = vadd.f32 %v80, %v375
  %v377 = vpop.f32.mrf.mxu0
  %378 = vmatprep.mubr.bf16.mxu0 0
  %379 = vmatmul.mubr.bf16.gmra.mxu0 %v161
  %v380 = vpop.f32.mrf.mxu0
  %v381 = vadd.f32 %v80, %v380
  %v382 = vpop.f32.mrf.mxu0
  %v383 = vpop.f32.mrf.mxu0
  %v384 = vadd.f32 %v80, %v383
  %v385 = vpop.f32.mrf.mxu0
  %386 = vdwg.mxu0
  %v387 = vpack.c.bf16 %v264, %v261
  %v388 = vpack.c.bf16 %v272, %v269
  %v389 = vpack.c.bf16 %v280, %v277
  %v390 = vpack.c.bf16 %v288, %v285
  %v391 = vpack.c.bf16 %v296, %v293
  %v392 = vpack.c.bf16 %v304, %v301
  %v393 = vpack.c.bf16 %v312, %v309
  %v394 = vpack.c.bf16 %v320, %v317
  %v395 = vpack.c.bf16 %v328, %v325
  %v396 = vpack.c.bf16 %v336, %v333
  %v397 = vpack.c.bf16 %v344, %v341
  %v398 = vpack.c.bf16 %v352, %v349
  %v399 = vpack.c.bf16 %v360, %v357
  %v400 = vpack.c.bf16 %v368, %v365
  %v401 = vpack.c.bf16 %v376, %v373
  %v402 = vpack.c.bf16 %v384, %v381
  %v403 = vld [vmem:[%s3] sm:$0xf]
  %v404 = vld [vmem:[%s3 + $0x4] sm:$0xf]
  %v405 = vld [vmem:[%s3 + $0x8] sm:$0xf]
  %v406 = vld [vmem:[%s3 + $0xc] sm:$0xf]
  %v407 = vld [vmem:[%s3 + $0x10] sm:$0xf]
  %v408 = vld [vmem:[%s3 + $0x14] sm:$0xf]
  %v409 = vld [vmem:[%s3 + $0x18] sm:$0xf]
  %v410 = vld [vmem:[%s3 + $0x1c] sm:$0xf]
  %v411 = vld [vmem:[%s3 + $0x20] sm:$0xf]
  %v412 = vld [vmem:[%s3 + $0x24] sm:$0xf]
  %v413 = vld [vmem:[%s3 + $0x28] sm:$0xf]
  %v414 = vld [vmem:[%s3 + $0x2c] sm:$0xf]
  %v415 = vld [vmem:[%s3 + $0x30] sm:$0xf]
  %v416 = vld [vmem:[%s3 + $0x34] sm:$0xf]
  %v417 = vld [vmem:[%s3 + $0x38] sm:$0xf]
  %v418 = vld [vmem:[%s3 + $0x3c] sm:$0xf]
  %v419 = vld [vmem:[%s4] sm:$0x1]
  %v421 = vlaneseq
  %v422 = vshrl.u32 %v421, 7
  %v423 = vsub.s32 0, %v422
  %v424 = vrot.slane %v419, %v423
  %v442 = vunpack.c.l.b16 %v403
  %v443 = vunpack.c.l.b16 %v404
  %v444 = vunpack.c.l.b16 %v405
  %v445 = vunpack.c.l.b16 %v406
  %v446 = vunpack.c.l.b16 %v407
  %v447 = vunpack.c.l.b16 %v408
  %v448 = vunpack.c.l.b16 %v409
  %v449 = vunpack.c.l.b16 %v410
  %v450 = vunpack.c.l.b16 %v411
  %v451 = vunpack.c.l.b16 %v412
  %v452 = vunpack.c.l.b16 %v413
  %v453 = vunpack.c.l.b16 %v414
  %v454 = vunpack.c.l.b16 %v415
  %v455 = vunpack.c.l.b16 %v416
  %v456 = vunpack.c.l.b16 %v417
  %v457 = vunpack.c.l.b16 %v418
  %v458 = vpack.c.b16 %v443, %v442
  %v459 = vpack.c.b16 %v445, %v444
  %v460 = vpack.c.b16 %v447, %v446
  %v461 = vpack.c.b16 %v449, %v448
  %v462 = vpack.c.b16 %v451, %v450
  %v463 = vpack.c.b16 %v453, %v452
  %v464 = vpack.c.b16 %v455, %v454
  %v465 = vpack.c.b16 %v457, %v456
  %474 = vmatprep.subr.bf16.mxu0 0
  %475 = vmatpush1.bf16.msra.mxu0 %v465
  %476 = vmatprep.subr.bf16.mxu0 0
  %477 = vmatpush1.bf16.msra.mxu0 %v464
  %478 = vmatprep.subr.bf16.mxu0 0
  %479 = vmatpush1.bf16.msra.mxu0 %v463
  %480 = vmatprep.subr.bf16.mxu0 0
  %481 = vmatpush1.bf16.msra.mxu0 %v462
  %482 = vmatprep.subr.bf16.mxu0 0
  %483 = vmatpush1.bf16.msra.mxu0 %v461
  %484 = vmatprep.subr.bf16.mxu0 0
  %485 = vmatpush1.bf16.msra.mxu0 %v460
  %486 = vmatprep.subr.bf16.mxu0 0
  %487 = vmatpush1.bf16.msra.mxu0 %v459
  %488 = vmatprep.subr.bf16.mxu0 0
  %489 = vmatpush1.bf16.msra.mxu0 %v458
  %490 = vmatprep.subr.bf16.mxu0 0
  %491 = vmatpush2.bf16.msra.mxu0 0
  %492 = vmatprep.subr.bf16.mxu0 0
  %493 = vmatpush2.bf16.msra.mxu0 0
  %494 = vmatprep.subr.bf16.mxu0 0
  %495 = vmatpush2.bf16.msra.mxu0 0
  %496 = vmatprep.subr.bf16.mxu0 0
  %497 = vmatpush2.bf16.msra.mxu0 0
  %498 = vmatprep.subr.bf16.mxu0 0
  %499 = vmatpush2.bf16.msra.mxu0 0
  %500 = vmatprep.subr.bf16.mxu0 0
  %501 = vmatpush2.bf16.msra.mxu0 0
  %502 = vmatprep.subr.bf16.mxu0 0
  %503 = vmatpush2.bf16.msra.mxu0 0
  %504 = vmatprep.subr.bf16.mxu0 0
  %505 = vmatpush2.bf16.msra.mxu0 0
  %506 = vmatprep.mubr.bf16.mxu0 0
  %507 = vmatmul.mubr.bf16.gmra.mxu0 %v387
  %v508 = vpop.f32.mrf.mxu0
  %v509 = vadd.f32 %v424, %v508
  %v510 = vpop.f32.mrf.mxu0
  %v511 = vpop.f32.mrf.mxu0
  %v512 = vadd.f32 %v424, %v511
  %v513 = vpop.f32.mrf.mxu0
  %514 = vmatprep.mubr.bf16.mxu0 0
  %515 = vmatmul.mubr.bf16.gmra.mxu0 %v388
  %v516 = vpop.f32.mrf.mxu0
  %v517 = vadd.f32 %v424, %v516
  %v518 = vpop.f32.mrf.mxu0
  %v519 = vpop.f32.mrf.mxu0
  %v520 = vadd.f32 %v424, %v519
  %v521 = vpop.f32.mrf.mxu0
  %522 = vmatprep.mubr.bf16.mxu0 0
  %523 = vmatmul.mubr.bf16.gmra.mxu0 %v389
  %v524 = vpop.f32.mrf.mxu0
  %v525 = vadd.f32 %v424, %v524
  %v526 = vpop.f32.mrf.mxu0
  %v527 = vpop.f32.mrf.mxu0
  %v528 = vadd.f32 %v424, %v527
  %v529 = vpop.f32.mrf.mxu0
  %530 = vmatprep.mubr.bf16.mxu0 0
  %531 = vmatmul.mubr.bf16.gmra.mxu0 %v390
  %v532 = vpop.f32.mrf.mxu0
  %v533 = vadd.f32 %v424, %v532
  %v534 = vpop.f32.mrf.mxu0
  %v535 = vpop.f32.mrf.mxu0
  %v536 = vadd.f32 %v424, %v535
  %v537 = vpop.f32.mrf.mxu0
  %538 = vmatprep.mubr.bf16.mxu0 0
  %539 = vmatmul.mubr.bf16.gmra.mxu0 %v391
  %v540 = vpop.f32.mrf.mxu0
  %v541 = vadd.f32 %v424, %v540
  %v542 = vpop.f32.mrf.mxu0
  %v543 = vpop.f32.mrf.mxu0
  %v544 = vadd.f32 %v424, %v543
  %v545 = vpop.f32.mrf.mxu0
  %546 = vmatprep.mubr.bf16.mxu0 0
  %547 = vmatmul.mubr.bf16.gmra.mxu0 %v392
  %v548 = vpop.f32.mrf.mxu0
  %v549 = vadd.f32 %v424, %v548
  %v550 = vpop.f32.mrf.mxu0
  %v551 = vpop.f32.mrf.mxu0
  %v552 = vadd.f32 %v424, %v551
  %v553 = vpop.f32.mrf.mxu0
  %554 = vmatprep.mubr.bf16.mxu0 0
  %555 = vmatmul.mubr.bf16.gmra.mxu0 %v393
  %v556 = vpop.f32.mrf.mxu0
  %v557 = vadd.f32 %v424, %v556
  %v558 = vpop.f32.mrf.mxu0
  %v559 = vpop.f32.mrf.mxu0
  %v560 = vadd.f32 %v424, %v559
  %v561 = vpop.f32.mrf.mxu0
  %562 = vmatprep.mubr.bf16.mxu0 0
  %563 = vmatmul.mubr.bf16.gmra.mxu0 %v394
  %v564 = vpop.f32.mrf.mxu0
  %v565 = vadd.f32 %v424, %v564
  %v566 = vpop.f32.mrf.mxu0
  %v567 = vpop.f32.mrf.mxu0
  %v568 = vadd.f32 %v424, %v567
  %v569 = vpop.f32.mrf.mxu0
  %570 = vmatprep.mubr.bf16.mxu0 0
  %571 = vmatmul.mubr.bf16.gmra.mxu0 %v395
  %v572 = vpop.f32.mrf.mxu0
  %v573 = vadd.f32 %v424, %v572
  %v574 = vpop.f32.mrf.mxu0
  %v575 = vpop.f32.mrf.mxu0
  %v576 = vadd.f32 %v424, %v575
  %v577 = vpop.f32.mrf.mxu0
  %578 = vmatprep.mubr.bf16.mxu0 0
  %579 = vmatmul.mubr.bf16.gmra.mxu0 %v396
  %v580 = vpop.f32.mrf.mxu0
  %v581 = vadd.f32 %v424, %v580
  %v582 = vpop.f32.mrf.mxu0
  %v583 = vpop.f32.mrf.mxu0
  %v584 = vadd.f32 %v424, %v583
  %v585 = vpop.f32.mrf.mxu0
  %586 = vmatprep.mubr.bf16.mxu0 0
  %587 = vmatmul.mubr.bf16.gmra.mxu0 %v397
  %v588 = vpop.f32.mrf.mxu0
  %v589 = vadd.f32 %v424, %v588
  %v590 = vpop.f32.mrf.mxu0
  %v591 = vpop.f32.mrf.mxu0
  %v592 = vadd.f32 %v424, %v591
  %v593 = vpop.f32.mrf.mxu0
  %594 = vmatprep.mubr.bf16.mxu0 0
  %595 = vmatmul.mubr.bf16.gmra.mxu0 %v398
  %v596 = vpop.f32.mrf.mxu0
  %v597 = vadd.f32 %v424, %v596
  %v598 = vpop.f32.mrf.mxu0
  %v599 = vpop.f32.mrf.mxu0
  %v600 = vadd.f32 %v424, %v599
  %v601 = vpop.f32.mrf.mxu0
  %602 = vmatprep.mubr.bf16.mxu0 0
  %603 = vmatmul.mubr.bf16.gmra.mxu0 %v399
  %v604 = vpop.f32.mrf.mxu0
  %v605 = vadd.f32 %v424, %v604
  %v606 = vpop.f32.mrf.mxu0
  %v607 = vpop.f32.mrf.mxu0
  %v608 = vadd.f32 %v424, %v607
  %v609 = vpop.f32.mrf.mxu0
  %610 = vmatprep.mubr.bf16.mxu0 0
  %611 = vmatmul.mubr.bf16.gmra.mxu0 %v400
  %v612 = vpop.f32.mrf.mxu0
  %v613 = vadd.f32 %v424, %v612
  %v614 = vpop.f32.mrf.mxu0
  %v615 = vpop.f32.mrf.mxu0
  %v616 = vadd.f32 %v424, %v615
  %v617 = vpop.f32.mrf.mxu0
  %618 = vmatprep.mubr.bf16.mxu0 0
  %619 = vmatmul.mubr.bf16.gmra.mxu0 %v401
  %v620 = vpop.f32.mrf.mxu0
  %v621 = vadd.f32 %v424, %v620
  %v622 = vpop.f32.mrf.mxu0
  %v623 = vpop.f32.mrf.mxu0
  %v624 = vadd.f32 %v424, %v623
  %v625 = vpop.f32.mrf.mxu0
  %626 = vmatprep.mubr.bf16.mxu0 0
  %627 = vmatmul.mubr.bf16.gmra.mxu0 %v402
  %v628 = vpop.f32.mrf.mxu0
  %v629 = vadd.f32 %v424, %v628
  %v630 = vpop.f32.mrf.mxu0
  %v631 = vpop.f32.mrf.mxu0
  %v632 = vadd.f32 %v424, %v631
  %v633 = vpop.f32.mrf.mxu0
  %634 = vdwg.mxu0
  %v635 = vld [vmem:[%s5] sm:$0xf]
  %v636 = vld [vmem:[%s5 + $0x4] sm:$0xf]
  %v637 = vld [vmem:[%s5 + $0x8] sm:$0xf]
  %v638 = vld [vmem:[%s5 + $0xc] sm:$0xf]
  %v639 = vld [vmem:[%s5 + $0x10] sm:$0xf]
  %v640 = vld [vmem:[%s5 + $0x14] sm:$0xf]
  %v641 = vld [vmem:[%s5 + $0x18] sm:$0xf]
  %v642 = vld [vmem:[%s5 + $0x1c] sm:$0xf]
  %v643 = vld [vmem:[%s5 + $0x20] sm:$0xf]
  %v644 = vld [vmem:[%s5 + $0x24] sm:$0xf]
  %v645 = vld [vmem:[%s5 + $0x28] sm:$0xf]
  %v646 = vld [vmem:[%s5 + $0x2c] sm:$0xf]
  %v647 = vld [vmem:[%s5 + $0x30] sm:$0xf]
  %v648 = vld [vmem:[%s5 + $0x34] sm:$0xf]
  %v649 = vld [vmem:[%s5 + $0x38] sm:$0xf]
  %v650 = vld [vmem:[%s5 + $0x3c] sm:$0xf]
  %v651 = vld [vmem:[%s6] sm:$0x1]
  %v653 = vlaneseq
  %v654 = vshrl.u32 %v653, 7
  %v655 = vsub.s32 0, %v654
  %v656 = vrot.slane %v651, %v655
  %v674 = vunpack.c.l.b16 %v635
  %v675 = vunpack.c.l.b16 %v636
  %v676 = vunpack.c.l.b16 %v637
  %v677 = vunpack.c.l.b16 %v638
  %v678 = vunpack.c.l.b16 %v639
  %v679 = vunpack.c.l.b16 %v640
  %v680 = vunpack.c.l.b16 %v641
  %v681 = vunpack.c.l.b16 %v642
  %v682 = vunpack.c.l.b16 %v643
  %v683 = vunpack.c.l.b16 %v644
  %v684 = vunpack.c.l.b16 %v645
  %v685 = vunpack.c.l.b16 %v646
  %v686 = vunpack.c.l.b16 %v647
  %v687 = vunpack.c.l.b16 %v648
  %v688 = vunpack.c.l.b16 %v649
  %v689 = vunpack.c.l.b16 %v650
  %v690 = vpack.c.b16 %v675, %v674
  %v691 = vpack.c.b16 %v677, %v676
  %v692 = vpack.c.b16 %v679, %v678
  %v693 = vpack.c.b16 %v681, %v680
  %v694 = vpack.c.b16 %v683, %v682
  %v695 = vpack.c.b16 %v685, %v684
  %v696 = vpack.c.b16 %v687, %v686
  %v697 = vpack.c.b16 %v689, %v688
  %706 = vmatprep.subr.bf16.mxu0 0
  %707 = vmatpush1.bf16.msra.mxu0 %v697
  %708 = vmatprep.subr.bf16.mxu0 0
  %709 = vmatpush1.bf16.msra.mxu0 %v696
  %710 = vmatprep.subr.bf16.mxu0 0
  %711 = vmatpush1.bf16.msra.mxu0 %v695
  %712 = vmatprep.subr.bf16.mxu0 0
  %713 = vmatpush1.bf16.msra.mxu0 %v694
  %714 = vmatprep.subr.bf16.mxu0 0
  %715 = vmatpush1.bf16.msra.mxu0 %v693
  %716 = vmatprep.subr.bf16.mxu0 0
  %717 = vmatpush1.bf16.msra.mxu0 %v692
  %718 = vmatprep.subr.bf16.mxu0 0
  %719 = vmatpush1.bf16.msra.mxu0 %v691
  %720 = vmatprep.subr.bf16.mxu0 0
  %721 = vmatpush1.bf16.msra.mxu0 %v690
  %722 = vmatprep.subr.bf16.mxu0 0
  %723 = vmatpush2.bf16.msra.mxu0 0
  %724 = vmatprep.subr.bf16.mxu0 0
  %725 = vmatpush2.bf16.msra.mxu0 0
  %726 = vmatprep.subr.bf16.mxu0 0
  %727 = vmatpush2.bf16.msra.mxu0 0
  %728 = vmatprep.subr.bf16.mxu0 0
  %729 = vmatpush2.bf16.msra.mxu0 0
  %730 = vmatprep.subr.bf16.mxu0 0
  %731 = vmatpush2.bf16.msra.mxu0 0
  %732 = vmatprep.subr.bf16.mxu0 0
  %733 = vmatpush2.bf16.msra.mxu0 0
  %734 = vmatprep.subr.bf16.mxu0 0
  %735 = vmatpush2.bf16.msra.mxu0 0
  %736 = vmatprep.subr.bf16.mxu0 0
  %737 = vmatpush2.bf16.msra.mxu0 0
  %738 = vmatprep.mubr.bf16.mxu0 0
  %739 = vmatmul.mubr.bf16.gmra.mxu0 %v387
  %v740 = vpop.f32.mrf.mxu0
  %v741 = vadd.f32 %v656, %v740
  %v742 = vpop.f32.mrf.mxu0
  %v743 = vpop.f32.mrf.mxu0
  %v744 = vadd.f32 %v656, %v743
  %v745 = vpop.f32.mrf.mxu0
  %746 = vmatprep.mubr.bf16.mxu0 0
  %747 = vmatmul.mubr.bf16.gmra.mxu0 %v388
  %v748 = vpop.f32.mrf.mxu0
  %v749 = vadd.f32 %v656, %v748
  %v750 = vpop.f32.mrf.mxu0
  %v751 = vpop.f32.mrf.mxu0
  %v752 = vadd.f32 %v656, %v751
  %v753 = vpop.f32.mrf.mxu0
  %754 = vmatprep.mubr.bf16.mxu0 0
  %755 = vmatmul.mubr.bf16.gmra.mxu0 %v389
  %v756 = vpop.f32.mrf.mxu0
  %v757 = vadd.f32 %v656, %v756
  %v758 = vpop.f32.mrf.mxu0
  %v759 = vpop.f32.mrf.mxu0
  %v760 = vadd.f32 %v656, %v759
  %v761 = vpop.f32.mrf.mxu0
  %762 = vmatprep.mubr.bf16.mxu0 0
  %763 = vmatmul.mubr.bf16.gmra.mxu0 %v390
  %v764 = vpop.f32.mrf.mxu0
  %v765 = vadd.f32 %v656, %v764
  %v766 = vpop.f32.mrf.mxu0
  %v767 = vpop.f32.mrf.mxu0
  %v768 = vadd.f32 %v656, %v767
  %v769 = vpop.f32.mrf.mxu0
  %770 = vmatprep.mubr.bf16.mxu0 0
  %771 = vmatmul.mubr.bf16.gmra.mxu0 %v391
  %v772 = vpop.f32.mrf.mxu0
  %v773 = vadd.f32 %v656, %v772
  %v774 = vpop.f32.mrf.mxu0
  %v775 = vpop.f32.mrf.mxu0
  %v776 = vadd.f32 %v656, %v775
  %v777 = vpop.f32.mrf.mxu0
  %778 = vmatprep.mubr.bf16.mxu0 0
  %779 = vmatmul.mubr.bf16.gmra.mxu0 %v392
  %v780 = vpop.f32.mrf.mxu0
  %v781 = vadd.f32 %v656, %v780
  %v782 = vpop.f32.mrf.mxu0
  %v783 = vpop.f32.mrf.mxu0
  %v784 = vadd.f32 %v656, %v783
  %v785 = vpop.f32.mrf.mxu0
  %786 = vmatprep.mubr.bf16.mxu0 0
  %787 = vmatmul.mubr.bf16.gmra.mxu0 %v393
  %v788 = vpop.f32.mrf.mxu0
  %v789 = vadd.f32 %v656, %v788
  %v790 = vpop.f32.mrf.mxu0
  %v791 = vpop.f32.mrf.mxu0
  %v792 = vadd.f32 %v656, %v791
  %v793 = vpop.f32.mrf.mxu0
  %794 = vmatprep.mubr.bf16.mxu0 0
  %795 = vmatmul.mubr.bf16.gmra.mxu0 %v394
  %v796 = vpop.f32.mrf.mxu0
  %v797 = vadd.f32 %v656, %v796
  %v798 = vpop.f32.mrf.mxu0
  %v799 = vpop.f32.mrf.mxu0
  %v800 = vadd.f32 %v656, %v799
  %v801 = vpop.f32.mrf.mxu0
  %802 = vmatprep.mubr.bf16.mxu0 0
  %803 = vmatmul.mubr.bf16.gmra.mxu0 %v395
  %v804 = vpop.f32.mrf.mxu0
  %v805 = vadd.f32 %v656, %v804
  %v806 = vpop.f32.mrf.mxu0
  %v807 = vpop.f32.mrf.mxu0
  %v808 = vadd.f32 %v656, %v807
  %v809 = vpop.f32.mrf.mxu0
  %810 = vmatprep.mubr.bf16.mxu0 0
  %811 = vmatmul.mubr.bf16.gmra.mxu0 %v396
  %v812 = vpop.f32.mrf.mxu0
  %v813 = vadd.f32 %v656, %v812
  %v814 = vpop.f32.mrf.mxu0
  %v815 = vpop.f32.mrf.mxu0
  %v816 = vadd.f32 %v656, %v815
  %v817 = vpop.f32.mrf.mxu0
  %818 = vmatprep.mubr.bf16.mxu0 0
  %819 = vmatmul.mubr.bf16.gmra.mxu0 %v397
  %v820 = vpop.f32.mrf.mxu0
  %v821 = vadd.f32 %v656, %v820
  %v822 = vpop.f32.mrf.mxu0
  %v823 = vpop.f32.mrf.mxu0
  %v824 = vadd.f32 %v656, %v823
  %v825 = vpop.f32.mrf.mxu0
  %826 = vmatprep.mubr.bf16.mxu0 0
  %827 = vmatmul.mubr.bf16.gmra.mxu0 %v398
  %v828 = vpop.f32.mrf.mxu0
  %v829 = vadd.f32 %v656, %v828
  %v830 = vpop.f32.mrf.mxu0
  %v831 = vpop.f32.mrf.mxu0
  %v832 = vadd.f32 %v656, %v831
  %v833 = vpop.f32.mrf.mxu0
  %834 = vmatprep.mubr.bf16.mxu0 0
  %835 = vmatmul.mubr.bf16.gmra.mxu0 %v399
  %v836 = vpop.f32.mrf.mxu0
  %v837 = vadd.f32 %v656, %v836
  %v838 = vpop.f32.mrf.mxu0
  %v839 = vpop.f32.mrf.mxu0
  %v840 = vadd.f32 %v656, %v839
  %v841 = vpop.f32.mrf.mxu0
  %842 = vmatprep.mubr.bf16.mxu0 0
  %843 = vmatmul.mubr.bf16.gmra.mxu0 %v400
  %v844 = vpop.f32.mrf.mxu0
  %v845 = vadd.f32 %v656, %v844
  %v846 = vpop.f32.mrf.mxu0
  %v847 = vpop.f32.mrf.mxu0
  %v848 = vadd.f32 %v656, %v847
  %v849 = vpop.f32.mrf.mxu0
  %850 = vmatprep.mubr.bf16.mxu0 0
  %851 = vmatmul.mubr.bf16.gmra.mxu0 %v401
  %v852 = vpop.f32.mrf.mxu0
  %v853 = vadd.f32 %v656, %v852
  %v854 = vpop.f32.mrf.mxu0
  %v855 = vpop.f32.mrf.mxu0
  %v856 = vadd.f32 %v656, %v855
  %v857 = vpop.f32.mrf.mxu0
  %858 = vmatprep.mubr.bf16.mxu0 0
  %859 = vmatmul.mubr.bf16.gmra.mxu0 %v402
  %v860 = vpop.f32.mrf.mxu0
  %v861 = vadd.f32 %v656, %v860
  %v862 = vpop.f32.mrf.mxu0
  %v863 = vpop.f32.mrf.mxu0
  %v864 = vadd.f32 %v656, %v863
  %v865 = vpop.f32.mrf.mxu0
  %866 = vdwg.mxu0
  %v867 = vxor.u32 %v741, 2147483648
  %v868 = vxor.u32 %v744, 2147483648
  %v869 = vxor.u32 %v749, 2147483648
  %v870 = vxor.u32 %v752, 2147483648
  %v871 = vxor.u32 %v757, 2147483648
  %v872 = vxor.u32 %v760, 2147483648
  %v873 = vxor.u32 %v765, 2147483648
  %v874 = vxor.u32 %v768, 2147483648
  %v875 = vxor.u32 %v773, 2147483648
  %v876 = vxor.u32 %v776, 2147483648
  %v877 = vxor.u32 %v781, 2147483648
  %v878 = vxor.u32 %v784, 2147483648
  %v879 = vxor.u32 %v789, 2147483648
  %v880 = vxor.u32 %v792, 2147483648
  %v881 = vxor.u32 %v797, 2147483648
  %v882 = vxor.u32 %v800, 2147483648
  %v883 = vxor.u32 %v805, 2147483648
  %v884 = vxor.u32 %v808, 2147483648
  %v885 = vxor.u32 %v813, 2147483648
  %v886 = vxor.u32 %v816, 2147483648
  %v887 = vxor.u32 %v821, 2147483648
  %v888 = vxor.u32 %v824, 2147483648
  %v889 = vxor.u32 %v829, 2147483648
  %v890 = vxor.u32 %v832, 2147483648
  %v891 = vxor.u32 %v837, 2147483648
  %v892 = vxor.u32 %v840, 2147483648
  %v893 = vxor.u32 %v845, 2147483648
  %v894 = vxor.u32 %v848, 2147483648
  %v895 = vxor.u32 %v853, 2147483648
  %v896 = vxor.u32 %v856, 2147483648
  %v897 = vxor.u32 %v861, 2147483648
  %v898 = vxor.u32 %v864, 2147483648
  %v899 = vmul.f32 %v867, 1.442695
  %v900 = vpow.pop %v899
  %v901 = vmul.f32 %v868, 1.442695
  %v902 = vpow.pop %v901
  %v903 = vmul.f32 %v869, 1.442695
  %v904 = vpow.pop %v903
  %v905 = vmul.f32 %v870, 1.442695
  %v906 = vpow.pop %v905
  %v907 = vmul.f32 %v871, 1.442695
  %v908 = vpow.pop %v907
  %v909 = vmul.f32 %v872, 1.442695
  %v910 = vpow.pop %v909
  %v911 = vmul.f32 %v873, 1.442695
  %v912 = vpow.pop %v911
  %v913 = vmul.f32 %v874, 1.442695
  %v914 = vpow.pop %v913
  %v915 = vmul.f32 %v875, 1.442695
  %v916 = vpow.pop %v915
  %v917 = vmul.f32 %v876, 1.442695
  %v918 = vpow.pop %v917
  %v919 = vmul.f32 %v877, 1.442695
  %v920 = vpow.pop %v919
  %v921 = vmul.f32 %v878, 1.442695
  %v922 = vpow.pop %v921
  %v923 = vmul.f32 %v879, 1.442695
  %v924 = vpow.pop %v923
  %v925 = vmul.f32 %v880, 1.442695
  %v926 = vpow.pop %v925
  %v927 = vmul.f32 %v881, 1.442695
  %v928 = vpow.pop %v927
  %v929 = vmul.f32 %v882, 1.442695
  %v930 = vpow.pop %v929
  %v931 = vmul.f32 %v883, 1.442695
  %v932 = vpow.pop %v931
  %v933 = vmul.f32 %v884, 1.442695
  %v934 = vpow.pop %v933
  %v935 = vmul.f32 %v885, 1.442695
  %v936 = vpow.pop %v935
  %v937 = vmul.f32 %v886, 1.442695
  %v938 = vpow.pop %v937
  %v939 = vmul.f32 %v887, 1.442695
  %v940 = vpow.pop %v939
  %v941 = vmul.f32 %v888, 1.442695
  %v942 = vpow.pop %v941
  %v943 = vmul.f32 %v889, 1.442695
  %v944 = vpow.pop %v943
  %v945 = vmul.f32 %v890, 1.442695
  %v946 = vpow.pop %v945
  %v947 = vmul.f32 %v891, 1.442695
  %v948 = vpow.pop %v947
  %v949 = vmul.f32 %v892, 1.442695
  %v950 = vpow.pop %v949
  %v951 = vmul.f32 %v893, 1.442695
  %v952 = vpow.pop %v951
  %v953 = vmul.f32 %v894, 1.442695
  %v954 = vpow.pop %v953
  %v955 = vmul.f32 %v895, 1.442695
  %v956 = vpow.pop %v955
  %v957 = vmul.f32 %v896, 1.442695
  %v958 = vpow.pop %v957
  %v959 = vmul.f32 %v897, 1.442695
  %v960 = vpow.pop %v959
  %v961 = vmul.f32 %v898, 1.442695
  %v962 = vpow.pop %v961
  %v963 = vadd.f32 %v900, 1.0
  %v964 = vadd.f32 %v902, 1.0
  %v965 = vadd.f32 %v904, 1.0
  %v966 = vadd.f32 %v906, 1.0
  %v967 = vadd.f32 %v908, 1.0
  %v968 = vadd.f32 %v910, 1.0
  %v969 = vadd.f32 %v912, 1.0
  %v970 = vadd.f32 %v914, 1.0
  %v971 = vadd.f32 %v916, 1.0
  %v972 = vadd.f32 %v918, 1.0
  %v973 = vadd.f32 %v920, 1.0
  %v974 = vadd.f32 %v922, 1.0
  %v975 = vadd.f32 %v924, 1.0
  %v976 = vadd.f32 %v926, 1.0
  %v977 = vadd.f32 %v928, 1.0
  %v978 = vadd.f32 %v930, 1.0
  %v979 = vadd.f32 %v932, 1.0
  %v980 = vadd.f32 %v934, 1.0
  %v981 = vadd.f32 %v936, 1.0
  %v982 = vadd.f32 %v938, 1.0
  %v983 = vadd.f32 %v940, 1.0
  %v984 = vadd.f32 %v942, 1.0
  %v985 = vadd.f32 %v944, 1.0
  %v986 = vadd.f32 %v946, 1.0
  %v987 = vadd.f32 %v948, 1.0
  %v988 = vadd.f32 %v950, 1.0
  %v989 = vadd.f32 %v952, 1.0
  %v990 = vadd.f32 %v954, 1.0
  %v991 = vadd.f32 %v956, 1.0
  %v992 = vadd.f32 %v958, 1.0
  %v993 = vadd.f32 %v960, 1.0
  %v994 = vadd.f32 %v962, 1.0
  %v995 = vrcp.pop %v963
  %v996 = vmul.f32 1.0, %v995
  %v997 = vrcp.pop %v964
  %v998 = vmul.f32 1.0, %v997
  %v999 = vrcp.pop %v965
  %v1000 = vmul.f32 1.0, %v999
  %v1001 = vrcp.pop %v966
  %v1002 = vmul.f32 1.0, %v1001
  %v1003 = vrcp.pop %v967
  %v1004 = vmul.f32 1.0, %v1003
  %v1005 = vrcp.pop %v968
  %v1006 = vmul.f32 1.0, %v1005
  %v1007 = vrcp.pop %v969
  %v1008 = vmul.f32 1.0, %v1007
  %v1009 = vrcp.pop %v970
  %v1010 = vmul.f32 1.0, %v1009
  %v1011 = vrcp.pop %v971
  %v1012 = vmul.f32 1.0, %v1011
  %v1013 = vrcp.pop %v972
  %v1014 = vmul.f32 1.0, %v1013
  %v1015 = vrcp.pop %v973
  %v1016 = vmul.f32 1.0, %v1015
  %v1017 = vrcp.pop %v974
  %v1018 = vmul.f32 1.0, %v1017
  %v1019 = vrcp.pop %v975
  %v1020 = vmul.f32 1.0, %v1019
  %v1021 = vrcp.pop %v976
  %v1022 = vmul.f32 1.0, %v1021
  %v1023 = vrcp.pop %v977
  %v1024 = vmul.f32 1.0, %v1023
  %v1025 = vrcp.pop %v978
  %v1026 = vmul.f32 1.0, %v1025
  %v1027 = vrcp.pop %v979
  %v1028 = vmul.f32 1.0, %v1027
  %v1029 = vrcp.pop %v980
  %v1030 = vmul.f32 1.0, %v1029
  %v1031 = vrcp.pop %v981
  %v1032 = vmul.f32 1.0, %v1031
  %v1033 = vrcp.pop %v982
  %v1034 = vmul.f32 1.0, %v1033
  %v1035 = vrcp.pop %v983
  %v1036 = vmul.f32 1.0, %v1035
  %v1037 = vrcp.pop %v984
  %v1038 = vmul.f32 1.0, %v1037
  %v1039 = vrcp.pop %v985
  %v1040 = vmul.f32 1.0, %v1039
  %v1041 = vrcp.pop %v986
  %v1042 = vmul.f32 1.0, %v1041
  %v1043 = vrcp.pop %v987
  %v1044 = vmul.f32 1.0, %v1043
  %v1045 = vrcp.pop %v988
  %v1046 = vmul.f32 1.0, %v1045
  %v1047 = vrcp.pop %v989
  %v1048 = vmul.f32 1.0, %v1047
  %v1049 = vrcp.pop %v990
  %v1050 = vmul.f32 1.0, %v1049
  %v1051 = vrcp.pop %v991
  %v1052 = vmul.f32 1.0, %v1051
  %v1053 = vrcp.pop %v992
  %v1054 = vmul.f32 1.0, %v1053
  %v1055 = vrcp.pop %v993
  %v1056 = vmul.f32 1.0, %v1055
  %v1057 = vrcp.pop %v994
  %v1058 = vmul.f32 1.0, %v1057
  %v1059 = vmul.f32 %v741, %v996
  %v1060 = vmul.f32 %v744, %v998
  %v1061 = vmul.f32 %v749, %v1000
  %v1062 = vmul.f32 %v752, %v1002
  %v1063 = vmul.f32 %v757, %v1004
  %v1064 = vmul.f32 %v760, %v1006
  %v1065 = vmul.f32 %v765, %v1008
  %v1066 = vmul.f32 %v768, %v1010
  %v1067 = vmul.f32 %v773, %v1012
  %v1068 = vmul.f32 %v776, %v1014
  %v1069 = vmul.f32 %v781, %v1016
  %v1070 = vmul.f32 %v784, %v1018
  %v1071 = vmul.f32 %v789, %v1020
  %v1072 = vmul.f32 %v792, %v1022
  %v1073 = vmul.f32 %v797, %v1024
  %v1074 = vmul.f32 %v800, %v1026
  %v1075 = vmul.f32 %v805, %v1028
  %v1076 = vmul.f32 %v808, %v1030
  %v1077 = vmul.f32 %v813, %v1032
  %v1078 = vmul.f32 %v816, %v1034
  %v1079 = vmul.f32 %v821, %v1036
  %v1080 = vmul.f32 %v824, %v1038
  %v1081 = vmul.f32 %v829, %v1040
  %v1082 = vmul.f32 %v832, %v1042
  %v1083 = vmul.f32 %v837, %v1044
  %v1084 = vmul.f32 %v840, %v1046
  %v1085 = vmul.f32 %v845, %v1048
  %v1086 = vmul.f32 %v848, %v1050
  %v1087 = vmul.f32 %v853, %v1052
  %v1088 = vmul.f32 %v856, %v1054
  %v1089 = vmul.f32 %v861, %v1056
  %v1090 = vmul.f32 %v864, %v1058
  %v1091 = vmul.f32 %v509, %v1059
  %v1092 = vmul.f32 %v512, %v1060
  %v1093 = vmul.f32 %v517, %v1061
  %v1094 = vmul.f32 %v520, %v1062
  %v1095 = vmul.f32 %v525, %v1063
  %v1096 = vmul.f32 %v528, %v1064
  %v1097 = vmul.f32 %v533, %v1065
  %v1098 = vmul.f32 %v536, %v1066
  %v1099 = vmul.f32 %v541, %v1067
  %v1100 = vmul.f32 %v544, %v1068
  %v1101 = vmul.f32 %v549, %v1069
  %v1102 = vmul.f32 %v552, %v1070
  %v1103 = vmul.f32 %v557, %v1071
  %v1104 = vmul.f32 %v560, %v1072
  %v1105 = vmul.f32 %v565, %v1073
  %v1106 = vmul.f32 %v568, %v1074
  %v1107 = vmul.f32 %v573, %v1075
  %v1108 = vmul.f32 %v576, %v1076
  %v1109 = vmul.f32 %v581, %v1077
  %v1110 = vmul.f32 %v584, %v1078
  %v1111 = vmul.f32 %v589, %v1079
  %v1112 = vmul.f32 %v592, %v1080
  %v1113 = vmul.f32 %v597, %v1081
  %v1114 = vmul.f32 %v600, %v1082
  %v1115 = vmul.f32 %v605, %v1083
  %v1116 = vmul.f32 %v608, %v1084
  %v1117 = vmul.f32 %v613, %v1085
  %v1118 = vmul.f32 %v616, %v1086
  %v1119 = vmul.f32 %v621, %v1087
  %v1120 = vmul.f32 %v624, %v1088
  %v1121 = vmul.f32 %v629, %v1089
  %v1122 = vmul.f32 %v632, %v1090
  %v1123 = vpack.c.bf16 %v1092, %v1091
  %v1124 = vpack.c.bf16 %v1094, %v1093
  %v1125 = vpack.c.bf16 %v1096, %v1095
  %v1126 = vpack.c.bf16 %v1098, %v1097
  %v1127 = vpack.c.bf16 %v1100, %v1099
  %v1128 = vpack.c.bf16 %v1102, %v1101
  %v1129 = vpack.c.bf16 %v1104, %v1103
  %v1130 = vpack.c.bf16 %v1106, %v1105
  %v1131 = vpack.c.bf16 %v1108, %v1107
  %v1132 = vpack.c.bf16 %v1110, %v1109
  %v1133 = vpack.c.bf16 %v1112, %v1111
  %v1134 = vpack.c.bf16 %v1114, %v1113
  %v1135 = vpack.c.bf16 %v1116, %v1115
  %v1136 = vpack.c.bf16 %v1118, %v1117
  %v1137 = vpack.c.bf16 %v1120, %v1119
  %v1138 = vpack.c.bf16 %v1122, %v1121
  %v1155 = vunpack.c.l.b16 %v1123
  %v1156 = vunpack.c.h.b16 %v1123
  %v1157 = vunpack.c.l.b16 %v1124
  %v1158 = vunpack.c.h.b16 %v1124
  %v1159 = vunpack.c.l.b16 %v1125
  %v1160 = vunpack.c.h.b16 %v1125
  %v1161 = vunpack.c.l.b16 %v1126
  %v1162 = vunpack.c.h.b16 %v1126
  %v1163 = vunpack.c.l.b16 %v1127
  %v1164 = vunpack.c.h.b16 %v1127
  %v1165 = vunpack.c.l.b16 %v1128
  %v1166 = vunpack.c.h.b16 %v1128
  %v1167 = vunpack.c.l.b16 %v1129
  %v1168 = vunpack.c.h.b16 %v1129
  %v1169 = vunpack.c.l.b16 %v1130
  %v1170 = vunpack.c.h.b16 %v1130
  %v1171 = vunpack.c.l.b16 %v1131
  %v1172 = vunpack.c.h.b16 %v1131
  %v1173 = vunpack.c.l.b16 %v1132
  %v1174 = vunpack.c.h.b16 %v1132
  %v1175 = vunpack.c.l.b16 %v1133
  %v1176 = vunpack.c.h.b16 %v1133
  %v1177 = vunpack.c.l.b16 %v1134
  %v1178 = vunpack.c.h.b16 %v1134
  %v1179 = vunpack.c.l.b16 %v1135
  %v1180 = vunpack.c.h.b16 %v1135
  %v1181 = vunpack.c.l.b16 %v1136
  %v1182 = vunpack.c.h.b16 %v1136
  %v1183 = vunpack.c.l.b16 %v1137
  %v1184 = vunpack.c.h.b16 %v1137
  %v1185 = vunpack.c.l.b16 %v1138
  %v1186 = vunpack.c.h.b16 %v1138
  %v1187 = vpack.c.b16 %v1155, %v1155
  %v1188 = vpack.c.b16 %v1156, %v1156
  %v1189 = vpack.c.b16 %v1157, %v1157
  %v1190 = vpack.c.b16 %v1158, %v1158
  %v1191 = vpack.c.b16 %v1159, %v1159
  %v1192 = vpack.c.b16 %v1160, %v1160
  %v1193 = vpack.c.b16 %v1161, %v1161
  %v1194 = vpack.c.b16 %v1162, %v1162
  %v1195 = vpack.c.b16 %v1163, %v1163
  %v1196 = vpack.c.b16 %v1164, %v1164
  %v1197 = vpack.c.b16 %v1165, %v1165
  %v1198 = vpack.c.b16 %v1166, %v1166
  %v1199 = vpack.c.b16 %v1167, %v1167
  %v1200 = vpack.c.b16 %v1168, %v1168
  %v1201 = vpack.c.b16 %v1169, %v1169
  %v1202 = vpack.c.b16 %v1170, %v1170
  %v1203 = vpack.c.b16 %v1171, %v1171
  %v1204 = vpack.c.b16 %v1172, %v1172
  %v1205 = vpack.c.b16 %v1173, %v1173
  %v1206 = vpack.c.b16 %v1174, %v1174
  %v1207 = vpack.c.b16 %v1175, %v1175
  %v1208 = vpack.c.b16 %v1176, %v1176
  %v1209 = vpack.c.b16 %v1177, %v1177
  %v1210 = vpack.c.b16 %v1178, %v1178
  %v1211 = vpack.c.b16 %v1179, %v1179
  %v1212 = vpack.c.b16 %v1180, %v1180
  %v1213 = vpack.c.b16 %v1181, %v1181
  %v1214 = vpack.c.b16 %v1182, %v1182
  %v1215 = vpack.c.b16 %v1183, %v1183
  %v1216 = vpack.c.b16 %v1184, %v1184
  %v1217 = vpack.c.b16 %v1185, %v1185
  %v1218 = vpack.c.b16 %v1186, %v1186
  %1251 = vst [vmem:[%s7] sm:$0xf] %v1187
  %1252 = vst [vmem:[%s7 + $0x4] sm:$0xf] %v1188
  %1253 = vst [vmem:[%s7 + $0x8] sm:$0xf] %v1189
  %1254 = vst [vmem:[%s7 + $0xc] sm:$0xf] %v1190
  %1255 = vst [vmem:[%s7 + $0x10] sm:$0xf] %v1191
  %1256 = vst [vmem:[%s7 + $0x14] sm:$0xf] %v1192
  %1257 = vst [vmem:[%s7 + $0x18] sm:$0xf] %v1193
  %1258 = vst [vmem:[%s7 + $0x1c] sm:$0xf] %v1194
  %1259 = vst [vmem:[%s7 + $0x20] sm:$0xf] %v1195
  %1260 = vst [vmem:[%s7 + $0x24] sm:$0xf] %v1196
  %1261 = vst [vmem:[%s7 + $0x28] sm:$0xf] %v1197
  %1262 = vst [vmem:[%s7 + $0x2c] sm:$0xf] %v1198
  %1263 = vst [vmem:[%s7 + $0x30] sm:$0xf] %v1199
  %1264 = vst [vmem:[%s7 + $0x34] sm:$0xf] %v1200
  %1265 = vst [vmem:[%s7 + $0x38] sm:$0xf] %v1201
  %1266 = vst [vmem:[%s7 + $0x3c] sm:$0xf] %v1202
  %1267 = vst [vmem:[%s7 + $0x40] sm:$0xf] %v1203
  %1268 = vst [vmem:[%s7 + $0x44] sm:$0xf] %v1204
  %1269 = vst [vmem:[%s7 + $0x48] sm:$0xf] %v1205
  %1270 = vst [vmem:[%s7 + $0x4c] sm:$0xf] %v1206
  %1271 = vst [vmem:[%s7 + $0x50] sm:$0xf] %v1207
  %1272 = vst [vmem:[%s7 + $0x54] sm:$0xf] %v1208
  %1273 = vst [vmem:[%s7 + $0x58] sm:$0xf] %v1209
  %1274 = vst [vmem:[%s7 + $0x5c] sm:$0xf] %v1210
  %1275 = vst [vmem:[%s7 + $0x60] sm:$0xf] %v1211
  %1276 = vst [vmem:[%s7 + $0x64] sm:$0xf] %v1212
  %1277 = vst [vmem:[%s7 + $0x68] sm:$0xf] %v1213
  %1278 = vst [vmem:[%s7 + $0x6c] sm:$0xf] %v1214
  %1279 = vst [vmem:[%s7 + $0x70] sm:$0xf] %v1215
  %1280 = vst [vmem:[%s7 + $0x74] sm:$0xf] %v1216
  %1281 = vst [vmem:[%s7 + $0x78] sm:$0xf] %v1217
  %1282 = vst [vmem:[%s7 + $0x7c] sm:$0xf] %v1218
  // Predicated region
  $region30: #{_lambda_.5} parent=0 // pred_check
    _
  $region31: #{_lambda_.5} parent=0 // pred_check_branch
    %1284 = sbr.rel (0) target = $region33
  $region32: #{_lambda_.5} parent=0 // pred_region
    _
  $region33: #{_lambda_.5} parent=0 // pred_fallthru
    _
  // Predicated region
  $region34: #{_lambda_.5} parent=0 // pred_check
    _
  $region35: #{_lambda_.5} parent=0 // pred_check_branch
    %1286 = sbr.rel (0) target = $region37
  $region36: #{_lambda_.5} parent=0 // pred_region
    _
  $region37: #{_lambda_.5} parent=0 // pred_fallthru
    _

</llo_original>
